<compile_context>
chip_gen: v6e
topology: v6e:2x2x1
jax: 0.10.0
libtpu: 0.0.40
codegen_flags: <defaults>
</compile_context>

<pallas_src>
import functools

import jax
import jax.numpy as jnp
from jax.experimental import pallas as pl
from jax.experimental.pallas import tpu as pltpu


# ---------------------------------------------------------------------------
# Small helpers
# ---------------------------------------------------------------------------
def _round_up(x, m):
    return ((x + m - 1) // m) * m


def _vmem_limit_bytes():
    try:
        cap = int(pltpu.get_tpu_info().vmem_capacity_bytes)
        if cap <= 0:
            raise ValueError
    except Exception:
        cap = 128 << 20
    # leave headroom for double-buffering; stays valid on v7x (64 MiB VMEM)
    return max(16 << 20, min(cap // 2, 64 << 20))


_VMEM_LIMIT = _vmem_limit_bytes()


def _tiles(dim, cap, align):
    """Return (padded_dim, tile) with tile | padded_dim and tile bounded by cap.

    If dim <= cap the full dim is used as a single block (the (8,128) rule is
    satisfied via the 'equals full array dim' escape), otherwise the dim is
    split into roughly-equal, `align`-aligned tiles (padding with zeros)."""
    if dim <= cap:
        return dim, dim
    steps = -(-dim // cap)
    t = _round_up(-(-dim // steps), align)
    return t * steps, t


def _pick_hw_tile(hw, c, bytes_per_elem, budget=2 << 20):
    """Pick a spatial (HW) tile bounded by a per-block VMEM budget."""
    cap = max(8, (budget // (bytes_per_elem * c)) // 8 * 8)
    for t in (4096, 2048, 1024, 512, 256, 128, 64, 32, 16, 8):
        if t <= cap and hw % t == 0:
            return hw, t
    t = max(8, min(cap, 512) // 8 * 8)
    return _round_up(hw, t), t


def _mosaic_params(sem):
    return pltpu.CompilerParams(dimension_semantics=sem,
                                vmem_limit_bytes=_VMEM_LIMIT)


# ---------------------------------------------------------------------------
# Kernel 1: tiled matmul + bias (bf16 MXU inputs, f32 accumulation)
#   used for: conditional-norm context MLP, 1x1 conv, 2x2/s2 down-sample conv
# ---------------------------------------------------------------------------
def _matmul_bias_kernel(a_ref, b_ref, bias_ref, o_ref, acc_ref):
    @pl.when(pl.program_id(2) == 0)
    def _():
        acc_ref[...] = jnp.zeros_like(acc_ref)

    acc_ref[...] += jnp.dot(a_ref[...], b_ref[...],
                            preferred_element_type=jnp.float32)

    @pl.when(pl.program_id(2) == pl.num_programs(2) - 1)
    def _():
        o_ref[...] = (acc_ref[...] + bias_ref[...]).astype(o_ref.dtype)


def matmul_bias(a, b, bias, out_dtype=jnp.float32):
    m, k = a.shape
    k2, n = b.shape
    assert k == k2
    mp, tm = _tiles(m, 256, 8)        # M tile <= 256 (fits v7x 64 MiB VMEM)
    kp, tk = _tiles(k, 2048, 128)     # K tiled with f32 accumulator scratch
    np_, tn = _tiles(n, 512, 128)     # lane-dense output tiles when wide

    a = a.astype(jnp.bfloat16)
    b = b.astype(jnp.bfloat16)
    if (mp, kp) != (m, k):
        a = jnp.pad(a, ((0, mp - m), (0, kp - k)))
    if (kp, np_) != (k, n):
        b = jnp.pad(b, ((0, kp - k), (0, np_ - n)))
    bias2 = bias.astype(jnp.float32).reshape(1, n)
    if np_ != n:
        bias2 = jnp.pad(bias2, ((0, 0), (0, np_ - n)))

    out = pl.pallas_call(
        _matmul_bias_kernel,
        out_shape=jax.ShapeDtypeStruct((mp, np_), out_dtype),
        grid=(mp // tm, np_ // tn, kp // tk),
        in_specs=[
            pl.BlockSpec((tm, tk), lambda i, j, kk: (i, kk)),
            pl.BlockSpec((tk, tn), lambda i, j, kk: (kk, j)),
            pl.BlockSpec((1, tn), lambda i, j, kk: (0, j)),
        ],
        out_specs=pl.BlockSpec((tm, tn), lambda i, j, kk: (i, j)),
        scratch_shapes=[pltpu.VMEM((tm, tn), jnp.float32)],
        compiler_params=_mosaic_params(("parallel", "parallel", "arbitrary")),
    )(a, b, bias2)
    if (mp, np_) != (m, n):
        out = out[:m, :n]
    return out


# ---------------------------------------------------------------------------
# Kernel 2: Conditional GroupNorm, HW-tiled (stats pass + apply pass)
# ---------------------------------------------------------------------------
def _gn_stats_kernel(x_ref, s_ref, q_ref):
    @pl.when(pl.program_id(1) == 0)
    def _():
        s_ref[...] = jnp.zeros_like(s_ref)
        q_ref[...] = jnp.zeros_like(q_ref)

    xb = x_ref[0]                                    # (thw, C) f32
    s_ref[0] += jnp.sum(xb, axis=0, keepdims=True)
    q_ref[0] += jnp.sum(xb * xb, axis=0, keepdims=True)


def _gn_apply_silu_kernel(x_ref, a_ref, b_ref, o_ref):
    y = x_ref[0] * a_ref[0] + b_ref[0]               # normalize + cond. affine
    o_ref[0] = (y * jax.nn.sigmoid(y)).astype(o_ref.dtype)   # SiLU


def cond_group_norm_silu(x_nhwc, scale, shift, num_groups, eps=1e-5,
                         out_dtype=jnp.bfloat16):
    n, h, w, c = x_nhwc.shape
    hw = h * w
    x2 = x_nhwc.astype(jnp.float32).reshape(n, hw, c)
    hwp, thw = _pick_hw_tile(hw, c, 4)
    if hwp != hw:
        x2 = jnp.pad(x2, ((0, 0), (0, hwp - hw), (0, 0)))   # zeros: safe for sums
    nj = hwp // thw

    s, q = pl.pallas_call(
        _gn_stats_kernel,
        out_shape=(jax.ShapeDtypeStruct((n, 1, c), jnp.float32),
                   jax.ShapeDtypeStruct((n, 1, c), jnp.float32)),
        grid=(n, nj),
        in_specs=[pl.BlockSpec((1, thw, c), lambda i, j: (i, j, 0))],
        out_specs=(pl.BlockSpec((1, 1, c), lambda i, j: (i, 0, 0)),
                   pl.BlockSpec((1, 1, c), lambda i, j: (i, 0, 0))),
        compiler_params=_mosaic_params(("parallel", "arbitrary")),
    )(x2)

    # tiny per-(sample, channel) glue in plain JAX
    s = s[:, 0, :]
    q = q[:, 0, :]
    cnt = float(hw * (c // num_groups))
    s_g = s.reshape(n, num_groups, c // num_groups).sum(-1)
    q_g = q.reshape(n, num_groups, c // num_groups).sum(-1)
    mean_g = s_g / cnt
    # TODO(synk): E[x^2]-mean^2 in f32 can cancel for very large activations;
    # a two-pass (x-mean)^2 reduction would cost one extra read of x.
    var_g = jnp.maximum(q_g / cnt - mean_g * mean_g, 0.0)
    inv_g = jax.lax.rsqrt(var_g + eps)
    mean_c = jnp.repeat(mean_g, c // num_groups, axis=-1)
    inv_c = jnp.repeat(inv_g, c // num_groups, axis=-1)
    a = inv_c * (scale + 1.0)                      # fold conditional affine
    b = shift - mean_c * a

    out = pl.pallas_call(
        _gn_apply_silu_kernel,
        out_shape=jax.ShapeDtypeStruct((n, hwp, c), out_dtype),
        grid=(n, nj),
        in_specs=[pl.BlockSpec((1, thw, c), lambda i, j: (i, j, 0)),
                  pl.BlockSpec((1, 1, c), lambda i, j: (i, 0, 0)),
                  pl.BlockSpec((1, 1, c), lambda i, j: (i, 0, 0))],
        out_specs=pl.BlockSpec((1, thw, c), lambda i, j: (i, j, 0)),
        compiler_params=_mosaic_params(("parallel", "arbitrary")),
    )(x2, a.reshape(n, 1, c).astype(jnp.float32),
      b.reshape(n, 1, c).astype(jnp.float32))
    if hwp != hw:
        out = out[:, :hw]
    return out.reshape(n, h, w, c)


# ---------------------------------------------------------------------------
# Kernel 3: fused 3x3 conv (pad=1, stride=1) -- no im2col materialization.
# grid = (N, H, Cout-tiles, 3 row taps); col taps accumulated in-kernel.
# ---------------------------------------------------------------------------
def _conv3x3_kernel(x_ref, w_ref, b_ref, o_ref, acc_ref, *, w_out):
    di = pl.program_id(3)

    @pl.when(di == 0)
    def _():
        acc_ref[...] = jnp.zeros_like(acc_ref)

    acc = acc_ref[...]
    for dj in range(3):
        acc = acc + jnp.dot(x_ref[0, 0, dj:dj + w_out, :], w_ref[0, dj],
                            preferred_element_type=jnp.float32)
    acc_ref[...] = acc

    @pl.when(di == pl.num_programs(3) - 1)
    def _():
        o_ref[0, 0] = (acc_ref[...] + b_ref[...]).astype(o_ref.dtype)


def conv2d_3x3(x_nhwc, w_oihw, bias, out_dtype=jnp.float32):
    n, h, wd, c = x_nhwc.shape
    co = w_oihw.shape[0]
    cop, tco = _tiles(co, 512, 128)

    wk = jnp.transpose(w_oihw, (2, 3, 1, 0)).astype(jnp.bfloat16)   # (3,3,ci,co)
    bias2 = bias.astype(jnp.float32).reshape(1, co)
    if cop != co:
        wk = jnp.pad(wk, ((0, 0), (0, 0), (0, 0), (0, cop - co)))
        bias2 = jnp.pad(bias2, ((0, 0), (0, cop - co)))
    xp = jnp.pad(x_nhwc.astype(jnp.bfloat16), ((0, 0), (1, 1), (1, 1), (0, 0)))

    out = pl.pallas_call(
        functools.partial(_conv3x3_kernel, w_out=wd),
        out_shape=jax.ShapeDtypeStruct((n, h, wd, cop), out_dtype),
        grid=(n, h, cop // tco, 3),
        in_specs=[
            pl.BlockSpec((1, 1, wd + 2, c), lambda i, r, j, di: (i, r + di, 0, 0)),
            pl.BlockSpec((1, 3, c, tco), lambda i, r, j, di: (di, 0, 0, j)),
            pl.BlockSpec((1, tco), lambda i, r, j, di: (0, j)),
        ],
        out_specs=pl.BlockSpec((1, 1, wd, tco), lambda i, r, j, di: (i, r, 0, j)),
        scratch_shapes=[pltpu.VMEM((wd, tco), jnp.float32)],
        compiler_params=_mosaic_params(
            ("parallel", "parallel", "parallel", "arbitrary")),
    )(xp, wk, bias2)
    if cop != co:
        out = out[..., :co]
    return out


# ---------------------------------------------------------------------------
# Kernel 4: ConvTranspose2d k=2 s=2 -- writes the interleaved NHWC layout
# directly (output row 2r+kh produced from input row r with tap kh).
# ---------------------------------------------------------------------------
def _convT_k2s2_kernel(x_ref, w0_ref, w1_ref, b_ref, o_ref):
    kh = pl.program_id(2)
    xr = x_ref[0, 0]                                   # (W, Cin) bf16

    @pl.when(kh == 0)
    def _():
        y = jnp.dot(xr, w0_ref[...], preferred_element_type=jnp.float32)
        o_ref[0, 0] = (y + b_ref[...]).astype(o_ref.dtype)

    @pl.when(kh == 1)
    def _():
        y = jnp.dot(xr, w1_ref[...], preferred_element_type=jnp.float32)
        o_ref[0, 0] = (y + b_ref[...]).astype(o_ref.dtype)


def conv_transpose2d_k2s2(x_nhwc, w_iohw, bias, out_dtype=jnp.bfloat16):
    # PyTorch ConvTranspose2d weight layout: (in, out, kH, kW); k=2, s=2.
    n, h, wd, ci = x_nhwc.shape
    ci2, co, kh, kw = w_iohw.shape
    assert ci2 == ci and kh == 2 and kw == 2
    xb = x_nhwc.astype(jnp.bfloat16)
    # per-kh weight with columns ordered (kw, co) so the flat output row is
    # already (j, kw, co) -> free reshape to (2W, Co)
    w0 = jnp.transpose(w_iohw[:, :, 0, :], (0, 2, 1)).reshape(ci, 2 * co)
    w1 = jnp.transpose(w_iohw[:, :, 1, :], (0, 2, 1)).reshape(ci, 2 * co)
    w0 = w0.astype(jnp.bfloat16)
    w1 = w1.astype(jnp.bfloat16)
    bias2 = jnp.tile(bias.astype(jnp.float32), 2).reshape(1, 2 * co)

    out = pl.pallas_call(
        _convT_k2s2_kernel,
        out_shape=jax.ShapeDtypeStruct((n, 2 * h, wd, 2 * co), out_dtype),
        grid=(n, h, 2),
        in_specs=[
            pl.BlockSpec((1, 1, wd, ci), lambda i, r, k: (i, r, 0, 0)),
            pl.BlockSpec((ci, 2 * co), lambda i, r, k: (0, 0)),
            pl.BlockSpec((ci, 2 * co), lambda i, r, k: (0, 0)),
            pl.BlockSpec((1, 2 * co), lambda i, r, k: (0, 0)),
        ],
        out_specs=pl.BlockSpec((1, 1, wd, 2 * co),
                               lambda i, r, k: (i, 2 * r + k, 0, 0)),
        compiler_params=_mosaic_params(("parallel", "parallel", "arbitrary")),
    )(xb, w0, w1, bias2)
    # (N, 2H, W, 2*Co) -> (N, 2H, 2W, Co) is a pure metadata reshape
    return out.reshape(n, 2 * h, 2 * wd, co)


# ---------------------------------------------------------------------------
# Kernel 5: temporal Conv3d (3,1,1), pad=(1,0,0) -- 3 time taps accumulated
# as a grid axis; no 3x concatenated copy in HBM.
# ---------------------------------------------------------------------------
def _temporal_conv_kernel(x_ref, w_ref, b_ref, o_ref, acc_ref):
    k = pl.program_id(3)

    @pl.when(k == 0)
    def _():
        acc_ref[...] = jnp.zeros_like(acc_ref)

    acc_ref[...] += jnp.dot(x_ref[0, 0], w_ref[0],
                            preferred_element_type=jnp.float32)

    @pl.when(k == pl.num_programs(3) - 1)
    def _():
        o_ref[0, 0] = (acc_ref[...] + b_ref[...]).astype(o_ref.dtype)


def temporal_conv3d_k311(x_nhwc, w, bias, num_t, out_dtype=jnp.float32):
    # x: (B*T, H, W, C); w: (Cout, Cin, 3, 1, 1); pad=(1,0,0)
    nt, h, wd, c = x_nhwc.shape
    bsz = nt // num_t
    co = w.shape[0]
    hw = h * wd
    hwp, thw = _pick_hw_tile(hw, c, 2)

    x4 = x_nhwc.astype(jnp.bfloat16).reshape(bsz, num_t, hw, c)
    if hwp != hw:
        x4 = jnp.pad(x4, ((0, 0), (0, 0), (0, hwp - hw), (0, 0)))
    xp = jnp.pad(x4, ((0, 0), (1, 1), (0, 0), (0, 0)))           # pad time axis
    wk = jnp.transpose(w[:, :, :, 0, 0], (2, 1, 0)).astype(jnp.bfloat16)  # (3,ci,co)
    bias2 = bias.astype(jnp.float32).reshape(1, co)

    out = pl.pallas_call(
        _temporal_conv_kernel,
        out_shape=jax.ShapeDtypeStruct((bsz, num_t, hwp, co), out_dtype),
        grid=(bsz, num_t, hwp // thw, 3),
        in_specs=[
            pl.BlockSpec((1, 1, thw, c), lambda b, t, j, k: (b, t + k, j, 0)),
            pl.BlockSpec((1, c, co), lambda b, t, j, k: (k, 0, 0)),
            pl.BlockSpec((1, co), lambda b, t, j, k: (0, 0)),
        ],
        out_specs=pl.BlockSpec((1, 1, thw, co), lambda b, t, j, k: (b, t, j, 0)),
        scratch_shapes=[pltpu.VMEM((thw, co), jnp.float32)],
        compiler_params=_mosaic_params(
            ("parallel", "parallel", "parallel", "arbitrary")),
    )(xp, wk, bias2)
    if hwp != hw:
        out = out[:, :, :hw]
    return out.reshape(nt, h, wd, co)


# ---------------------------------------------------------------------------
# Matmul-based convs with no activation blow-up (disjoint patches)
# ---------------------------------------------------------------------------
def conv2d_1x1(x_nhwc, w_oihw, bias, out_dtype=jnp.float32):
    n, h, wd, c = x_nhwc.shape
    co = w_oihw.shape[0]
    y = matmul_bias(x_nhwc.reshape(n * h * wd, c), w_oihw[:, :, 0, 0].T, bias,
                    out_dtype=out_dtype)
    return y.reshape(n, h, wd, co)


def conv2d_2x2_s2(x_nhwc, w_oihw, bias, out_dtype=jnp.float32):
    n, h, wd, c = x_nhwc.shape
    co = w_oihw.shape[0]
    ho, wo = h // 2, wd // 2
    x_nhwc = x_nhwc[:, :2 * ho, :2 * wo, :]
    a = x_nhwc.reshape(n, ho, 2, wo, 2, c).transpose(0, 1, 3, 2, 4, 5)
    a = a.reshape(n * ho * wo, 4 * c)                 # disjoint patches: 1x size
    b = jnp.transpose(w_oihw, (2, 3, 1, 0)).reshape(4 * c, co)
    y = matmul_bias(a, b, bias, out_dtype=out_dtype)
    return y.reshape(n, ho, wo, co)


# ---------------------------------------------------------------------------
# Block forward (mirrors the PyTorch module)
# ---------------------------------------------------------------------------
def block_forward(params, x_nchw, time_embed, *, norm_groups, kernel_size=3,
                  up_resolution=None, temporal=False, num_temporal_groups=None):
    x = jnp.transpose(x_nchw, (0, 2, 3, 1)).astype(jnp.float32)   # NCHW -> NHWC
    cin = x.shape[-1]

    # ConditionalGroupNorm context: Linear(SiLU(time_embed)) -> scale/shift
    ctx = matmul_bias(jax.nn.silu(time_embed), params["ctx_w"].T, params["ctx_b"])
    scale, shift = ctx[:, :cin], ctx[:, cin:]
    x = cond_group_norm_silu(x, scale, shift, norm_groups,
                             out_dtype=jnp.bfloat16)               # GN+affine+SiLU

    if up_resolution is not None and up_resolution:
        x = conv_transpose2d_k2s2(x, params["up_w"], params["up_b"],
                                  out_dtype=jnp.bfloat16)

    has_temporal = num_temporal_groups is not None
    has_down = up_resolution is not None and not up_resolution
    proj_dtype = jnp.bfloat16 if (has_temporal or has_down) else jnp.float32
    if kernel_size == 3:
        x = conv2d_3x3(x, params["proj_w"], params["proj_b"], out_dtype=proj_dtype)
    else:
        x = conv2d_1x1(x, params["proj_w"], params["proj_b"], out_dtype=proj_dtype)

    if has_temporal:
        out = temporal_conv3d_k311(x, params["temp_w"], params["temp_b"],
                                   num_temporal_groups, out_dtype=jnp.float32)
        tm16 = params["temporal_merge"].astype(jnp.float16).astype(jnp.float32)
        x = (1.0 - tm16) * x.astype(jnp.float32) + tm16 * out     # scalar lerp (glue)

    if has_down:
        x = conv2d_2x2_s2(x, params["down_w"], params["down_b"],
                          out_dtype=jnp.float32)

    return jnp.transpose(x, (0, 3, 1, 2)).astype(jnp.float32)     # back to NCHW


# ---------------------------------------------------------------------------
# Pure-JAX f32 reference for verification
# ---------------------------------------------------------------------------
def _ref_conv2d_nchw(x, w, b, stride, padding):
    y = jax.lax.conv_general_dilated(
        x, w, window_strides=(stride, stride),
        padding=((padding, padding), (padding, padding)),
        dimension_numbers=("NCHW", "OIHW", "NCHW"),
        precision=jax.lax.Precision.HIGHEST)
    return y + b[None, :, None, None]


def block_reference(params, x_nchw, time_embed, *, norm_groups, kernel_size=3,
                    up_resolution=None, temporal=False, num_temporal_groups=None):
    hi = jax.lax.Precision.HIGHEST
    n, c, h, w = x_nchw.shape
    x = x_nchw.astype(jnp.float32)
    ctx = jnp.dot(jax.nn.silu(time_embed), params["ctx_w"].T, precision=hi)
    ctx = ctx + params["ctx_b"]
    scale, shift = ctx[:, :c], ctx[:, c:]
    g = norm_groups
    xg = x.reshape(n, g, c // g, h, w)
    mean = xg.mean(axis=(2, 3, 4), keepdims=True)
    var = ((xg - mean) ** 2).mean(axis=(2, 3, 4), keepdims=True)
    xn = ((xg - mean) / jnp.sqrt(var + 1e-5)).reshape(n, c, h, w)
    x = xn * (scale[:, :, None, None] + 1.0) + shift[:, :, None, None]
    x = jax.nn.silu(x)
    if up_resolution is not None and up_resolution:
        t = jnp.einsum("nihw,iocd->nohcwd", x, params["up_w"], precision=hi)
        nn_, co_, hh, _, ww, _ = t.shape
        x = t.reshape(nn_, co_, hh * 2, ww * 2) + params["up_b"][None, :, None, None]
    pad = 0 if kernel_size == 1 else 1
    x = _ref_conv2d_nchw(x, params["proj_w"], params["proj_b"], 1, pad)
    if num_temporal_groups is not None:
        t_ = num_temporal_groups
        b_ = x.shape[0] // t_
        x5 = x.reshape(b_, t_, x.shape[1], x.shape[2], x.shape[3]).transpose(0, 2, 1, 3, 4)
        xp = jnp.pad(x5, ((0, 0), (0, 0), (1, 1), (0, 0), (0, 0)))
        wk = params["temp_w"][:, :, :, 0, 0]
        out = sum(jnp.einsum("bcthw,oc->bothw", xp[:, :, k:k + t_], wk[:, :, k],
                             precision=hi) for k in range(3))
        out = out + params["temp_b"][None, :, None, None, None]
        out = out.transpose(0, 2, 1, 3, 4).reshape(x.shape)
        tm16 = params["temporal_merge"].astype(jnp.float16).astype(jnp.float32)
        x = (1.0 - tm16) * x + tm16 * out
    if up_resolution is not None and not up_resolution:
        x = _ref_conv2d_nchw(x, params["down_w"], params["down_b"], 2, 0)
    return x


# ---------------------------------------------------------------------------
if __name__ == "__main__":
    key = jax.random.PRNGKey(0)
    B, T = 2, 2
    N = B * T                 # x batch is (b t)
    Cin, Cout, Temb = 16, 32, 32
    H = W = 16
    G = 4                     # norm_groups (module default is 32; scaled down)

    keys = jax.random.split(key, 14)
    x = jax.random.normal(keys[0], (N, Cin, H, W), jnp.float32)
    temb = jax.random.normal(keys[1], (N, Temb), jnp.float32)

    def nrm(k, shape, s=0.1):
        return s * jax.random.normal(k, shape, jnp.float32)

    params = {
        "ctx_w": nrm(keys[2], (2 * Cin, Temb)),      # ConditionalGroupNorm linear
        "ctx_b": nrm(keys[3], (2 * Cin,)),
        "proj_w": nrm(keys[4], (Cout, Cin, 3, 3)),   # projection Conv2d 3x3
        "proj_b": nrm(keys[5], (Cout,)),
        "down_w": nrm(keys[6], (Cout, Cout, 2, 2)),  # down-sample Conv2d k2 s2
        "down_b": nrm(keys[7], (Cout,)),
        "up_w": nrm(keys[8], (Cin, Cin, 2, 2)),      # up-sample ConvTranspose2d
        "up_b": nrm(keys[9], (Cin,)),
        # NOTE: PyTorch __init__ zero-inits these; randomized (deterministic)
        # so the temporal path exercises non-trivial compute.
        "temp_w": nrm(keys[10], (Cout, Cout, 3, 1, 1)),
        "temp_b": nrm(keys[11], (Cout,)),
        "temporal_merge": jnp.asarray([0.3], jnp.float32),
    }

    # Tolerances loosened vs the pure-f32 version because all matmuls now use
    # bf16 MXU inputs (f32 accumulation) and bf16 intermediate activations.
    ATOL = RTOL = 1e-1
    MEAN_TOL = 2e-2

    # Config A: down-sampling block with temporal mixing.
    fwd_a = jax.jit(lambda p, xx, tt: block_forward(
        p, xx, tt, norm_groups=G, kernel_size=3,
        up_resolution=False, temporal=True, num_temporal_groups=T))
    out_a = fwd_a(params, x, temb)
    jax.block_until_ready(out_a)
    ref_a = block_reference(params, x, temb, norm_groups=G, kernel_size=3,
                            up_resolution=False, temporal=True,
                            num_temporal_groups=T)
    assert out_a.shape == (N, Cout, H // 2, W // 2)
    assert bool(jnp.all(jnp.isfinite(out_a)))
    assert jnp.allclose(out_a, ref_a, atol=ATOL, rtol=RTOL)
    assert float(jnp.mean(jnp.abs(out_a - ref_a))) < MEAN_TOL

    # Config B: up-sampling block, no temporal path.
    fwd_b = jax.jit(lambda p, xx, tt: block_forward(
        p, xx, tt, norm_groups=G, kernel_size=3,
        up_resolution=True, temporal=False))
    out_b = fwd_b(params, x, temb)
    jax.block_until_ready(out_b)
    ref_b = block_reference(params, x, temb, norm_groups=G, kernel_size=3,
                            up_resolution=True, temporal=False)
    assert out_b.shape == (N, Cout, 2 * H, 2 * W)
    assert bool(jnp.all(jnp.isfinite(out_b)))
    assert jnp.allclose(out_b, ref_b, atol=ATOL, rtol=RTOL)
    assert float(jnp.mean(jnp.abs(out_b - ref_b))) < MEAN_TOL

    print("KERNEL_OK")
</pallas_src>

<mosaic_0001>
module attributes {stable_mosaic.version = 11 : i64} {
  func.func @_gn_stats_kernel(%arg0: i32, %arg1: i32, %arg2: memref<1x256x16xf32, #tpu.memory_space<vmem>>, %arg3: memref<1x1x16xf32, #tpu.memory_space<vmem>>, %arg4: memref<1x1x16xf32, #tpu.memory_space<vmem>>) attributes {dimension_semantics = [#tpu.dimension_semantics<parallel>, #tpu.dimension_semantics<arbitrary>], iteration_bounds = array<i64: 4, 1>, scalar_prefetch = 0 : i64, scratch_operands = 0 : i64, tpu.core_type = #tpu.core_type<tc>, window_params = [{transform_indices = @transform_0, window_bounds = array<i64: 1, 256, 16>}, {transform_indices = @transform_1, window_bounds = array<i64: 1, 1, 16>}, {transform_indices = @transform_2, window_bounds = array<i64: 1, 1, 16>}]} {
    %c0_i32 = arith.constant 0 : i32
    %0 = arith.cmpi eq, %arg1, %c0_i32 : i32
    %1 = arith.extui %0 : i1 to i32
    %c0_i32_0 = arith.constant 0 : i32
    %2 = arith.cmpi ne, %1, %c0_i32_0 : i32
    scf.if %2 {
      %cst_16 = arith.constant 0.000000e+00 : f32
      %22 = vector.broadcast %cst_16 : f32 to vector<1x1x16xf32>
      %c0_17 = arith.constant 0 : index
      %c0_18 = arith.constant 0 : index
      %c0_19 = arith.constant 0 : index
      %23 = vector.load %arg3[%c0_17, %c0_18, %c0_19] : memref<1x1x16xf32, #tpu.memory_space<vmem>>, vector<1x1x16xf32>
      tpu.vector_store %arg3[%c0_17, %c0_18, %c0_19], %22 {strides = array<i32>} : memref<1x1x16xf32, #tpu.memory_space<vmem>>, vector<1x1x16xf32>,
      %cst_20 = arith.constant 0.000000e+00 : f32
      %24 = vector.broadcast %cst_20 : f32 to vector<1x1x16xf32>
      %c0_21 = arith.constant 0 : index
      %c0_22 = arith.constant 0 : index
      %c0_23 = arith.constant 0 : index
      %25 = vector.load %arg4[%c0_21, %c0_22, %c0_23] : memref<1x1x16xf32, #tpu.memory_space<vmem>>, vector<1x1x16xf32>
      tpu.vector_store %arg4[%c0_21, %c0_22, %c0_23], %24 {strides = array<i32>} : memref<1x1x16xf32, #tpu.memory_space<vmem>>, vector<1x1x16xf32>,
    } else {
    }
    %c0 = arith.constant 0 : index
    %c0_1 = arith.constant 0 : index
    %c0_2 = arith.constant 0 : index
    %3 = vector.load %arg2[%c0, %c0_1, %c0_2] : memref<1x256x16xf32, #tpu.memory_space<vmem>>, vector<1x256x16xf32>
    %4 = vector.shape_cast %3 : vector<1x256x16xf32> to vector<256x16xf32>
    %c0_3 = arith.constant 0 : index
    %c0_4 = arith.constant 0 : index
    %c0_5 = arith.constant 0 : index
    %5 = vector.load %arg3[%c0_3, %c0_4, %c0_5] : memref<1x1x16xf32, #tpu.memory_space<vmem>>, vector<1x1x16xf32>
    %6 = vector.shape_cast %5 : vector<1x1x16xf32> to vector<1x16xf32>
    %cst = arith.constant dense<0.000000e+00> : vector<16xf32>
    %7 = vector.multi_reduction <add>, %4, %cst [0] : vector<256x16xf32> to vector<16xf32>
    %8 = vector.shape_cast %7 : vector<16xf32> to vector<1x16xf32>
    %9 = arith.addf %6, %8 : vector<1x16xf32>
    %c0_6 = arith.constant 0 : index
    %c0_7 = arith.constant 0 : index
    %c0_8 = arith.constant 0 : index
    %10 = vector.load %arg3[%c0_6, %c0_7, %c0_8] : memref<1x1x16xf32, #tpu.memory_space<vmem>>, vector<1x1x16xf32>
    %11 = vector.shape_cast %10 : vector<1x1x16xf32> to vector<1x16xf32>
    %12 = vector.shape_cast %9 : vector<1x16xf32> to vector<1x1x16xf32>
    tpu.vector_store %arg3[%c0_6, %c0_7, %c0_8], %12 {strides = array<i32>} : memref<1x1x16xf32, #tpu.memory_space<vmem>>, vector<1x1x16xf32>,
    %c0_9 = arith.constant 0 : index
    %c0_10 = arith.constant 0 : index
    %c0_11 = arith.constant 0 : index
    %13 = vector.load %arg4[%c0_9, %c0_10, %c0_11] : memref<1x1x16xf32, #tpu.memory_space<vmem>>, vector<1x1x16xf32>
    %14 = vector.shape_cast %13 : vector<1x1x16xf32> to vector<1x16xf32>
    %15 = arith.mulf %4, %4 : vector<256x16xf32>
    %cst_12 = arith.constant dense<0.000000e+00> : vector<16xf32>
    %16 = vector.multi_reduction <add>, %15, %cst_12 [0] : vector<256x16xf32> to vector<16xf32>
    %17 = vector.shape_cast %16 : vector<16xf32> to vector<1x16xf32>
    %18 = arith.addf %14, %17 : vector<1x16xf32>
    %c0_13 = arith.constant 0 : index
    %c0_14 = arith.constant 0 : index
    %c0_15 = arith.constant 0 : index
    %19 = vector.load %arg4[%c0_13, %c0_14, %c0_15] : memref<1x1x16xf32, #tpu.memory_space<vmem>>, vector<1x1x16xf32>
    %20 = vector.shape_cast %19 : vector<1x1x16xf32> to vector<1x16xf32>
    %21 = vector.shape_cast %18 : vector<1x16xf32> to vector<1x1x16xf32>
    tpu.vector_store %arg4[%c0_13, %c0_14, %c0_15], %21 {strides = array<i32>} : memref<1x1x16xf32, #tpu.memory_space<vmem>>, vector<1x1x16xf32>,
    return
  }
  func.func @transform_0(%arg0: i32, %arg1: i32) -> (i32, i32, i32) {
    %c0_i32 = arith.constant 0 : i32
    %c0_i32_0 = arith.constant 0 : i32
    return %arg0, %arg1, %c0_i32 : i32, i32, i32
  }
  func.func @transform_1(%arg0: i32, %arg1: i32) -> (i32, i32, i32) {
    %c0_i32 = arith.constant 0 : i32
    %c0_i32_0 = arith.constant 0 : i32
    %c0_i32_1 = arith.constant 0 : i32
    return %arg0, %c0_i32, %c0_i32_0 : i32, i32, i32
  }
  func.func @transform_2(%arg0: i32, %arg1: i32) -> (i32, i32, i32) {
    %c0_i32 = arith.constant 0 : i32
    %c0_i32_0 = arith.constant 0 : i32
    %c0_i32_1 = arith.constant 0 : i32
    return %arg0, %c0_i32, %c0_i32_0 : i32, i32, i32
  }
}

module attributes {stable_mosaic.version = 11 : i64} {
  func.func @_matmul_bias_kernel(%arg0: i32, %arg1: i32, %arg2: i32, %arg3: memref<4x32xbf16, #tpu.memory_space<vmem>>, %arg4: memref<32x32xbf16, #tpu.memory_space<vmem>>, %arg5: memref<1x32xf32, #tpu.memory_space<vmem>>, %arg6: memref<4x32xf32, #tpu.memory_space<vmem>>, %arg7: memref<4x32xf32, #tpu.memory_space<vmem>>) attributes {dimension_semantics = [#tpu.dimension_semantics<parallel>, #tpu.dimension_semantics<parallel>, #tpu.dimension_semantics<arbitrary>], iteration_bounds = array<i64: 1, 1, 1>, scalar_prefetch = 0 : i64, scratch_operands = 1 : i64, tpu.core_type = #tpu.core_type<tc>, window_params = [{transform_indices = @transform_0, window_bounds = array<i64: 4, 32>}, {transform_indices = @transform_1, window_bounds = array<i64: 32, 32>}, {transform_indices = @transform_2, window_bounds = array<i64: 1, 32>}, {transform_indices = @transform_3, window_bounds = array<i64: 4, 32>}]} {
    %c0_i32 = arith.constant 0 : i32
    %0 = arith.cmpi eq, %arg2, %c0_i32 : i32
    %1 = arith.extui %0 : i1 to i32
    %c0_i32_0 = arith.constant 0 : i32
    %2 = arith.cmpi ne, %1, %c0_i32_0 : i32
    scf.if %2 {
      %cst_10 = arith.constant 0.000000e+00 : f32
      %12 = vector.broadcast %cst_10 : f32 to vector<4x32xf32>
      %c0_11 = arith.constant 0 : index
      %c0_12 = arith.constant 0 : index
      %13 = vector.load %arg7[%c0_11, %c0_12] : memref<4x32xf32, #tpu.memory_space<vmem>>, vector<4x32xf32>
      tpu.vector_store %arg7[%c0_11, %c0_12], %12 {strides = array<i32>} : memref<4x32xf32, #tpu.memory_space<vmem>>, vector<4x32xf32>,
    } else {
    }
    %c0 = arith.constant 0 : index
    %c0_1 = arith.constant 0 : index
    %3 = vector.load %arg7[%c0, %c0_1] : memref<4x32xf32, #tpu.memory_space<vmem>>, vector<4x32xf32>
    %c0_2 = arith.constant 0 : index
    %c0_3 = arith.constant 0 : index
    %4 = vector.load %arg3[%c0_2, %c0_3] : memref<4x32xbf16, #tpu.memory_space<vmem>>, vector<4x32xbf16>
    %c0_4 = arith.constant 0 : index
    %c0_5 = arith.constant 0 : index
    %5 = vector.load %arg4[%c0_4, %c0_5] : memref<32x32xbf16, #tpu.memory_space<vmem>>, vector<32x32xbf16>
    %cst = arith.constant dense<0.000000e+00> : vector<4x32xf32>
    %6 = tpu.matmul %4, %5, %cst {dimension_numbers = #tpu.dot_dimension_numbers<[1], [0], [0], [1], [0, 0, 1, 1], [], []>} : vector<4x32xbf16>, vector<32x32xbf16>, vector<4x32xf32> -> vector<4x32xf32>
    %7 = arith.addf %3, %6 : vector<4x32xf32>
    %c0_6 = arith.constant 0 : index
    %c0_7 = arith.constant 0 : index
    %8 = vector.load %arg7[%c0_6, %c0_7] : memref<4x32xf32, #tpu.memory_space<vmem>>, vector<4x32xf32>
    tpu.vector_store %arg7[%c0_6, %c0_7], %7 {strides = array<i32>} : memref<4x32xf32, #tpu.memory_space<vmem>>, vector<4x32xf32>,
    %c0_i32_8 = arith.constant 0 : i32
    %9 = arith.cmpi eq, %arg2, %c0_i32_8 : i32
    %10 = arith.extui %9 : i1 to i32
    %c0_i32_9 = arith.constant 0 : i32
    %11 = arith.cmpi ne, %10, %c0_i32_9 : i32
    scf.if %11 {
      %c0_10 = arith.constant 0 : index
      %c0_11 = arith.constant 0 : index
      %12 = vector.load %arg7[%c0_10, %c0_11] : memref<4x32xf32, #tpu.memory_space<vmem>>, vector<4x32xf32>
      %c0_12 = arith.constant 0 : index
      %c0_13 = arith.constant 0 : index
      %13 = vector.load %arg5[%c0_12, %c0_13] : memref<1x32xf32, #tpu.memory_space<vmem>>, vector<1x32xf32>
      %14 = vector.broadcast %13 : vector<1x32xf32> to vector<4x32xf32>
      %15 = arith.addf %12, %14 : vector<4x32xf32>
      %c0_14 = arith.constant 0 : index
      %c0_15 = arith.constant 0 : index
      %16 = vector.load %arg6[%c0_14, %c0_15] : memref<4x32xf32, #tpu.memory_space<vmem>>, vector<4x32xf32>
      tpu.vector_store %arg6[%c0_14, %c0_15], %15 {strides = array<i32>} : memref<4x32xf32, #tpu.memory_space<vmem>>, vector<4x32xf32>,
    } else {
    }
    return
  }
  func.func @transform_0(%arg0: i32, %arg1: i32, %arg2: i32) -> (i32, i32) {
    %c0_i32 = arith.constant 0 : i32
    return %arg0, %arg2 : i32, i32
  }
  func.func @transform_1(%arg0: i32, %arg1: i32, %arg2: i32) -> (i32, i32) {
    %c0_i32 = arith.constant 0 : i32
    return %arg2, %arg1 : i32, i32
  }
  func.func @transform_2(%arg0: i32, %arg1: i32, %arg2: i32) -> (i32, i32) {
    %c0_i32 = arith.constant 0 : i32
    %c0_i32_0 = arith.constant 0 : i32
    return %c0_i32, %arg1 : i32, i32
  }
  func.func @transform_3(%arg0: i32, %arg1: i32, %arg2: i32) -> (i32, i32) {
    %c0_i32 = arith.constant 0 : i32
    return %arg0, %arg1 : i32, i32
  }
}

module attributes {stable_mosaic.version = 11 : i64} {
  func.func @_gn_apply_silu_kernel(%arg0: i32, %arg1: i32, %arg2: memref<1x256x16xf32, #tpu.memory_space<vmem>>, %arg3: memref<1x1x16xf32, #tpu.memory_space<vmem>>, %arg4: memref<1x1x16xf32, #tpu.memory_space<vmem>>, %arg5: memref<1x256x16xbf16, #tpu.memory_space<vmem>>) attributes {dimension_semantics = [#tpu.dimension_semantics<parallel>, #tpu.dimension_semantics<arbitrary>], iteration_bounds = array<i64: 4, 1>, scalar_prefetch = 0 : i64, scratch_operands = 0 : i64, tpu.core_type = #tpu.core_type<tc>, window_params = [{transform_indices = @transform_0, window_bounds = array<i64: 1, 256, 16>}, {transform_indices = @transform_1, window_bounds = array<i64: 1, 1, 16>}, {transform_indices = @transform_2, window_bounds = array<i64: 1, 1, 16>}, {transform_indices = @transform_3, window_bounds = array<i64: 1, 256, 16>}]} {
    %c0 = arith.constant 0 : index
    %c0_0 = arith.constant 0 : index
    %c0_1 = arith.constant 0 : index
    %0 = vector.load %arg2[%c0, %c0_0, %c0_1] : memref<1x256x16xf32, #tpu.memory_space<vmem>>, vector<1x256x16xf32>
    %1 = vector.shape_cast %0 : vector<1x256x16xf32> to vector<256x16xf32>
    %c0_2 = arith.constant 0 : index
    %c0_3 = arith.constant 0 : index
    %c0_4 = arith.constant 0 : index
    %2 = vector.load %arg3[%c0_2, %c0_3, %c0_4] : memref<1x1x16xf32, #tpu.memory_space<vmem>>, vector<1x1x16xf32>
    %3 = vector.shape_cast %2 : vector<1x1x16xf32> to vector<1x16xf32>
    %4 = vector.broadcast %3 : vector<1x16xf32> to vector<256x16xf32>
    %5 = arith.mulf %1, %4 : vector<256x16xf32>
    %c0_5 = arith.constant 0 : index
    %c0_6 = arith.constant 0 : index
    %c0_7 = arith.constant 0 : index
    %6 = vector.load %arg4[%c0_5, %c0_6, %c0_7] : memref<1x1x16xf32, #tpu.memory_space<vmem>>, vector<1x1x16xf32>
    %7 = vector.shape_cast %6 : vector<1x1x16xf32> to vector<1x16xf32>
    %8 = vector.broadcast %7 : vector<1x16xf32> to vector<256x16xf32>
    %9 = arith.addf %5, %8 : vector<256x16xf32>
    %10 = arith.negf %9 : vector<256x16xf32>
    %11 = math.exp %10 : vector<256x16xf32>
    %cst = arith.constant 1.000000e+00 : f32
    %12 = vector.broadcast %cst : f32 to vector<256x16xf32>
    %13 = arith.addf %12, %11 : vector<256x16xf32>
    %14 = arith.divf %12, %13 : vector<256x16xf32>
    %15 = arith.mulf %9, %14 : vector<256x16xf32>
    %16 = arith.truncf %15 : vector<256x16xf32> to vector<256x16xbf16>
    %c0_8 = arith.constant 0 : index
    %c0_9 = arith.constant 0 : index
    %c0_10 = arith.constant 0 : index
    %17 = vector.load %arg5[%c0_8, %c0_9, %c0_10] : memref<1x256x16xbf16, #tpu.memory_space<vmem>>, vector<1x256x16xbf16>
    %18 = vector.shape_cast %17 : vector<1x256x16xbf16> to vector<256x16xbf16>
    %19 = vector.shape_cast %16 : vector<256x16xbf16> to vector<1x256x16xbf16>
    tpu.vector_store %arg5[%c0_8, %c0_9, %c0_10], %19 {strides = array<i32>} : memref<1x256x16xbf16, #tpu.memory_space<vmem>>, vector<1x256x16xbf16>,
    return
  }
  func.func @transform_0(%arg0: i32, %arg1: i32) -> (i32, i32, i32) {
    %c0_i32 = arith.constant 0 : i32
    %c0_i32_0 = arith.constant 0 : i32
    return %arg0, %arg1, %c0_i32 : i32, i32, i32
  }
  func.func @transform_1(%arg0: i32, %arg1: i32) -> (i32, i32, i32) {
    %c0_i32 = arith.constant 0 : i32
    %c0_i32_0 = arith.constant 0 : i32
    %c0_i32_1 = arith.constant 0 : i32
    return %arg0, %c0_i32, %c0_i32_0 : i32, i32, i32
  }
  func.func @transform_2(%arg0: i32, %arg1: i32) -> (i32, i32, i32) {
    %c0_i32 = arith.constant 0 : i32
    %c0_i32_0 = arith.constant 0 : i32
    %c0_i32_1 = arith.constant 0 : i32
    return %arg0, %c0_i32, %c0_i32_0 : i32, i32, i32
  }
  func.func @transform_3(%arg0: i32, %arg1: i32) -> (i32, i32, i32) {
    %c0_i32 = arith.constant 0 : i32
    %c0_i32_0 = arith.constant 0 : i32
    return %arg0, %arg1, %c0_i32 : i32, i32, i32
  }
}

module attributes {stable_mosaic.version = 11 : i64} {
  func.func @_conv3x3_kernel(%arg0: i32, %arg1: i32, %arg2: i32, %arg3: i32, %arg4: memref<1x1x18x16xbf16, #tpu.memory_space<vmem>>, %arg5: memref<1x3x16x32xbf16, #tpu.memory_space<vmem>>, %arg6: memref<1x32xf32, #tpu.memory_space<vmem>>, %arg7: memref<1x1x16x32xbf16, #tpu.memory_space<vmem>>, %arg8: memref<16x32xf32, #tpu.memory_space<vmem>>) attributes {dimension_semantics = [#tpu.dimension_semantics<parallel>, #tpu.dimension_semantics<parallel>, #tpu.dimension_semantics<parallel>, #tpu.dimension_semantics<arbitrary>], iteration_bounds = array<i64: 4, 16, 1, 3>, scalar_prefetch = 0 : i64, scratch_operands = 1 : i64, tpu.core_type = #tpu.core_type<tc>, window_params = [{transform_indices = @transform_0, window_bounds = array<i64: 1, 1, 18, 16>}, {transform_indices = @transform_1, window_bounds = array<i64: 1, 3, 16, 32>}, {transform_indices = @transform_2, window_bounds = array<i64: 1, 32>}, {transform_indices = @transform_3, window_bounds = array<i64: 1, 1, 16, 32>}]} {
    %c0_i32 = arith.constant 0 : i32
    %0 = arith.cmpi eq, %arg3, %c0_i32 : i32
    %1 = arith.extui %0 : i1 to i32
    %c0_i32_0 = arith.constant 0 : i32
    %2 = arith.cmpi ne, %1, %c0_i32_0 : i32
    scf.if %2 {
      %cst_29 = arith.constant 0.000000e+00 : f32
      %26 = vector.broadcast %cst_29 : f32 to vector<16x32xf32>
      %c0_30 = arith.constant 0 : index
      %c0_31 = arith.constant 0 : index
      %27 = vector.load %arg8[%c0_30, %c0_31] : memref<16x32xf32, #tpu.memory_space<vmem>>, vector<16x32xf32>
      tpu.vector_store %arg8[%c0_30, %c0_31], %26 {strides = array<i32>} : memref<16x32xf32, #tpu.memory_space<vmem>>, vector<16x32xf32>,
    } else {
    }
    %c0 = arith.constant 0 : index
    %c0_1 = arith.constant 0 : index
    %3 = vector.load %arg8[%c0, %c0_1] : memref<16x32xf32, #tpu.memory_space<vmem>>, vector<16x32xf32>
    %c0_2 = arith.constant 0 : index
    %c0_3 = arith.constant 0 : index
    %c0_4 = arith.constant 0 : index
    %c0_5 = arith.constant 0 : index
    %4 = vector.load %arg4[%c0_2, %c0_3, %c0_4, %c0_5] : memref<1x1x18x16xbf16, #tpu.memory_space<vmem>>, vector<1x1x16x16xbf16>
    %5 = vector.shape_cast %4 : vector<1x1x16x16xbf16> to vector<16x16xbf16>
    %c0_6 = arith.constant 0 : index
    %c0_7 = arith.constant 0 : index
    %c0_8 = arith.constant 0 : index
    %c0_9 = arith.constant 0 : index
    %6 = vector.load %arg5[%c0_6, %c0_7, %c0_8, %c0_9] : memref<1x3x16x32xbf16, #tpu.memory_space<vmem>>, vector<1x1x16x32xbf16>
    %7 = vector.shape_cast %6 : vector<1x1x16x32xbf16> to vector<16x32xbf16>
    %cst = arith.constant dense<0.000000e+00> : vector<16x32xf32>
    %8 = tpu.matmul %5, %7, %cst {dimension_numbers = #tpu.dot_dimension_numbers<[1], [0], [0], [1], [0, 0, 1, 1], [], []>} : vector<16x16xbf16>, vector<16x32xbf16>, vector<16x32xf32> -> vector<16x32xf32>
    %9 = arith.addf %3, %8 : vector<16x32xf32>
    %c0_10 = arith.constant 0 : index
    %c0_11 = arith.constant 0 : index
    %c1 = arith.constant 1 : index
    %c0_12 = arith.constant 0 : index
    %10 = vector.load %arg4[%c0_10, %c0_11, %c1, %c0_12] : memref<1x1x18x16xbf16, #tpu.memory_space<vmem>>, vector<1x1x16x16xbf16>
    %11 = vector.shape_cast %10 : vector<1x1x16x16xbf16> to vector<16x16xbf16>
    %c0_13 = arith.constant 0 : index
    %c1_14 = arith.constant 1 : index
    %c0_15 = arith.constant 0 : index
    %c0_16 = arith.constant 0 : index
    %12 = vector.load %arg5[%c0_13, %c1_14, %c0_15, %c0_16] : memref<1x3x16x32xbf16, #tpu.memory_space<vmem>>, vector<1x1x16x32xbf16>
    %13 = vector.shape_cast %12 : vector<1x1x16x32xbf16> to vector<16x32xbf16>
    %cst_17 = arith.constant dense<0.000000e+00> : vector<16x32xf32>
    %14 = tpu.matmul %11, %13, %cst_17 {dimension_numbers = #tpu.dot_dimension_numbers<[1], [0], [0], [1], [0, 0, 1, 1], [], []>} : vector<16x16xbf16>, vector<16x32xbf16>, vector<16x32xf32> -> vector<16x32xf32>
    %15 = arith.addf %9, %14 : vector<16x32xf32>
    %c0_18 = arith.constant 0 : index
    %c0_19 = arith.constant 0 : index
    %c2 = arith.constant 2 : index
    %c0_20 = arith.constant 0 : index
    %16 = vector.load %arg4[%c0_18, %c0_19, %c2, %c0_20] : memref<1x1x18x16xbf16, #tpu.memory_space<vmem>>, vector<1x1x16x16xbf16>
    %17 = vector.shape_cast %16 : vector<1x1x16x16xbf16> to vector<16x16xbf16>
    %c0_21 = arith.constant 0 : index
    %c2_22 = arith.constant 2 : index
    %c0_23 = arith.constant 0 : index
    %c0_24 = arith.constant 0 : index
    %18 = vector.load %arg5[%c0_21, %c2_22, %c0_23, %c0_24] : memref<1x3x16x32xbf16, #tpu.memory_space<vmem>>, vector<1x1x16x32xbf16>
    %19 = vector.shape_cast %18 : vector<1x1x16x32xbf16> to vector<16x32xbf16>
    %cst_25 = arith.constant dense<0.000000e+00> : vector<16x32xf32>
    %20 = tpu.matmul %17, %19, %cst_25 {dimension_numbers = #tpu.dot_dimension_numbers<[1], [0], [0], [1], [0, 0, 1, 1], [], []>} : vector<16x16xbf16>, vector<16x32xbf16>, vector<16x32xf32> -> vector<16x32xf32>
    %21 = arith.addf %15, %20 : vector<16x32xf32>
    %c0_26 = arith.constant 0 : index
    %c0_27 = arith.constant 0 : index
    %22 = vector.load %arg8[%c0_26, %c0_27] : memref<16x32xf32, #tpu.memory_space<vmem>>, vector<16x32xf32>
    tpu.vector_store %arg8[%c0_26, %c0_27], %21 {strides = array<i32>} : memref<16x32xf32, #tpu.memory_space<vmem>>, vector<16x32xf32>,
    %c2_i32 = arith.constant 2 : i32
    %23 = arith.cmpi eq, %arg3, %c2_i32 : i32
    %24 = arith.extui %23 : i1 to i32
    %c0_i32_28 = arith.constant 0 : i32
    %25 = arith.cmpi ne, %24, %c0_i32_28 : i32
    scf.if %25 {
      %c0_29 = arith.constant 0 : index
      %c0_30 = arith.constant 0 : index
      %26 = vector.load %arg8[%c0_29, %c0_30] : memref<16x32xf32, #tpu.memory_space<vmem>>, vector<16x32xf32>
      %c0_31 = arith.constant 0 : index
      %c0_32 = arith.constant 0 : index
      %27 = vector.load %arg6[%c0_31, %c0_32] : memref<1x32xf32, #tpu.memory_space<vmem>>, vector<1x32xf32>
      %28 = vector.broadcast %27 : vector<1x32xf32> to vector<16x32xf32>
      %29 = arith.addf %26, %28 : vector<16x32xf32>
      %30 = arith.truncf %29 : vector<16x32xf32> to vector<16x32xbf16>
      %c0_33 = arith.constant 0 : index
      %c0_34 = arith.constant 0 : index
      %c0_35 = arith.constant 0 : index
      %c0_36 = arith.constant 0 : index
      %31 = vector.load %arg7[%c0_33, %c0_34, %c0_35, %c0_36] : memref<1x1x16x32xbf16, #tpu.memory_space<vmem>>, vector<1x1x16x32xbf16>
      %32 = vector.shape_cast %31 : vector<1x1x16x32xbf16> to vector<16x32xbf16>
      %33 = vector.shape_cast %30 : vector<16x32xbf16> to vector<1x1x16x32xbf16>
      tpu.vector_store %arg7[%c0_33, %c0_34, %c0_35, %c0_36], %33 {strides = array<i32>} : memref<1x1x16x32xbf16, #tpu.memory_space<vmem>>, vector<1x1x16x32xbf16>,
    } else {
    }
    return
  }
  func.func @transform_0(%arg0: i32, %arg1: i32, %arg2: i32, %arg3: i32) -> (i32, i32, i32, i32) {
    %0 = arith.addi %arg1, %arg3 : i32
    %c0_i32 = arith.constant 0 : i32
    %c0_i32_0 = arith.constant 0 : i32
    %c0_i32_1 = arith.constant 0 : i32
    return %arg0, %0, %c0_i32, %c0_i32_0 : i32, i32, i32, i32
  }
  func.func @transform_1(%arg0: i32, %arg1: i32, %arg2: i32, %arg3: i32) -> (i32, i32, i32, i32) {
    %c0_i32 = arith.constant 0 : i32
    %c0_i32_0 = arith.constant 0 : i32
    %c0_i32_1 = arith.constant 0 : i32
    return %arg3, %c0_i32, %c0_i32_0, %arg2 : i32, i32, i32, i32
  }
  func.func @transform_2(%arg0: i32, %arg1: i32, %arg2: i32, %arg3: i32) -> (i32, i32) {
    %c0_i32 = arith.constant 0 : i32
    %c0_i32_0 = arith.constant 0 : i32
    return %c0_i32, %arg2 : i32, i32
  }
  func.func @transform_3(%arg0: i32, %arg1: i32, %arg2: i32, %arg3: i32) -> (i32, i32, i32, i32) {
    %c0_i32 = arith.constant 0 : i32
    %c0_i32_0 = arith.constant 0 : i32
    return %arg0, %arg1, %c0_i32, %arg2 : i32, i32, i32, i32
  }
}

module attributes {stable_mosaic.version = 11 : i64} {
  func.func @_temporal_conv_kernel(%arg0: i32, %arg1: i32, %arg2: i32, %arg3: i32, %arg4: memref<1x1x256x32xbf16, #tpu.memory_space<vmem>>, %arg5: memref<1x32x32xbf16, #tpu.memory_space<vmem>>, %arg6: memref<1x32xf32, #tpu.memory_space<vmem>>, %arg7: memref<1x1x256x32xf32, #tpu.memory_space<vmem>>, %arg8: memref<256x32xf32, #tpu.memory_space<vmem>>) attributes {dimension_semantics = [#tpu.dimension_semantics<parallel>, #tpu.dimension_semantics<parallel>, #tpu.dimension_semantics<parallel>, #tpu.dimension_semantics<arbitrary>], iteration_bounds = array<i64: 2, 2, 1, 3>, scalar_prefetch = 0 : i64, scratch_operands = 1 : i64, tpu.core_type = #tpu.core_type<tc>, window_params = [{transform_indices = @transform_0, window_bounds = array<i64: 1, 1, 256, 32>}, {transform_indices = @transform_1, window_bounds = array<i64: 1, 32, 32>}, {pipeline_mode = #tpu.pipeline_mode<synchronous>, transform_indices = @transform_2, window_bounds = array<i64: 1, 32>}, {transform_indices = @transform_3, window_bounds = array<i64: 1, 1, 256, 32>}]} {
    %c0_i32 = arith.constant 0 : i32
    %0 = arith.cmpi eq, %arg3, %c0_i32 : i32
    %1 = arith.extui %0 : i1 to i32
    %c0_i32_0 = arith.constant 0 : i32
    %2 = arith.cmpi ne, %1, %c0_i32_0 : i32
    scf.if %2 {
      %cst_12 = arith.constant 0.000000e+00 : f32
      %14 = vector.broadcast %cst_12 : f32 to vector<256x32xf32>
      %c0_13 = arith.constant 0 : index
      %c0_14 = arith.constant 0 : index
      %15 = vector.load %arg8[%c0_13, %c0_14] : memref<256x32xf32, #tpu.memory_space<vmem>>, vector<256x32xf32>
      tpu.vector_store %arg8[%c0_13, %c0_14], %14 {strides = array<i32>} : memref<256x32xf32, #tpu.memory_space<vmem>>, vector<256x32xf32>,
    } else {
    }
    %c0 = arith.constant 0 : index
    %c0_1 = arith.constant 0 : index
    %3 = vector.load %arg8[%c0, %c0_1] : memref<256x32xf32, #tpu.memory_space<vmem>>, vector<256x32xf32>
    %c0_2 = arith.constant 0 : index
    %c0_3 = arith.constant 0 : index
    %c0_4 = arith.constant 0 : index
    %c0_5 = arith.constant 0 : index
    %4 = vector.load %arg4[%c0_2, %c0_3, %c0_4, %c0_5] : memref<1x1x256x32xbf16, #tpu.memory_space<vmem>>, vector<1x1x256x32xbf16>
    %5 = vector.shape_cast %4 : vector<1x1x256x32xbf16> to vector<256x32xbf16>
    %c0_6 = arith.constant 0 : index
    %c0_7 = arith.constant 0 : index
    %c0_8 = arith.constant 0 : index
    %6 = vector.load %arg5[%c0_6, %c0_7, %c0_8] : memref<1x32x32xbf16, #tpu.memory_space<vmem>>, vector<1x32x32xbf16>
    %7 = vector.shape_cast %6 : vector<1x32x32xbf16> to vector<32x32xbf16>
    %cst = arith.constant dense<0.000000e+00> : vector<256x32xf32>
    %8 = tpu.matmul %5, %7, %cst {dimension_numbers = #tpu.dot_dimension_numbers<[1], [0], [0], [1], [0, 0, 1, 1], [], []>} : vector<256x32xbf16>, vector<32x32xbf16>, vector<256x32xf32> -> vector<256x32xf32>
    %9 = arith.addf %3, %8 : vector<256x32xf32>
    %c0_9 = arith.constant 0 : index
    %c0_10 = arith.constant 0 : index
    %10 = vector.load %arg8[%c0_9, %c0_10] : memref<256x32xf32, #tpu.memory_space<vmem>>, vector<256x32xf32>
    tpu.vector_store %arg8[%c0_9, %c0_10], %9 {strides = array<i32>} : memref<256x32xf32, #tpu.memory_space<vmem>>, vector<256x32xf32>,
    %c2_i32 = arith.constant 2 : i32
    %11 = arith.cmpi eq, %arg3, %c2_i32 : i32
    %12 = arith.extui %11 : i1 to i32
    %c0_i32_11 = arith.constant 0 : i32
    %13 = arith.cmpi ne, %12, %c0_i32_11 : i32
    scf.if %13 {
      %c0_12 = arith.constant 0 : index
      %c0_13 = arith.constant 0 : index
      %14 = vector.load %arg8[%c0_12, %c0_13] : memref<256x32xf32, #tpu.memory_space<vmem>>, vector<256x32xf32>
      %c0_14 = arith.constant 0 : index
      %c0_15 = arith.constant 0 : index
      %15 = vector.load %arg6[%c0_14, %c0_15] : memref<1x32xf32, #tpu.memory_space<vmem>>, vector<1x32xf32>
      %16 = vector.broadcast %15 : vector<1x32xf32> to vector<256x32xf32>
      %17 = arith.addf %14, %16 : vector<256x32xf32>
      %c0_16 = arith.constant 0 : index
      %c0_17 = arith.constant 0 : index
      %c0_18 = arith.constant 0 : index
      %c0_19 = arith.constant 0 : index
      %18 = vector.load %arg7[%c0_16, %c0_17, %c0_18, %c0_19] : memref<1x1x256x32xf32, #tpu.memory_space<vmem>>, vector<1x1x256x32xf32>
      %19 = vector.shape_cast %18 : vector<1x1x256x32xf32> to vector<256x32xf32>
      %20 = vector.shape_cast %17 : vector<256x32xf32> to vector<1x1x256x32xf32>
      tpu.vector_store %arg7[%c0_16, %c0_17, %c0_18, %c0_19], %20 {strides = array<i32>} : memref<1x1x256x32xf32, #tpu.memory_space<vmem>>, vector<1x1x256x32xf32>,
    } else {
    }
    return
  }
  func.func @transform_0(%arg0: i32, %arg1: i32, %arg2: i32, %arg3: i32) -> (i32, i32, i32, i32) {
    %0 = arith.addi %arg1, %arg3 : i32
    %c0_i32 = arith.constant 0 : i32
    %c0_i32_0 = arith.constant 0 : i32
    return %arg0, %0, %arg2, %c0_i32 : i32, i32, i32, i32
  }
  func.func @transform_1(%arg0: i32, %arg1: i32, %arg2: i32, %arg3: i32) -> (i32, i32, i32) {
    %c0_i32 = arith.constant 0 : i32
    %c0_i32_0 = arith.constant 0 : i32
    %c0_i32_1 = arith.constant 0 : i32
    return %arg3, %c0_i32, %c0_i32_0 : i32, i32, i32
  }
  func.func @transform_2(%arg0: i32, %arg1: i32, %arg2: i32, %arg3: i32) -> (i32, i32) {
    %c0_i32 = arith.constant 0 : i32
    %c0_i32_0 = arith.constant 0 : i32
    %c0_i32_1 = arith.constant 0 : i32
    return %c0_i32, %c0_i32_0 : i32, i32
  }
  func.func @transform_3(%arg0: i32, %arg1: i32, %arg2: i32, %arg3: i32) -> (i32, i32, i32, i32) {
    %c0_i32 = arith.constant 0 : i32
    %c0_i32_0 = arith.constant 0 : i32
    return %arg0, %arg1, %arg2, %c0_i32 : i32, i32, i32, i32
  }
}

module attributes {stable_mosaic.version = 11 : i64} {
  func.func @_matmul_bias_kernel(%arg0: i32, %arg1: i32, %arg2: i32, %arg3: memref<256x128xbf16, #tpu.memory_space<vmem>>, %arg4: memref<128x32xbf16, #tpu.memory_space<vmem>>, %arg5: memref<1x32xf32, #tpu.memory_space<vmem>>, %arg6: memref<256x32xf32, #tpu.memory_space<vmem>>, %arg7: memref<256x32xf32, #tpu.memory_space<vmem>>) attributes {dimension_semantics = [#tpu.dimension_semantics<parallel>, #tpu.dimension_semantics<parallel>, #tpu.dimension_semantics<arbitrary>], iteration_bounds = array<i64: 1, 1, 1>, scalar_prefetch = 0 : i64, scratch_operands = 1 : i64, tpu.core_type = #tpu.core_type<tc>, window_params = [{transform_indices = @transform_0, window_bounds = array<i64: 256, 128>}, {transform_indices = @transform_1, window_bounds = array<i64: 128, 32>}, {transform_indices = @transform_2, window_bounds = array<i64: 1, 32>}, {transform_indices = @transform_3, window_bounds = array<i64: 256, 32>}]} {
    %c0_i32 = arith.constant 0 : i32
    %0 = arith.cmpi eq, %arg2, %c0_i32 : i32
    %1 = arith.extui %0 : i1 to i32
    %c0_i32_0 = arith.constant 0 : i32
    %2 = arith.cmpi ne, %1, %c0_i32_0 : i32
    scf.if %2 {
      %cst_10 = arith.constant 0.000000e+00 : f32
      %12 = vector.broadcast %cst_10 : f32 to vector<256x32xf32>
      %c0_11 = arith.constant 0 : index
      %c0_12 = arith.constant 0 : index
      %13 = vector.load %arg7[%c0_11, %c0_12] : memref<256x32xf32, #tpu.memory_space<vmem>>, vector<256x32xf32>
      tpu.vector_store %arg7[%c0_11, %c0_12], %12 {strides = array<i32>} : memref<256x32xf32, #tpu.memory_space<vmem>>, vector<256x32xf32>,
    } else {
    }
    %c0 = arith.constant 0 : index
    %c0_1 = arith.constant 0 : index
    %3 = vector.load %arg7[%c0, %c0_1] : memref<256x32xf32, #tpu.memory_space<vmem>>, vector<256x32xf32>
    %c0_2 = arith.constant 0 : index
    %c0_3 = arith.constant 0 : index
    %4 = vector.load %arg3[%c0_2, %c0_3] : memref<256x128xbf16, #tpu.memory_space<vmem>>, vector<256x128xbf16>
    %c0_4 = arith.constant 0 : index
    %c0_5 = arith.constant 0 : index
    %5 = vector.load %arg4[%c0_4, %c0_5] : memref<128x32xbf16, #tpu.memory_space<vmem>>, vector<128x32xbf16>
    %cst = arith.constant dense<0.000000e+00> : vector<256x32xf32>
    %6 = tpu.matmul %4, %5, %cst {dimension_numbers = #tpu.dot_dimension_numbers<[1], [0], [0], [1], [0, 0, 1, 1], [], []>} : vector<256x128xbf16>, vector<128x32xbf16>, vector<256x32xf32> -> vector<256x32xf32>
    %7 = arith.addf %3, %6 : vector<256x32xf32>
    %c0_6 = arith.constant 0 : index
    %c0_7 = arith.constant 0 : index
    %8 = vector.load %arg7[%c0_6, %c0_7] : memref<256x32xf32, #tpu.memory_space<vmem>>, vector<256x32xf32>
    tpu.vector_store %arg7[%c0_6, %c0_7], %7 {strides = array<i32>} : memref<256x32xf32, #tpu.memory_space<vmem>>, vector<256x32xf32>,
    %c0_i32_8 = arith.constant 0 : i32
    %9 = arith.cmpi eq, %arg2, %c0_i32_8 : i32
    %10 = arith.extui %9 : i1 to i32
    %c0_i32_9 = arith.constant 0 : i32
    %11 = arith.cmpi ne, %10, %c0_i32_9 : i32
    scf.if %11 {
      %c0_10 = arith.constant 0 : index
      %c0_11 = arith.constant 0 : index
      %12 = vector.load %arg7[%c0_10, %c0_11] : memref<256x32xf32, #tpu.memory_space<vmem>>, vector<256x32xf32>
      %c0_12 = arith.constant 0 : index
      %c0_13 = arith.constant 0 : index
      %13 = vector.load %arg5[%c0_12, %c0_13] : memref<1x32xf32, #tpu.memory_space<vmem>>, vector<1x32xf32>
      %14 = vector.broadcast %13 : vector<1x32xf32> to vector<256x32xf32>
      %15 = arith.addf %12, %14 : vector<256x32xf32>
      %c0_14 = arith.constant 0 : index
      %c0_15 = arith.constant 0 : index
      %16 = vector.load %arg6[%c0_14, %c0_15] : memref<256x32xf32, #tpu.memory_space<vmem>>, vector<256x32xf32>
      tpu.vector_store %arg6[%c0_14, %c0_15], %15 {strides = array<i32>} : memref<256x32xf32, #tpu.memory_space<vmem>>, vector<256x32xf32>,
    } else {
    }
    return
  }
  func.func @transform_0(%arg0: i32, %arg1: i32, %arg2: i32) -> (i32, i32) {
    %c0_i32 = arith.constant 0 : i32
    return %arg0, %arg2 : i32, i32
  }
  func.func @transform_1(%arg0: i32, %arg1: i32, %arg2: i32) -> (i32, i32) {
    %c0_i32 = arith.constant 0 : i32
    return %arg2, %arg1 : i32, i32
  }
  func.func @transform_2(%arg0: i32, %arg1: i32, %arg2: i32) -> (i32, i32) {
    %c0_i32 = arith.constant 0 : i32
    %c0_i32_0 = arith.constant 0 : i32
    return %c0_i32, %arg1 : i32, i32
  }
  func.func @transform_3(%arg0: i32, %arg1: i32, %arg2: i32) -> (i32, i32) {
    %c0_i32 = arith.constant 0 : i32
    return %arg0, %arg1 : i32, i32
  }
}

</mosaic_0001>

<llo_original>
// kernel: squeeze.3
$region0: #{squeeze.3}
  %s0 = inlined_call_operand.vmem [shape: f32[4,16], index: 0, kind: input, shape index: {}]
  %s1 = inlined_call_operand.vmem [shape: f32[4,4,4], index: 1, kind: output, shape index: {}]
  $region1: #{squeeze.3} parent=0
    #allocation0 [shape = 'u8[16384]{0}', space=vmem, size = 0x4000, scoped, tag = 'scoped mem for output reshape']
    #allocation1 [shape = 'u8[4096]{0}', space=vmem, size = 0x1000, scoped, tag = 'scoped mem for input reshape']
    %s3 = sshll.u32 1, 4
    %s4 = ssub.s32 %s3, 1
    %v5 = vld [vmem:[%s0] sm:%s4]
    %6 = vst [vmem:[#allocation1] sm:%s4] %v5
    %v7 = vld [vmem:[#allocation1] sm:$0xf]
    %vm8 = vcmask 31744
    %9 = vst.msk [vmem:[#allocation0] ss:$8 sm:$0xf] %vm8, %v7
    %v10 = vld [vmem:[#allocation1] sm:$0xf]
    %11 = vrot.lane.b32.xlu0 %v10, 124
    %v12 = vpop.permute.xlu0 %11
    %vm13 = vcmask 31744
    %s14 = scalar_lea.vmem [#allocation0], 1
    %15 = vst.msk [vmem:[%s14] ss:$8 sm:$0xf] %vm13, %v12
    %v16 = vld [vmem:[#allocation1] sm:$0xf]
    %17 = vrot.lane.b32.xlu0 %v16, 120
    %v18 = vpop.permute.xlu0 %17
    %vm19 = vcmask 31744
    %s20 = scalar_lea.vmem [#allocation0], 2
    %21 = vst.msk [vmem:[%s20] ss:$8 sm:$0xf] %vm19, %v18
    %v22 = vld [vmem:[#allocation1] sm:$0xf]
    %23 = vrot.lane.b32.xlu0 %v22, 116
    %v24 = vpop.permute.xlu0 %23
    %vm25 = vcmask 31744
    %s26 = scalar_lea.vmem [#allocation0], 3
    %27 = vst.msk [vmem:[%s26] ss:$8 sm:$0xf] %vm25, %v24
    %s29 = sshll.u32 1, 4
    %s30 = ssub.s32 %s29, 1
    %v32 = vld [vmem:[#allocation0] sm:%s30]
    %s33 = sshll.u32 1, 4
    %s34 = ssub.s32 %s33, 1
    %35 = vst [vmem:[%s1] sm:%s34] %v32
    %s36 = scalar_lea.vmem [#allocation0], 8
    %v37 = vld [vmem:[%s36] sm:%s30]
    %s38 = sshll.u32 1, 4
    %s39 = ssub.s32 %s38, 1
    %s40 = scalar_lea.vmem %s1, 4
    %41 = vst [vmem:[%s40] sm:%s39] %v37
    %s42 = scalar_lea.vmem [#allocation0], 16
    %v43 = vld [vmem:[%s42] sm:%s30]
    %s44 = sshll.u32 1, 4
    %s45 = ssub.s32 %s44, 1
    %s46 = smul.addr 4, 2
    %s47 = scalar_lea.vmem %s1, %s46
    %48 = vst [vmem:[%s47] sm:%s45] %v43
    %s49 = scalar_lea.vmem [#allocation0], 24
    %v50 = vld [vmem:[%s49] sm:%s30]
    %s51 = sshll.u32 1, 4
    %s52 = ssub.s32 %s51, 1
    %s53 = smul.addr 4, 3
    %s54 = scalar_lea.vmem %s1, %s53
    %55 = vst [vmem:[%s54] sm:%s52] %v50

// kernel: _lambda_.7
$region0: #{_lambda_.7}
  #allocation0 [shape = 'u32[]', space=smem, size = 0x4, offset = 0x4, fixed_abs, tag = 'smem constant byte address 0x4 - core index']
  #allocation1 [shape = 'u32[144,128]{1,0:T(1,128)}', space=vmem, size = 0x12000, scoped, tag = 'internal scratch']
  %s0 = inlined_call_operand.vmem [shape: f32[4,256,16], index: 0, kind: input, shape index: {}]
  %s1 = inlined_call_operand.vmem [shape: f32[4,1,16], index: 1, kind: output, shape index: {0}]
  %s2 = inlined_call_operand.vmem [shape: f32[4,1,16], index: 2, kind: output, shape index: {1}]
  %3 = xla_tuple %s1, %s2
  %s4 = sld [smem:[#allocation0]]
  $region49: #{_lambda_.7} parent=0
    _
  %s6 = ssub.s32 1, %s4
  %s7 = scalar_select 0, %s6, %s4
  loop: start=0, step=1, limit=6
  $region2: #{_lambda_.7} parent=0 // loop_pre_header
    _
  $region3: #{_lambda_.7} parent=0 // loop_header
    %s9 = sphi 0, %s13
    %p10 = scmp.ge.s32.totalorder %s9, 6
    %s16 = sphi 0, %s28
    %s17 = sphi 0, %s24
    %s18 = sphi 0, %s16
    %s19 = sphi 0, %s17
    %s20 = sphi 0, %s18
    %s21 = sphi 0, %s19
    %s33 = sphi 0, %s35
    %s36 = sphi 0, %s33
    %s37 = sphi 0, %s36
    %s53 = sphi 0, %s37
    %s59 = sphi 0, %s61
    %s62 = sphi 0, %s59
    %s63 = sphi 0, %s62
    %s79 = sphi 0, %s63
    %s85 = sphi 0, %s87
    %s88 = sphi 0, %s85
    %s89 = sphi 0, %s88
    %s105 = sphi 0, %s89
  $region4: #{_lambda_.7} parent=0 // loop_header_branch
    %12 = sbr.rel (%p10) target = $region8
  $region5: #{_lambda_.7} parent=0 // loop_body
    %s14 = ssub.s32 %s9, 1
    %s15 = ssub.s32 %s9, 2
    %s22 = sadd.s32 1, %s17
    %p23 = scmp.ge.s32.totalorder %s22, 1
    %s24 = scalar_select %p23, 0, %s22
    %s25 = sadd.s32 1, %s16
    %s26 = scalar_select %p23, %s25, %s16
    %p27 = scmp.ge.s32.totalorder %s26, 4
    %s28 = scalar_select %p27, 0, %s26
    %s29 = ssub.s32 %s16, %s28
    %s30 = ssub.s32 %s17, %s24
    %s31 = sor.u32 %s29, %s30
    %p32 = scmp.eq.s32.totalorder %s31, 0
    %s34 = sadd.s32 %s33, 1
    %s35 = scalar_select %p32, %s33, %s34
    %p38 = pneg %p32
    %p39 = scmp.eq.s32.totalorder %s9, 3
    %p40 = por %p38, %p39
    %p41 = scmp.ne.s32.totalorder %s33, %s36
    %p42 = scmp.eq.s32.totalorder %s9, 0
    %p43 = por %p41, %p42
    %p44 = scmp.ne.s32.totalorder %s33, %s36
    %p45 = scmp.eq.s32.totalorder %s14, 3
    %p46 = por %p44, %p45
    %p47 = scmp.ne.s32.totalorder %s36, %s37
    %p48 = scmp.eq.s32.totalorder %s14, 0
    %p49 = por %p47, %p48
    %p50 = scmp.ne.s32.totalorder %s36, %s37
    %p51 = scmp.eq.s32.totalorder %s15, 3
    %p52 = por %p50, %p51
    %p54 = scmp.ne.s32.totalorder %s37, %s53
    %p55 = scmp.eq.s32.totalorder %s15, 0
    %p56 = por %p54, %p55
    %s57 = ssub.s32 %s16, %s28
    %p58 = scmp.eq.s32.totalorder %s57, 0
    %s60 = sadd.s32 %s59, 1
    %s61 = scalar_select %p58, %s59, %s60
    %p64 = pneg %p58
    %p65 = scmp.eq.s32.totalorder %s9, 3
    %p66 = por %p64, %p65
    %p67 = scmp.ne.s32.totalorder %s59, %s62
    %p68 = scmp.eq.s32.totalorder %s9, 0
    %p69 = por %p67, %p68
    %p70 = scmp.ne.s32.totalorder %s59, %s62
    %p71 = scmp.eq.s32.totalorder %s14, 3
    %p72 = por %p70, %p71
    %p73 = scmp.ne.s32.totalorder %s62, %s63
    %p74 = scmp.eq.s32.totalorder %s14, 0
    %p75 = por %p73, %p74
    %p76 = scmp.ne.s32.totalorder %s62, %s63
    %p77 = scmp.eq.s32.totalorder %s15, 3
    %p78 = por %p76, %p77
    %p80 = scmp.ne.s32.totalorder %s63, %s79
    %p81 = scmp.eq.s32.totalorder %s15, 0
    %p82 = por %p80, %p81
    %s83 = ssub.s32 %s16, %s28
    %p84 = scmp.eq.s32.totalorder %s83, 0
    %s86 = sadd.s32 %s85, 1
    %s87 = scalar_select %p84, %s85, %s86
    %p90 = pneg %p84
    %p91 = scmp.eq.s32.totalorder %s9, 3
    %p92 = por %p90, %p91
    %p93 = scmp.ne.s32.totalorder %s85, %s88
    %p94 = scmp.eq.s32.totalorder %s9, 0
    %p95 = por %p93, %p94
    %p96 = scmp.ne.s32.totalorder %s85, %s88
    %p97 = scmp.eq.s32.totalorder %s14, 3
    %p98 = por %p96, %p97
    %p99 = scmp.ne.s32.totalorder %s88, %s89
    %p100 = scmp.eq.s32.totalorder %s14, 0
    %p101 = por %p99, %p100
    %p102 = scmp.ne.s32.totalorder %s88, %s89
    %p103 = scmp.eq.s32.totalorder %s15, 3
    %p104 = por %p102, %p103
    %p106 = scmp.ne.s32.totalorder %s89, %s105
    %p107 = scmp.eq.s32.totalorder %s15, 0
    %p108 = por %p106, %p107
    %p109 = scmp.le.s32.totalorder 1, %s9
    %p110 = scmp.lt.s32.totalorder %s9, 5
    %p111 = pnand %p109, %p110
    %p112 = pneg %p111
    // Predicated region
    $region9: #{_lambda_.7} parent=5 // pred_check
      _
    $region10: #{_lambda_.7} parent=5 // pred_check_branch
      %114 = sbr.rel (%p111) target = $region12
    $region11: #{_lambda_.7} parent=5 // pred_region
      %s115 = ssub.s32 %s9, 1
    $region12: #{_lambda_.7} parent=5 // pred_fallthru
      _
    %p116 = scmp.lt.s32.totalorder %s9, 4
    // Predicated region
    $region13: #{_lambda_.7} parent=5 // pred_check
      %p117 = pneg %p116
    $region14: #{_lambda_.7} parent=5 // pred_check_branch
      %119 = sbr.rel (%p117) target = $region16
    $region15: #{_lambda_.7} parent=5 // pred_region
      // Predicated region
      $region17: #{_lambda_.7} parent=15 // pred_check
        %p120 = pneg %p43
      $region18: #{_lambda_.7} parent=15 // pred_check_branch
        %122 = sbr.rel (%p120) target = $region20
      $region19: #{_lambda_.7} parent=15 // pred_region
        %s123 = smul.u32 32, %s17
        %p124 = scmp.lt.s32.totalorder %s16, 3
        %s125 = scalar_select %p124, %s16, 3
        %p126 = scmp.lt.s32.totalorder %s123, 31
        %s127 = scalar_select %p126, %s123, 31
        %s128 = smul.addr %s125, 32
        %s129 = sadd.s32 %s127, %s128
        %s130 = smul.addr %s129, 8
        %s131 = scalar_lea.vmem %s0, %s130
        %s132 = smul.u32 32, %s17
      $region20: #{_lambda_.7} parent=15 // pred_fallthru
        _
    $region16: #{_lambda_.7} parent=5 // pred_fallthru
      _
    %p133 = scmp.le.s32.totalorder 1, %s9
    %p134 = scmp.lt.s32.totalorder %s9, 5
    %p135 = pnand %p133, %p134
    %p136 = pneg %p135
    // Predicated region
    $region21: #{_lambda_.7} parent=5 // pred_check
      _
    $region22: #{_lambda_.7} parent=5 // pred_check_branch
      %138 = sbr.rel (%p135) target = $region24
    $region23: #{_lambda_.7} parent=5 // pred_region
      %s139 = ssub.s32 %s9, 1
      %s140 = smul.u32 32, %s19
      %p141 = scmp.lt.s32.totalorder %s18, 3
      %s142 = scalar_select %p141, %s18, 3
      %p143 = scmp.lt.s32.totalorder %s140, 31
      %s144 = scalar_select %p143, %s140, 31
      %s145 = smul.addr %s142, 32
      %s146 = sadd.s32 %s144, %s145
      %s147 = smul.addr %s146, 8
      %s148 = scalar_lea.vmem %s0, %s147
      %p149 = pneg %p49
      %p150 = pneg %p46
      %p151 = pneg %p75
      %p152 = pneg %p72
      %p153 = scmp.lt.s32.totalorder %s18, 3
      %s154 = scalar_select %p153, %s18, 3
      %s155 = scalar_lea.vmem %s1, %s154
      %p156 = pneg %p101
      %p157 = pneg %p98
      %p158 = scmp.lt.s32.totalorder %s18, 3
      %s159 = scalar_select %p158, %s18, 3
      %s160 = scalar_lea.vmem %s2, %s159
      %s161 = smul.u32 32, %s19
      %p162 = scmp.lt.s32.totalorder %s18, 3
      %s163 = scalar_select %p162, %s18, 3
      %p164 = scmp.lt.s32.totalorder %s161, 31
      %s165 = scalar_select %p164, %s161, 31
      %s166 = smul.addr %s163, 32
      %s167 = sadd.s32 %s165, %s166
      %s168 = smul.addr %s167, 8
      %s169 = scalar_lea.vmem %s0, %s168
      %s170 = smul.u32 32, %s19
      %p171 = scmp.lt.s32.totalorder %s18, 3
      %s172 = scalar_select %p171, %s18, 3
      %s173 = scalar_lea.vmem %s1, %s172
      %p174 = scmp.lt.s32.totalorder %s18, 3
      %s175 = scalar_select %p174, %s18, 3
      %s176 = scalar_lea.vmem %s2, %s175
      %p177 = scmp.eq.s32.totalorder %s19, 0
      // Predicated region
      $region25: #{_lambda_.7} parent=23 // pred_check
        %p178 = pneg %p177
      $region26: #{_lambda_.7} parent=23 // pred_check_branch
        %180 = sbr.rel (%p178) target = $region28
      $region27: #{_lambda_.7} parent=23 // pred_region
        %vm181 = vcmask 122880
        %182 = vst.msk [vmem:[%s173] sm:$0x1] %vm181, 0.0
        %183 = vst.msk [vmem:[%s176] sm:$0x1] %vm181, 0.0
      $region28: #{_lambda_.7} parent=23 // pred_fallthru
        _
      %v184 = vld [vmem:[%s169] sm:$0xff]
      %v185 = vld [vmem:[%s169 + $0x8] sm:$0xff]
      %v186 = vld [vmem:[%s169 + $0x10] sm:$0xff]
      %v187 = vld [vmem:[%s169 + $0x18] sm:$0xff]
      %v188 = vld [vmem:[%s169 + $0x20] sm:$0xff]
      %v189 = vld [vmem:[%s169 + $0x28] sm:$0xff]
      %v190 = vld [vmem:[%s169 + $0x30] sm:$0xff]
      %v191 = vld [vmem:[%s169 + $0x38] sm:$0xff]
      %v192 = vld [vmem:[%s169 + $0x40] sm:$0xff]
      %v193 = vld [vmem:[%s169 + $0x48] sm:$0xff]
      %v194 = vld [vmem:[%s169 + $0x50] sm:$0xff]
      %v195 = vld [vmem:[%s169 + $0x58] sm:$0xff]
      %v196 = vld [vmem:[%s169 + $0x60] sm:$0xff]
      %v197 = vld [vmem:[%s169 + $0x68] sm:$0xff]
      %v198 = vld [vmem:[%s169 + $0x70] sm:$0xff]
      %v199 = vld [vmem:[%s169 + $0x78] sm:$0xff]
      %v200 = vld [vmem:[%s169 + $0x80] sm:$0xff]
      %v201 = vld [vmem:[%s169 + $0x88] sm:$0xff]
      %v202 = vld [vmem:[%s169 + $0x90] sm:$0xff]
      %v203 = vld [vmem:[%s169 + $0x98] sm:$0xff]
      %v204 = vld [vmem:[%s169 + $0xa0] sm:$0xff]
      %v205 = vld [vmem:[%s169 + $0xa8] sm:$0xff]
      %v206 = vld [vmem:[%s169 + $0xb0] sm:$0xff]
      %v207 = vld [vmem:[%s169 + $0xb8] sm:$0xff]
      %v208 = vld [vmem:[%s169 + $0xc0] sm:$0xff]
      %v209 = vld [vmem:[%s169 + $0xc8] sm:$0xff]
      %v210 = vld [vmem:[%s169 + $0xd0] sm:$0xff]
      %v211 = vld [vmem:[%s169 + $0xd8] sm:$0xff]
      %v212 = vld [vmem:[%s169 + $0xe0] sm:$0xff]
      %v213 = vld [vmem:[%s169 + $0xe8] sm:$0xff]
      %v214 = vld [vmem:[%s169 + $0xf0] sm:$0xff]
      %v215 = vld [vmem:[%s169 + $0xf8] sm:$0xff]
      %v216 = vld [vmem:[%s173] sm:$0x1]
      %vm217 = vcmask 130048
      %v218 = vsel %vm217, %v184, 0.0
      %v219 = vsel %vm217, %v185, 0.0
      %v220 = vadd.f32 %v218, %v219
      %v221 = vsel %vm217, %v186, 0.0
      %v222 = vadd.f32 %v220, %v221
      %v223 = vsel %vm217, %v187, 0.0
      %v224 = vadd.f32 %v222, %v223
      %v225 = vsel %vm217, %v188, 0.0
      %v226 = vadd.f32 %v224, %v225
      %v227 = vsel %vm217, %v189, 0.0
      %v228 = vadd.f32 %v226, %v227
      %v229 = vsel %vm217, %v190, 0.0
      %v230 = vadd.f32 %v228, %v229
      %v231 = vsel %vm217, %v191, 0.0
      %v232 = vadd.f32 %v230, %v231
      %v233 = vsel %vm217, %v192, 0.0
      %v234 = vadd.f32 %v232, %v233
      %v235 = vsel %vm217, %v193, 0.0
      %v236 = vadd.f32 %v234, %v235
      %v237 = vsel %vm217, %v194, 0.0
      %v238 = vadd.f32 %v236, %v237
      %v239 = vsel %vm217, %v195, 0.0
      %v240 = vadd.f32 %v238, %v239
      %v241 = vsel %vm217, %v196, 0.0
      %v242 = vadd.f32 %v240, %v241
      %v243 = vsel %vm217, %v197, 0.0
      %v244 = vadd.f32 %v242, %v243
      %v245 = vsel %vm217, %v198, 0.0
      %v246 = vadd.f32 %v244, %v245
      %v247 = vsel %vm217, %v199, 0.0
      %v248 = vadd.f32 %v246, %v247
      %v249 = vsel %vm217, %v200, 0.0
      %v250 = vadd.f32 %v248, %v249
      %v251 = vsel %vm217, %v201, 0.0
      %v252 = vadd.f32 %v250, %v251
      %v253 = vsel %vm217, %v202, 0.0
      %v254 = vadd.f32 %v252, %v253
      %v255 = vsel %vm217, %v203, 0.0
      %v256 = vadd.f32 %v254, %v255
      %v257 = vsel %vm217, %v204, 0.0
      %v258 = vadd.f32 %v256, %v257
      %v259 = vsel %vm217, %v205, 0.0
      %v260 = vadd.f32 %v258, %v259
      %v261 = vsel %vm217, %v206, 0.0
      %v262 = vadd.f32 %v260, %v261
      %v263 = vsel %vm217, %v207, 0.0
      %v264 = vadd.f32 %v262, %v263
      %v265 = vsel %vm217, %v208, 0.0
      %v266 = vadd.f32 %v264, %v265
      %v267 = vsel %vm217, %v209, 0.0
      %v268 = vadd.f32 %v266, %v267
      %v269 = vsel %vm217, %v210, 0.0
      %v270 = vadd.f32 %v268, %v269
      %v271 = vsel %vm217, %v211, 0.0
      %v272 = vadd.f32 %v270, %v271
      %v273 = vsel %vm217, %v212, 0.0
      %v274 = vadd.f32 %v272, %v273
      %v275 = vsel %vm217, %v213, 0.0
      %v276 = vadd.f32 %v274, %v275
      %v277 = vsel %vm217, %v214, 0.0
      %v278 = vadd.f32 %v276, %v277
      %v279 = vsel %vm217, %v215, 0.0
      %v280 = vadd.f32 %v278, %v279
      %v281 = vrot.slane %v280, 4
      %v282 = vadd.f32 %v280, %v281
      %v283 = vrot.slane %v282, 2
      %v284 = vadd.f32 %v282, %v283
      %v285 = vrot.slane %v284, 1
      %v286 = vadd.f32 %v284, %v285
      %v287 = vadd.f32 %v216, %v286
      %vm288 = vcmask 122880
      %289 = vst.msk [vmem:[%s173] sm:$0x1] %vm288, %v287
      %v290 = vld [vmem:[%s176] sm:$0x1]
      %v291 = vmul.f32 %v184, %v184
      %v292 = vmul.f32 %v185, %v185
      %v293 = vmul.f32 %v186, %v186
      %v294 = vmul.f32 %v187, %v187
      %v295 = vmul.f32 %v188, %v188
      %v296 = vmul.f32 %v189, %v189
      %v297 = vmul.f32 %v190, %v190
      %v298 = vmul.f32 %v191, %v191
      %v299 = vmul.f32 %v192, %v192
      %v300 = vmul.f32 %v193, %v193
      %v301 = vmul.f32 %v194, %v194
      %v302 = vmul.f32 %v195, %v195
      %v303 = vmul.f32 %v196, %v196
      %v304 = vmul.f32 %v197, %v197
      %v305 = vmul.f32 %v198, %v198
      %v306 = vmul.f32 %v199, %v199
      %v307 = vmul.f32 %v200, %v200
      %v308 = vmul.f32 %v201, %v201
      %v309 = vmul.f32 %v202, %v202
      %v310 = vmul.f32 %v203, %v203
      %v311 = vmul.f32 %v204, %v204
      %v312 = vmul.f32 %v205, %v205
      %v313 = vmul.f32 %v206, %v206
      %v314 = vmul.f32 %v207, %v207
      %v315 = vmul.f32 %v208, %v208
      %v316 = vmul.f32 %v209, %v209
      %v317 = vmul.f32 %v210, %v210
      %v318 = vmul.f32 %v211, %v211
      %v319 = vmul.f32 %v212, %v212
      %v320 = vmul.f32 %v213, %v213
      %v321 = vmul.f32 %v214, %v214
      %v322 = vmul.f32 %v215, %v215
      %v323 = vsel %vm217, %v291, 0.0
      %v324 = vsel %vm217, %v292, 0.0
      %v325 = vadd.f32 %v323, %v324
      %v326 = vsel %vm217, %v293, 0.0
      %v327 = vadd.f32 %v325, %v326
      %v328 = vsel %vm217, %v294, 0.0
      %v329 = vadd.f32 %v327, %v328
      %v330 = vsel %vm217, %v295, 0.0
      %v331 = vadd.f32 %v329, %v330
      %v332 = vsel %vm217, %v296, 0.0
      %v333 = vadd.f32 %v331, %v332
      %v334 = vsel %vm217, %v297, 0.0
      %v335 = vadd.f32 %v333, %v334
      %v336 = vsel %vm217, %v298, 0.0
      %v337 = vadd.f32 %v335, %v336
      %v338 = vsel %vm217, %v299, 0.0
      %v339 = vadd.f32 %v337, %v338
      %v340 = vsel %vm217, %v300, 0.0
      %v341 = vadd.f32 %v339, %v340
      %v342 = vsel %vm217, %v301, 0.0
      %v343 = vadd.f32 %v341, %v342
      %v344 = vsel %vm217, %v302, 0.0
      %v345 = vadd.f32 %v343, %v344
      %v346 = vsel %vm217, %v303, 0.0
      %v347 = vadd.f32 %v345, %v346
      %v348 = vsel %vm217, %v304, 0.0
      %v349 = vadd.f32 %v347, %v348
      %v350 = vsel %vm217, %v305, 0.0
      %v351 = vadd.f32 %v349, %v350
      %v352 = vsel %vm217, %v306, 0.0
      %v353 = vadd.f32 %v351, %v352
      %v354 = vsel %vm217, %v307, 0.0
      %v355 = vadd.f32 %v353, %v354
      %v356 = vsel %vm217, %v308, 0.0
      %v357 = vadd.f32 %v355, %v356
      %v358 = vsel %vm217, %v309, 0.0
      %v359 = vadd.f32 %v357, %v358
      %v360 = vsel %vm217, %v310, 0.0
      %v361 = vadd.f32 %v359, %v360
      %v362 = vsel %vm217, %v311, 0.0
      %v363 = vadd.f32 %v361, %v362
      %v364 = vsel %vm217, %v312, 0.0
      %v365 = vadd.f32 %v363, %v364
      %v366 = vsel %vm217, %v313, 0.0
      %v367 = vadd.f32 %v365, %v366
      %v368 = vsel %vm217, %v314, 0.0
      %v369 = vadd.f32 %v367, %v368
      %v370 = vsel %vm217, %v315, 0.0
      %v371 = vadd.f32 %v369, %v370
      %v372 = vsel %vm217, %v316, 0.0
      %v373 = vadd.f32 %v371, %v372
      %v374 = vsel %vm217, %v317, 0.0
      %v375 = vadd.f32 %v373, %v374
      %v376 = vsel %vm217, %v318, 0.0
      %v377 = vadd.f32 %v375, %v376
      %v378 = vsel %vm217, %v319, 0.0
      %v379 = vadd.f32 %v377, %v378
      %v380 = vsel %vm217, %v320, 0.0
      %v381 = vadd.f32 %v379, %v380
      %v382 = vsel %vm217, %v321, 0.0
      %v383 = vadd.f32 %v381, %v382
      %v384 = vsel %vm217, %v322, 0.0
      %v385 = vadd.f32 %v383, %v384
      %v386 = vrot.slane %v385, 4
      %v387 = vadd.f32 %v385, %v386
      %v388 = vrot.slane %v387, 2
      %v389 = vadd.f32 %v387, %v388
      %v390 = vrot.slane %v389, 1
      %v391 = vadd.f32 %v389, %v390
      %v392 = vadd.f32 %v290, %v391
      %393 = vst.msk [vmem:[%s176] sm:$0x1] %vm288, %v392
      %p394 = scmp.lt.s32.totalorder %s18, 3
      %s395 = scalar_select %p394, %s18, 3
      %s396 = scalar_lea.vmem %s1, %s395
      %p397 = scmp.lt.s32.totalorder %s18, 3
      %s398 = scalar_select %p397, %s18, 3
      %s399 = scalar_lea.vmem %s2, %s398
      // Predicated region
      $region29: #{_lambda_.7} parent=23 // pred_check
        %p400 = pneg %p72
      $region30: #{_lambda_.7} parent=23 // pred_check_branch
        %402 = sbr.rel (%p400) target = $region32
      $region31: #{_lambda_.7} parent=23 // pred_region
        _
      $region32: #{_lambda_.7} parent=23 // pred_fallthru
        _
      // Predicated region
      $region33: #{_lambda_.7} parent=23 // pred_check
        %p403 = pneg %p98
      $region34: #{_lambda_.7} parent=23 // pred_check_branch
        %405 = sbr.rel (%p403) target = $region36
      $region35: #{_lambda_.7} parent=23 // pred_region
        _
      $region36: #{_lambda_.7} parent=23 // pred_fallthru
        _
    $region24: #{_lambda_.7} parent=5 // pred_fallthru
      _
    %p406 = scmp.le.s32.totalorder 2, %s9
    // Predicated region
    $region37: #{_lambda_.7} parent=5 // pred_check
      %p407 = pneg %p406
    $region38: #{_lambda_.7} parent=5 // pred_check_branch
      %409 = sbr.rel (%p407) target = $region40
    $region39: #{_lambda_.7} parent=5 // pred_region
      %s410 = ssub.s32 %s9, 2
      // Predicated region
      $region41: #{_lambda_.7} parent=39 // pred_check
        %p411 = pneg %p78
      $region42: #{_lambda_.7} parent=39 // pred_check_branch
        %413 = sbr.rel (%p411) target = $region44
      $region43: #{_lambda_.7} parent=39 // pred_region
        %p414 = scmp.lt.s32.totalorder %s20, 3
        %s415 = scalar_select %p414, %s20, 3
        %s416 = scalar_lea.vmem %s1, %s415
      $region44: #{_lambda_.7} parent=39 // pred_fallthru
        _
      // Predicated region
      $region45: #{_lambda_.7} parent=39 // pred_check
        %p417 = pneg %p104
      $region46: #{_lambda_.7} parent=39 // pred_check_branch
        %419 = sbr.rel (%p417) target = $region48
      $region47: #{_lambda_.7} parent=39 // pred_region
        %p420 = scmp.lt.s32.totalorder %s20, 3
        %s421 = scalar_select %p420, %s20, 3
        %s422 = scalar_lea.vmem %s2, %s421
      $region48: #{_lambda_.7} parent=39 // pred_fallthru
        _
    $region40: #{_lambda_.7} parent=5 // pred_fallthru
      _
  $region6: #{_lambda_.7} parent=0 // loop_footer
    %s13 = sadd.s32 1, %s9
  $region7: #{_lambda_.7} parent=0 // loop_footer_branch
    %8 = sbr.rel target = $region3
  $region8: #{_lambda_.7} parent=0 // loop_exit
    _

// kernel: _lambda_.6
$region0: #{_lambda_.6}
  #allocation0 [shape = 'u32[]', space=smem, size = 0x4, offset = 0x4, fixed_abs, tag = 'smem constant byte address 0x4 - core index']
  #allocation1 [shape = 'u32[144,128]{1,0:T(1,128)}', space=vmem, size = 0x12000, scoped, tag = 'internal scratch']
  #allocation2 [shape = 'f32[4,32]{1,0:T(4,128)}', space=vmem, size = 0x800, scoped, tag = 'scratch operand']
  %s0 = inlined_call_operand.vmem [shape: bf16[4,32], index: 0, kind: input, shape index: {}]
  %s1 = inlined_call_operand.vmem [shape: bf16[32,32], index: 1, kind: input, shape index: {}]
  %s2 = inlined_call_operand.vmem [shape: f32[1,32], index: 2, kind: input, shape index: {}]
  %s3 = inlined_call_operand.vmem [shape: f32[4,32], index: 3, kind: output, shape index: {}]
  %s4 = sld [smem:[#allocation0]]
  $region30: #{_lambda_.6} parent=0
    _
  %s6 = ssub.s32 1, %s4
  %s7 = scalar_select 0, %s6, %s4
  // Predicated region
  $region2: #{_lambda_.6} parent=0 // pred_check
    _
  $region3: #{_lambda_.6} parent=0 // pred_check_branch
    %9 = sbr.rel (0) target = $region5
  $region4: #{_lambda_.6} parent=0 // pred_region
    _
  $region5: #{_lambda_.6} parent=0 // pred_fallthru
    _
  // Predicated region
  $region6: #{_lambda_.6} parent=0 // pred_check
    _
  $region7: #{_lambda_.6} parent=0 // pred_check_branch
    %11 = sbr.rel (0) target = $region9
  $region8: #{_lambda_.6} parent=0 // pred_region
    _
  $region9: #{_lambda_.6} parent=0 // pred_fallthru
    _
  // Predicated region
  $region10: #{_lambda_.6} parent=0 // pred_check
    _
  $region11: #{_lambda_.6} parent=0 // pred_check_branch
    %13 = sbr.rel (0) target = $region13
  $region12: #{_lambda_.6} parent=0 // pred_region
    _
  $region13: #{_lambda_.6} parent=0 // pred_fallthru
    _
  %p15 = scmp.eq.s32.totalorder 0, 0
  // Predicated region
  $region14: #{_lambda_.6} parent=0 // pred_check
    %p16 = pneg %p15
  $region15: #{_lambda_.6} parent=0 // pred_check_branch
    %18 = sbr.rel (%p16) target = $region17
  $region16: #{_lambda_.6} parent=0 // pred_region
    %vm19 = vcmask 257024
    %20 = vst.msk [vmem:[#allocation2] sm:$0xf] %vm19, 0.0
  $region17: #{_lambda_.6} parent=0 // pred_fallthru
    _
  %v21 = vld [vmem:[#allocation2] sm:$0xf]
  %v22 = vld [vmem:[%s0] sm:$0x3]
  %v23 = vld [vmem:[%s1] sm:$0xf]
  %v24 = vld [vmem:[%s1 + $0x4] sm:$0xf]
  %v25 = vld [vmem:[%s1 + $0x8] sm:$0xf]
  %v26 = vld [vmem:[%s1 + $0xc] sm:$0xf]
  %v31 = vunpack.c.l.b16 %v23
  %v32 = vunpack.c.l.b16 %v24
  %v33 = vunpack.c.l.b16 %v25
  %v34 = vunpack.c.l.b16 %v26
  %v35 = vpack.c.b16 %v32, %v31
  %v36 = vpack.c.b16 %v34, %v33
  %vm39 = vcmask 261120
  %v41 = vsel %vm39, %v22, 0
  %43 = vmatprep.subr.bf16.mxu0 0
  %44 = vmatpush1.bf16.msra.mxu0 0
  %45 = vmatprep.subr.bf16.mxu0 0
  %46 = vmatpush1.bf16.msra.mxu0 0
  %47 = vmatprep.subr.bf16.mxu0 0
  %48 = vmatpush1.bf16.msra.mxu0 0
  %49 = vmatprep.subr.bf16.mxu0 0
  %50 = vmatpush1.bf16.msra.mxu0 0
  %51 = vmatprep.subr.bf16.mxu0 0
  %52 = vmatpush1.bf16.msra.mxu0 0
  %53 = vmatprep.subr.bf16.mxu0 0
  %54 = vmatpush1.bf16.msra.mxu0 0
  %55 = vmatprep.subr.bf16.mxu0 0
  %56 = vmatpush1.bf16.msra.mxu0 %v36
  %57 = vmatprep.subr.bf16.mxu0 0
  %58 = vmatpush1.bf16.msra.mxu0 %v35
  %59 = vmatprep.subr.bf16.mxu0 0
  %60 = vmatpush2.bf16.msra.mxu0 0
  %61 = vmatprep.subr.bf16.mxu0 0
  %62 = vmatpush2.bf16.msra.mxu0 0
  %63 = vmatprep.subr.bf16.mxu0 0
  %64 = vmatpush2.bf16.msra.mxu0 0
  %65 = vmatprep.subr.bf16.mxu0 0
  %66 = vmatpush2.bf16.msra.mxu0 0
  %67 = vmatprep.subr.bf16.mxu0 0
  %68 = vmatpush2.bf16.msra.mxu0 0
  %69 = vmatprep.subr.bf16.mxu0 0
  %70 = vmatpush2.bf16.msra.mxu0 0
  %71 = vmatprep.subr.bf16.mxu0 0
  %72 = vmatpush2.bf16.msra.mxu0 0
  %73 = vmatprep.subr.bf16.mxu0 0
  %74 = vmatpush2.bf16.msra.mxu0 0
  %75 = vmatprep.mubr.bf16.mxu0 0
  %76 = vmatmul.mubr.bf16.gmra.mxu0 %v41
  %v77 = vpop.f32.mrf.mxu0
  %v78 = vadd.f32 0.0, %v77
  %v79 = vpop.f32.mrf.mxu0
  %v80 = vpop.f32.mrf.mxu0
  %v81 = vpop.f32.mrf.mxu0
  %82 = vdwg.mxu0
  %v83 = vadd.f32 %v21, %v78
  %vm84 = vcmask 257024
  %85 = vst.msk [vmem:[#allocation2] sm:$0xf] %vm84, %v83
  // Predicated region
  $region18: #{_lambda_.6} parent=0 // pred_check
    %p86 = pneg %p15
  $region19: #{_lambda_.6} parent=0 // pred_check_branch
    %88 = sbr.rel (%p86) target = $region21
  $region20: #{_lambda_.6} parent=0 // pred_region
    %v89 = vld [vmem:[#allocation2] sm:$0xf]
    %v90 = vld [vmem:[%s2] sm:$0x1]
    %v92 = vlaneseq
    %v93 = vshrl.u32 %v92, 7
    %v94 = vsub.s32 0, %v93
    %v95 = vrot.slane %v90, %v94
    %v97 = vadd.f32 %v89, %v95
    %98 = vst.msk [vmem:[%s3] sm:$0xf] %vm84, %v97
  $region21: #{_lambda_.6} parent=0 // pred_fallthru
    _
  // Predicated region
  $region22: #{_lambda_.6} parent=0 // pred_check
    _
  $region23: #{_lambda_.6} parent=0 // pred_check_branch
    %100 = sbr.rel (0) target = $region25
  $region24: #{_lambda_.6} parent=0 // pred_region
    _
  $region25: #{_lambda_.6} parent=0 // pred_fallthru
    _
  // Predicated region
  $region26: #{_lambda_.6} parent=0 // pred_check
    _
  $region27: #{_lambda_.6} parent=0 // pred_check_branch
    %102 = sbr.rel (0) target = $region29
  $region28: #{_lambda_.6} parent=0 // pred_region
    _
  $region29: #{_lambda_.6} parent=0 // pred_fallthru
    _

// kernel: _lambda_.8
$region0: #{_lambda_.8}
  #allocation0 [shape = 'u32[]', space=smem, size = 0x4, offset = 0x4, fixed_abs, tag = 'smem constant byte address 0x4 - core index']
  #allocation1 [shape = 'u32[144,128]{1,0:T(1,128)}', space=vmem, size = 0x12000, scoped, tag = 'internal scratch']
  %s0 = inlined_call_operand.vmem [shape: f32[4,256,16], index: 0, kind: input, shape index: {}]
  %s1 = inlined_call_operand.vmem [shape: f32[4,1,16], index: 1, kind: input, shape index: {}]
  %s2 = inlined_call_operand.vmem [shape: f32[4,1,16], index: 2, kind: input, shape index: {}]
  %s3 = inlined_call_operand.vmem [shape: bf16[4,256,16], index: 3, kind: output, shape index: {}]
  %s4 = sld [smem:[#allocation0]]
  $region45: #{_lambda_.8} parent=0
    _
  %s6 = ssub.s32 1, %s4
  %s7 = scalar_select 0, %s6, %s4
  loop: start=0, step=1, limit=6
  $region2: #{_lambda_.8} parent=0 // loop_pre_header
    _
  $region3: #{_lambda_.8} parent=0 // loop_header
    %s9 = sphi 0, %s13
    %p10 = scmp.ge.s32.totalorder %s9, 6
    %s16 = sphi 0, %s28
    %s17 = sphi 0, %s24
    %s18 = sphi 0, %s16
    %s19 = sphi 0, %s17
    %s20 = sphi 0, %s18
    %s21 = sphi 0, %s19
    %s33 = sphi 0, %s35
    %s36 = sphi 0, %s33
    %s37 = sphi 0, %s36
    %s53 = sphi 0, %s37
    %s59 = sphi 0, %s61
    %s62 = sphi 0, %s59
    %s63 = sphi 0, %s62
    %s79 = sphi 0, %s63
    %s85 = sphi 0, %s87
    %s88 = sphi 0, %s85
    %s89 = sphi 0, %s88
    %s105 = sphi 0, %s89
    %s113 = sphi 0, %s115
    %s116 = sphi 0, %s113
    %s117 = sphi 0, %s116
    %s133 = sphi 0, %s117
  $region4: #{_lambda_.8} parent=0 // loop_header_branch
    %12 = sbr.rel (%p10) target = $region8
  $region5: #{_lambda_.8} parent=0 // loop_body
    %s14 = ssub.s32 %s9, 1
    %s15 = ssub.s32 %s9, 2
    %s22 = sadd.s32 1, %s17
    %p23 = scmp.ge.s32.totalorder %s22, 1
    %s24 = scalar_select %p23, 0, %s22
    %s25 = sadd.s32 1, %s16
    %s26 = scalar_select %p23, %s25, %s16
    %p27 = scmp.ge.s32.totalorder %s26, 4
    %s28 = scalar_select %p27, 0, %s26
    %s29 = ssub.s32 %s16, %s28
    %s30 = ssub.s32 %s17, %s24
    %s31 = sor.u32 %s29, %s30
    %p32 = scmp.eq.s32.totalorder %s31, 0
    %s34 = sadd.s32 %s33, 1
    %s35 = scalar_select %p32, %s33, %s34
    %p38 = pneg %p32
    %p39 = scmp.eq.s32.totalorder %s9, 3
    %p40 = por %p38, %p39
    %p41 = scmp.ne.s32.totalorder %s33, %s36
    %p42 = scmp.eq.s32.totalorder %s9, 0
    %p43 = por %p41, %p42
    %p44 = scmp.ne.s32.totalorder %s33, %s36
    %p45 = scmp.eq.s32.totalorder %s14, 3
    %p46 = por %p44, %p45
    %p47 = scmp.ne.s32.totalorder %s36, %s37
    %p48 = scmp.eq.s32.totalorder %s14, 0
    %p49 = por %p47, %p48
    %p50 = scmp.ne.s32.totalorder %s36, %s37
    %p51 = scmp.eq.s32.totalorder %s15, 3
    %p52 = por %p50, %p51
    %p54 = scmp.ne.s32.totalorder %s37, %s53
    %p55 = scmp.eq.s32.totalorder %s15, 0
    %p56 = por %p54, %p55
    %s57 = ssub.s32 %s16, %s28
    %p58 = scmp.eq.s32.totalorder %s57, 0
    %s60 = sadd.s32 %s59, 1
    %s61 = scalar_select %p58, %s59, %s60
    %p64 = pneg %p58
    %p65 = scmp.eq.s32.totalorder %s9, 3
    %p66 = por %p64, %p65
    %p67 = scmp.ne.s32.totalorder %s59, %s62
    %p68 = scmp.eq.s32.totalorder %s9, 0
    %p69 = por %p67, %p68
    %p70 = scmp.ne.s32.totalorder %s59, %s62
    %p71 = scmp.eq.s32.totalorder %s14, 3
    %p72 = por %p70, %p71
    %p73 = scmp.ne.s32.totalorder %s62, %s63
    %p74 = scmp.eq.s32.totalorder %s14, 0
    %p75 = por %p73, %p74
    %p76 = scmp.ne.s32.totalorder %s62, %s63
    %p77 = scmp.eq.s32.totalorder %s15, 3
    %p78 = por %p76, %p77
    %p80 = scmp.ne.s32.totalorder %s63, %s79
    %p81 = scmp.eq.s32.totalorder %s15, 0
    %p82 = por %p80, %p81
    %s83 = ssub.s32 %s16, %s28
    %p84 = scmp.eq.s32.totalorder %s83, 0
    %s86 = sadd.s32 %s85, 1
    %s87 = scalar_select %p84, %s85, %s86
    %p90 = pneg %p84
    %p91 = scmp.eq.s32.totalorder %s9, 3
    %p92 = por %p90, %p91
    %p93 = scmp.ne.s32.totalorder %s85, %s88
    %p94 = scmp.eq.s32.totalorder %s9, 0
    %p95 = por %p93, %p94
    %p96 = scmp.ne.s32.totalorder %s85, %s88
    %p97 = scmp.eq.s32.totalorder %s14, 3
    %p98 = por %p96, %p97
    %p99 = scmp.ne.s32.totalorder %s88, %s89
    %p100 = scmp.eq.s32.totalorder %s14, 0
    %p101 = por %p99, %p100
    %p102 = scmp.ne.s32.totalorder %s88, %s89
    %p103 = scmp.eq.s32.totalorder %s15, 3
    %p104 = por %p102, %p103
    %p106 = scmp.ne.s32.totalorder %s89, %s105
    %p107 = scmp.eq.s32.totalorder %s15, 0
    %p108 = por %p106, %p107
    %s109 = ssub.s32 %s16, %s28
    %s110 = ssub.s32 %s17, %s24
    %s111 = sor.u32 %s109, %s110
    %p112 = scmp.eq.s32.totalorder %s111, 0
    %s114 = sadd.s32 %s113, 1
    %s115 = scalar_select %p112, %s113, %s114
    %p118 = pneg %p112
    %p119 = scmp.eq.s32.totalorder %s9, 3
    %p120 = por %p118, %p119
    %p121 = scmp.ne.s32.totalorder %s113, %s116
    %p122 = scmp.eq.s32.totalorder %s9, 0
    %p123 = por %p121, %p122
    %p124 = scmp.ne.s32.totalorder %s113, %s116
    %p125 = scmp.eq.s32.totalorder %s14, 3
    %p126 = por %p124, %p125
    %p127 = scmp.ne.s32.totalorder %s116, %s117
    %p128 = scmp.eq.s32.totalorder %s14, 0
    %p129 = por %p127, %p128
    %p130 = scmp.ne.s32.totalorder %s116, %s117
    %p131 = scmp.eq.s32.totalorder %s15, 3
    %p132 = por %p130, %p131
    %p134 = scmp.ne.s32.totalorder %s117, %s133
    %p135 = scmp.eq.s32.totalorder %s15, 0
    %p136 = por %p134, %p135
    %p137 = scmp.le.s32.totalorder 1, %s9
    %p138 = scmp.lt.s32.totalorder %s9, 5
    %p139 = pnand %p137, %p138
    %p140 = pneg %p139
    // Predicated region
    $region9: #{_lambda_.8} parent=5 // pred_check
      _
    $region10: #{_lambda_.8} parent=5 // pred_check_branch
      %142 = sbr.rel (%p139) target = $region12
    $region11: #{_lambda_.8} parent=5 // pred_region
      %s143 = ssub.s32 %s9, 1
    $region12: #{_lambda_.8} parent=5 // pred_fallthru
      _
    %p144 = scmp.lt.s32.totalorder %s9, 4
    // Predicated region
    $region13: #{_lambda_.8} parent=5 // pred_check
      %p145 = pneg %p144
    $region14: #{_lambda_.8} parent=5 // pred_check_branch
      %147 = sbr.rel (%p145) target = $region16
    $region15: #{_lambda_.8} parent=5 // pred_region
      // Predicated region
      $region17: #{_lambda_.8} parent=15 // pred_check
        %p148 = pneg %p43
      $region18: #{_lambda_.8} parent=15 // pred_check_branch
        %150 = sbr.rel (%p148) target = $region20
      $region19: #{_lambda_.8} parent=15 // pred_region
        %s151 = smul.u32 32, %s17
        %p152 = scmp.lt.s32.totalorder %s16, 3
        %s153 = scalar_select %p152, %s16, 3
        %p154 = scmp.lt.s32.totalorder %s151, 31
        %s155 = scalar_select %p154, %s151, 31
        %s156 = smul.addr %s153, 32
        %s157 = sadd.s32 %s155, %s156
        %s158 = smul.addr %s157, 8
        %s159 = scalar_lea.vmem %s0, %s158
        %s160 = smul.u32 32, %s17
      $region20: #{_lambda_.8} parent=15 // pred_fallthru
        _
      // Predicated region
      $region21: #{_lambda_.8} parent=15 // pred_check
        %p161 = pneg %p69
      $region22: #{_lambda_.8} parent=15 // pred_check_branch
        %163 = sbr.rel (%p161) target = $region24
      $region23: #{_lambda_.8} parent=15 // pred_region
        %p164 = scmp.lt.s32.totalorder %s16, 3
        %s165 = scalar_select %p164, %s16, 3
        %s166 = scalar_lea.vmem %s1, %s165
      $region24: #{_lambda_.8} parent=15 // pred_fallthru
        _
      // Predicated region
      $region25: #{_lambda_.8} parent=15 // pred_check
        %p167 = pneg %p95
      $region26: #{_lambda_.8} parent=15 // pred_check_branch
        %169 = sbr.rel (%p167) target = $region28
      $region27: #{_lambda_.8} parent=15 // pred_region
        %p170 = scmp.lt.s32.totalorder %s16, 3
        %s171 = scalar_select %p170, %s16, 3
        %s172 = scalar_lea.vmem %s2, %s171
      $region28: #{_lambda_.8} parent=15 // pred_fallthru
        _
    $region16: #{_lambda_.8} parent=5 // pred_fallthru
      _
    %p173 = scmp.le.s32.totalorder 1, %s9
    %p174 = scmp.lt.s32.totalorder %s9, 5
    %p175 = pnand %p173, %p174
    %p176 = pneg %p175
    // Predicated region
    $region29: #{_lambda_.8} parent=5 // pred_check
      _
    $region30: #{_lambda_.8} parent=5 // pred_check_branch
      %178 = sbr.rel (%p175) target = $region32
    $region31: #{_lambda_.8} parent=5 // pred_region
      %s179 = ssub.s32 %s9, 1
      %s180 = smul.u32 32, %s19
      %p181 = scmp.lt.s32.totalorder %s18, 3
      %s182 = scalar_select %p181, %s18, 3
      %p183 = scmp.lt.s32.totalorder %s180, 31
      %s184 = scalar_select %p183, %s180, 31
      %s185 = smul.addr %s182, 32
      %s186 = sadd.s32 %s184, %s185
      %s187 = smul.addr %s186, 8
      %s188 = scalar_lea.vmem %s0, %s187
      %p189 = pneg %p49
      %p190 = pneg %p46
      %p191 = scmp.lt.s32.totalorder %s18, 3
      %s192 = scalar_select %p191, %s18, 3
      %s193 = scalar_lea.vmem %s1, %s192
      %p194 = pneg %p75
      %p195 = pneg %p72
      %p196 = scmp.lt.s32.totalorder %s18, 3
      %s197 = scalar_select %p196, %s18, 3
      %s198 = scalar_lea.vmem %s2, %s197
      %p199 = pneg %p101
      %p200 = pneg %p98
      %p201 = pneg %p129
      %p202 = pneg %p126
      %s203 = smul.u32 32, %s19
      %p204 = scmp.lt.s32.totalorder %s18, 3
      %s205 = scalar_select %p204, %s18, 3
      %p206 = scmp.lt.s32.totalorder %s203, 31
      %s207 = scalar_select %p206, %s203, 31
      %s208 = smul.addr %s205, 32
      %s209 = sadd.s32 %s207, %s208
      %s210 = smul.addr %s209, 4
      %s211 = scalar_lea.vmem %s3, %s210
      %s212 = smul.u32 32, %s19
      %p213 = scmp.lt.s32.totalorder %s18, 3
      %s214 = scalar_select %p213, %s18, 3
      %p215 = scmp.lt.s32.totalorder %s212, 31
      %s216 = scalar_select %p215, %s212, 31
      %s217 = smul.addr %s214, 32
      %s218 = sadd.s32 %s216, %s217
      %s219 = smul.addr %s218, 8
      %s220 = scalar_lea.vmem %s0, %s219
      %s221 = smul.u32 32, %s19
      %p222 = scmp.lt.s32.totalorder %s18, 3
      %s223 = scalar_select %p222, %s18, 3
      %s224 = scalar_lea.vmem %s1, %s223
      %p225 = scmp.lt.s32.totalorder %s18, 3
      %s226 = scalar_select %p225, %s18, 3
      %s227 = scalar_lea.vmem %s2, %s226
      %s228 = smul.u32 32, %s19
      %p229 = scmp.lt.s32.totalorder %s18, 3
      %s230 = scalar_select %p229, %s18, 3
      %p231 = scmp.lt.s32.totalorder %s228, 31
      %s232 = scalar_select %p231, %s228, 31
      %s233 = smul.addr %s230, 32
      %s234 = sadd.s32 %s232, %s233
      %s235 = smul.addr %s234, 4
      %s236 = scalar_lea.vmem %s3, %s235
      %s237 = smul.u32 32, %s19
      %v238 = vld [vmem:[%s220] sm:$0xff]
      %v239 = vld [vmem:[%s220 + $0x8] sm:$0xff]
      %v240 = vld [vmem:[%s220 + $0x10] sm:$0xff]
      %v241 = vld [vmem:[%s220 + $0x18] sm:$0xff]
      %v242 = vld [vmem:[%s220 + $0x20] sm:$0xff]
      %v243 = vld [vmem:[%s220 + $0x28] sm:$0xff]
      %v244 = vld [vmem:[%s220 + $0x30] sm:$0xff]
      %v245 = vld [vmem:[%s220 + $0x38] sm:$0xff]
      %v246 = vld [vmem:[%s220 + $0x40] sm:$0xff]
      %v247 = vld [vmem:[%s220 + $0x48] sm:$0xff]
      %v248 = vld [vmem:[%s220 + $0x50] sm:$0xff]
      %v249 = vld [vmem:[%s220 + $0x58] sm:$0xff]
      %v250 = vld [vmem:[%s220 + $0x60] sm:$0xff]
      %v251 = vld [vmem:[%s220 + $0x68] sm:$0xff]
      %v252 = vld [vmem:[%s220 + $0x70] sm:$0xff]
      %v253 = vld [vmem:[%s220 + $0x78] sm:$0xff]
      %v254 = vld [vmem:[%s220 + $0x80] sm:$0xff]
      %v255 = vld [vmem:[%s220 + $0x88] sm:$0xff]
      %v256 = vld [vmem:[%s220 + $0x90] sm:$0xff]
      %v257 = vld [vmem:[%s220 + $0x98] sm:$0xff]
      %v258 = vld [vmem:[%s220 + $0xa0] sm:$0xff]
      %v259 = vld [vmem:[%s220 + $0xa8] sm:$0xff]
      %v260 = vld [vmem:[%s220 + $0xb0] sm:$0xff]
      %v261 = vld [vmem:[%s220 + $0xb8] sm:$0xff]
      %v262 = vld [vmem:[%s220 + $0xc0] sm:$0xff]
      %v263 = vld [vmem:[%s220 + $0xc8] sm:$0xff]
      %v264 = vld [vmem:[%s220 + $0xd0] sm:$0xff]
      %v265 = vld [vmem:[%s220 + $0xd8] sm:$0xff]
      %v266 = vld [vmem:[%s220 + $0xe0] sm:$0xff]
      %v267 = vld [vmem:[%s220 + $0xe8] sm:$0xff]
      %v268 = vld [vmem:[%s220 + $0xf0] sm:$0xff]
      %v269 = vld [vmem:[%s220 + $0xf8] sm:$0xff]
      %v270 = vld [vmem:[%s224] sm:$0x1]
      %v272 = vlaneseq
      %v273 = vshrl.u32 %v272, 7
      %v274 = vsub.s32 0, %v273
      %v275 = vrot.slane %v270, %v274
      %v277 = vmul.f32 %v238, %v275
      %v278 = vmul.f32 %v239, %v275
      %v279 = vmul.f32 %v240, %v275
      %v280 = vmul.f32 %v241, %v275
      %v281 = vmul.f32 %v242, %v275
      %v282 = vmul.f32 %v243, %v275
      %v283 = vmul.f32 %v244, %v275
      %v284 = vmul.f32 %v245, %v275
      %v285 = vmul.f32 %v246, %v275
      %v286 = vmul.f32 %v247, %v275
      %v287 = vmul.f32 %v248, %v275
      %v288 = vmul.f32 %v249, %v275
      %v289 = vmul.f32 %v250, %v275
      %v290 = vmul.f32 %v251, %v275
      %v291 = vmul.f32 %v252, %v275
      %v292 = vmul.f32 %v253, %v275
      %v293 = vmul.f32 %v254, %v275
      %v294 = vmul.f32 %v255, %v275
      %v295 = vmul.f32 %v256, %v275
      %v296 = vmul.f32 %v257, %v275
      %v297 = vmul.f32 %v258, %v275
      %v298 = vmul.f32 %v259, %v275
      %v299 = vmul.f32 %v260, %v275
      %v300 = vmul.f32 %v261, %v275
      %v301 = vmul.f32 %v262, %v275
      %v302 = vmul.f32 %v263, %v275
      %v303 = vmul.f32 %v264, %v275
      %v304 = vmul.f32 %v265, %v275
      %v305 = vmul.f32 %v266, %v275
      %v306 = vmul.f32 %v267, %v275
      %v307 = vmul.f32 %v268, %v275
      %v308 = vmul.f32 %v269, %v275
      %v309 = vld [vmem:[%s227] sm:$0x1]
      %v311 = vlaneseq
      %v312 = vshrl.u32 %v311, 7
      %v313 = vsub.s32 0, %v312
      %v314 = vrot.slane %v309, %v313
      %v316 = vadd.f32 %v277, %v314
      %v317 = vadd.f32 %v278, %v314
      %v318 = vadd.f32 %v279, %v314
      %v319 = vadd.f32 %v280, %v314
      %v320 = vadd.f32 %v281, %v314
      %v321 = vadd.f32 %v282, %v314
      %v322 = vadd.f32 %v283, %v314
      %v323 = vadd.f32 %v284, %v314
      %v324 = vadd.f32 %v285, %v314
      %v325 = vadd.f32 %v286, %v314
      %v326 = vadd.f32 %v287, %v314
      %v327 = vadd.f32 %v288, %v314
      %v328 = vadd.f32 %v289, %v314
      %v329 = vadd.f32 %v290, %v314
      %v330 = vadd.f32 %v291, %v314
      %v331 = vadd.f32 %v292, %v314
      %v332 = vadd.f32 %v293, %v314
      %v333 = vadd.f32 %v294, %v314
      %v334 = vadd.f32 %v295, %v314
      %v335 = vadd.f32 %v296, %v314
      %v336 = vadd.f32 %v297, %v314
      %v337 = vadd.f32 %v298, %v314
      %v338 = vadd.f32 %v299, %v314
      %v339 = vadd.f32 %v300, %v314
      %v340 = vadd.f32 %v301, %v314
      %v341 = vadd.f32 %v302, %v314
      %v342 = vadd.f32 %v303, %v314
      %v343 = vadd.f32 %v304, %v314
      %v344 = vadd.f32 %v305, %v314
      %v345 = vadd.f32 %v306, %v314
      %v346 = vadd.f32 %v307, %v314
      %v347 = vadd.f32 %v308, %v314
      %v348 = vxor.u32 %v316, 2147483648
      %v349 = vxor.u32 %v317, 2147483648
      %v350 = vxor.u32 %v318, 2147483648
      %v351 = vxor.u32 %v319, 2147483648
      %v352 = vxor.u32 %v320, 2147483648
      %v353 = vxor.u32 %v321, 2147483648
      %v354 = vxor.u32 %v322, 2147483648
      %v355 = vxor.u32 %v323, 2147483648
      %v356 = vxor.u32 %v324, 2147483648
      %v357 = vxor.u32 %v325, 2147483648
      %v358 = vxor.u32 %v326, 2147483648
      %v359 = vxor.u32 %v327, 2147483648
      %v360 = vxor.u32 %v328, 2147483648
      %v361 = vxor.u32 %v329, 2147483648
      %v362 = vxor.u32 %v330, 2147483648
      %v363 = vxor.u32 %v331, 2147483648
      %v364 = vxor.u32 %v332, 2147483648
      %v365 = vxor.u32 %v333, 2147483648
      %v366 = vxor.u32 %v334, 2147483648
      %v367 = vxor.u32 %v335, 2147483648
      %v368 = vxor.u32 %v336, 2147483648
      %v369 = vxor.u32 %v337, 2147483648
      %v370 = vxor.u32 %v338, 2147483648
      %v371 = vxor.u32 %v339, 2147483648
      %v372 = vxor.u32 %v340, 2147483648
      %v373 = vxor.u32 %v341, 2147483648
      %v374 = vxor.u32 %v342, 2147483648
      %v375 = vxor.u32 %v343, 2147483648
      %v376 = vxor.u32 %v344, 2147483648
      %v377 = vxor.u32 %v345, 2147483648
      %v378 = vxor.u32 %v346, 2147483648
      %v379 = vxor.u32 %v347, 2147483648
      %v380 = vmul.f32 %v348, 1.442695
      %v381 = vpow.pop %v380
      %v382 = vmul.f32 %v349, 1.442695
      %v383 = vpow.pop %v382
      %v384 = vmul.f32 %v350, 1.442695
      %v385 = vpow.pop %v384
      %v386 = vmul.f32 %v351, 1.442695
      %v387 = vpow.pop %v386
      %v388 = vmul.f32 %v352, 1.442695
      %v389 = vpow.pop %v388
      %v390 = vmul.f32 %v353, 1.442695
      %v391 = vpow.pop %v390
      %v392 = vmul.f32 %v354, 1.442695
      %v393 = vpow.pop %v392
      %v394 = vmul.f32 %v355, 1.442695
      %v395 = vpow.pop %v394
      %v396 = vmul.f32 %v356, 1.442695
      %v397 = vpow.pop %v396
      %v398 = vmul.f32 %v357, 1.442695
      %v399 = vpow.pop %v398
      %v400 = vmul.f32 %v358, 1.442695
      %v401 = vpow.pop %v400
      %v402 = vmul.f32 %v359, 1.442695
      %v403 = vpow.pop %v402
      %v404 = vmul.f32 %v360, 1.442695
      %v405 = vpow.pop %v404
      %v406 = vmul.f32 %v361, 1.442695
      %v407 = vpow.pop %v406
      %v408 = vmul.f32 %v362, 1.442695
      %v409 = vpow.pop %v408
      %v410 = vmul.f32 %v363, 1.442695
      %v411 = vpow.pop %v410
      %v412 = vmul.f32 %v364, 1.442695
      %v413 = vpow.pop %v412
      %v414 = vmul.f32 %v365, 1.442695
      %v415 = vpow.pop %v414
      %v416 = vmul.f32 %v366, 1.442695
      %v417 = vpow.pop %v416
      %v418 = vmul.f32 %v367, 1.442695
      %v419 = vpow.pop %v418
      %v420 = vmul.f32 %v368, 1.442695
      %v421 = vpow.pop %v420
      %v422 = vmul.f32 %v369, 1.442695
      %v423 = vpow.pop %v422
      %v424 = vmul.f32 %v370, 1.442695
      %v425 = vpow.pop %v424
      %v426 = vmul.f32 %v371, 1.442695
      %v427 = vpow.pop %v426
      %v428 = vmul.f32 %v372, 1.442695
      %v429 = vpow.pop %v428
      %v430 = vmul.f32 %v373, 1.442695
      %v431 = vpow.pop %v430
      %v432 = vmul.f32 %v374, 1.442695
      %v433 = vpow.pop %v432
      %v434 = vmul.f32 %v375, 1.442695
      %v435 = vpow.pop %v434
      %v436 = vmul.f32 %v376, 1.442695
      %v437 = vpow.pop %v436
      %v438 = vmul.f32 %v377, 1.442695
      %v439 = vpow.pop %v438
      %v440 = vmul.f32 %v378, 1.442695
      %v441 = vpow.pop %v440
      %v442 = vmul.f32 %v379, 1.442695
      %v443 = vpow.pop %v442
      %v444 = vadd.f32 %v381, 1.0
      %v445 = vadd.f32 %v383, 1.0
      %v446 = vadd.f32 %v385, 1.0
      %v447 = vadd.f32 %v387, 1.0
      %v448 = vadd.f32 %v389, 1.0
      %v449 = vadd.f32 %v391, 1.0
      %v450 = vadd.f32 %v393, 1.0
      %v451 = vadd.f32 %v395, 1.0
      %v452 = vadd.f32 %v397, 1.0
      %v453 = vadd.f32 %v399, 1.0
      %v454 = vadd.f32 %v401, 1.0
      %v455 = vadd.f32 %v403, 1.0
      %v456 = vadd.f32 %v405, 1.0
      %v457 = vadd.f32 %v407, 1.0
      %v458 = vadd.f32 %v409, 1.0
      %v459 = vadd.f32 %v411, 1.0
      %v460 = vadd.f32 %v413, 1.0
      %v461 = vadd.f32 %v415, 1.0
      %v462 = vadd.f32 %v417, 1.0
      %v463 = vadd.f32 %v419, 1.0
      %v464 = vadd.f32 %v421, 1.0
      %v465 = vadd.f32 %v423, 1.0
      %v466 = vadd.f32 %v425, 1.0
      %v467 = vadd.f32 %v427, 1.0
      %v468 = vadd.f32 %v429, 1.0
      %v469 = vadd.f32 %v431, 1.0
      %v470 = vadd.f32 %v433, 1.0
      %v471 = vadd.f32 %v435, 1.0
      %v472 = vadd.f32 %v437, 1.0
      %v473 = vadd.f32 %v439, 1.0
      %v474 = vadd.f32 %v441, 1.0
      %v475 = vadd.f32 %v443, 1.0
      %v476 = vrcp.pop %v444
      %v477 = vmul.f32 1.0, %v476
      %v478 = vrcp.pop %v445
      %v479 = vmul.f32 1.0, %v478
      %v480 = vrcp.pop %v446
      %v481 = vmul.f32 1.0, %v480
      %v482 = vrcp.pop %v447
      %v483 = vmul.f32 1.0, %v482
      %v484 = vrcp.pop %v448
      %v485 = vmul.f32 1.0, %v484
      %v486 = vrcp.pop %v449
      %v487 = vmul.f32 1.0, %v486
      %v488 = vrcp.pop %v450
      %v489 = vmul.f32 1.0, %v488
      %v490 = vrcp.pop %v451
      %v491 = vmul.f32 1.0, %v490
      %v492 = vrcp.pop %v452
      %v493 = vmul.f32 1.0, %v492
      %v494 = vrcp.pop %v453
      %v495 = vmul.f32 1.0, %v494
      %v496 = vrcp.pop %v454
      %v497 = vmul.f32 1.0, %v496
      %v498 = vrcp.pop %v455
      %v499 = vmul.f32 1.0, %v498
      %v500 = vrcp.pop %v456
      %v501 = vmul.f32 1.0, %v500
      %v502 = vrcp.pop %v457
      %v503 = vmul.f32 1.0, %v502
      %v504 = vrcp.pop %v458
      %v505 = vmul.f32 1.0, %v504
      %v506 = vrcp.pop %v459
      %v507 = vmul.f32 1.0, %v506
      %v508 = vrcp.pop %v460
      %v509 = vmul.f32 1.0, %v508
      %v510 = vrcp.pop %v461
      %v511 = vmul.f32 1.0, %v510
      %v512 = vrcp.pop %v462
      %v513 = vmul.f32 1.0, %v512
      %v514 = vrcp.pop %v463
      %v515 = vmul.f32 1.0, %v514
      %v516 = vrcp.pop %v464
      %v517 = vmul.f32 1.0, %v516
      %v518 = vrcp.pop %v465
      %v519 = vmul.f32 1.0, %v518
      %v520 = vrcp.pop %v466
      %v521 = vmul.f32 1.0, %v520
      %v522 = vrcp.pop %v467
      %v523 = vmul.f32 1.0, %v522
      %v524 = vrcp.pop %v468
      %v525 = vmul.f32 1.0, %v524
      %v526 = vrcp.pop %v469
      %v527 = vmul.f32 1.0, %v526
      %v528 = vrcp.pop %v470
      %v529 = vmul.f32 1.0, %v528
      %v530 = vrcp.pop %v471
      %v531 = vmul.f32 1.0, %v530
      %v532 = vrcp.pop %v472
      %v533 = vmul.f32 1.0, %v532
      %v534 = vrcp.pop %v473
      %v535 = vmul.f32 1.0, %v534
      %v536 = vrcp.pop %v474
      %v537 = vmul.f32 1.0, %v536
      %v538 = vrcp.pop %v475
      %v539 = vmul.f32 1.0, %v538
      %v540 = vmul.f32 %v316, %v477
      %v541 = vmul.f32 %v317, %v479
      %v542 = vmul.f32 %v318, %v481
      %v543 = vmul.f32 %v319, %v483
      %v544 = vmul.f32 %v320, %v485
      %v545 = vmul.f32 %v321, %v487
      %v546 = vmul.f32 %v322, %v489
      %v547 = vmul.f32 %v323, %v491
      %v548 = vmul.f32 %v324, %v493
      %v549 = vmul.f32 %v325, %v495
      %v550 = vmul.f32 %v326, %v497
      %v551 = vmul.f32 %v327, %v499
      %v552 = vmul.f32 %v328, %v501
      %v553 = vmul.f32 %v329, %v503
      %v554 = vmul.f32 %v330, %v505
      %v555 = vmul.f32 %v331, %v507
      %v556 = vmul.f32 %v332, %v509
      %v557 = vmul.f32 %v333, %v511
      %v558 = vmul.f32 %v334, %v513
      %v559 = vmul.f32 %v335, %v515
      %v560 = vmul.f32 %v336, %v517
      %v561 = vmul.f32 %v337, %v519
      %v562 = vmul.f32 %v338, %v521
      %v563 = vmul.f32 %v339, %v523
      %v564 = vmul.f32 %v340, %v525
      %v565 = vmul.f32 %v341, %v527
      %v566 = vmul.f32 %v342, %v529
      %v567 = vmul.f32 %v343, %v531
      %v568 = vmul.f32 %v344, %v533
      %v569 = vmul.f32 %v345, %v535
      %v570 = vmul.f32 %v346, %v537
      %v571 = vmul.f32 %v347, %v539
      %v572 = vpack.c.bf16 %v541, %v540
      %v573 = vpack.c.bf16 %v543, %v542
      %v574 = vpack.c.bf16 %v545, %v544
      %v575 = vpack.c.bf16 %v547, %v546
      %v576 = vpack.c.bf16 %v549, %v548
      %v577 = vpack.c.bf16 %v551, %v550
      %v578 = vpack.c.bf16 %v553, %v552
      %v579 = vpack.c.bf16 %v555, %v554
      %v580 = vpack.c.bf16 %v557, %v556
      %v581 = vpack.c.bf16 %v559, %v558
      %v582 = vpack.c.bf16 %v561, %v560
      %v583 = vpack.c.bf16 %v563, %v562
      %v584 = vpack.c.bf16 %v565, %v564
      %v585 = vpack.c.bf16 %v567, %v566
      %v586 = vpack.c.bf16 %v569, %v568
      %v587 = vpack.c.bf16 %v571, %v570
      %v604 = vunpack.c.l.b16 %v572
      %v605 = vunpack.c.h.b16 %v572
      %v606 = vunpack.c.l.b16 %v573
      %v607 = vunpack.c.h.b16 %v573
      %v608 = vunpack.c.l.b16 %v574
      %v609 = vunpack.c.h.b16 %v574
      %v610 = vunpack.c.l.b16 %v575
      %v611 = vunpack.c.h.b16 %v575
      %v612 = vunpack.c.l.b16 %v576
      %v613 = vunpack.c.h.b16 %v576
      %v614 = vunpack.c.l.b16 %v577
      %v615 = vunpack.c.h.b16 %v577
      %v616 = vunpack.c.l.b16 %v578
      %v617 = vunpack.c.h.b16 %v578
      %v618 = vunpack.c.l.b16 %v579
      %v619 = vunpack.c.h.b16 %v579
      %v620 = vunpack.c.l.b16 %v580
      %v621 = vunpack.c.h.b16 %v580
      %v622 = vunpack.c.l.b16 %v581
      %v623 = vunpack.c.h.b16 %v581
      %v624 = vunpack.c.l.b16 %v582
      %v625 = vunpack.c.h.b16 %v582
      %v626 = vunpack.c.l.b16 %v583
      %v627 = vunpack.c.h.b16 %v583
      %v628 = vunpack.c.l.b16 %v584
      %v629 = vunpack.c.h.b16 %v584
      %v630 = vunpack.c.l.b16 %v585
      %v631 = vunpack.c.h.b16 %v585
      %v632 = vunpack.c.l.b16 %v586
      %v633 = vunpack.c.h.b16 %v586
      %v634 = vunpack.c.l.b16 %v587
      %v635 = vunpack.c.h.b16 %v587
      %v636 = vpack.c.b16 %v604, %v604
      %v637 = vpack.c.b16 %v605, %v605
      %v638 = vpack.c.b16 %v606, %v606
      %v639 = vpack.c.b16 %v607, %v607
      %v640 = vpack.c.b16 %v608, %v608
      %v641 = vpack.c.b16 %v609, %v609
      %v642 = vpack.c.b16 %v610, %v610
      %v643 = vpack.c.b16 %v611, %v611
      %v644 = vpack.c.b16 %v612, %v612
      %v645 = vpack.c.b16 %v613, %v613
      %v646 = vpack.c.b16 %v614, %v614
      %v647 = vpack.c.b16 %v615, %v615
      %v648 = vpack.c.b16 %v616, %v616
      %v649 = vpack.c.b16 %v617, %v617
      %v650 = vpack.c.b16 %v618, %v618
      %v651 = vpack.c.b16 %v619, %v619
      %v652 = vpack.c.b16 %v620, %v620
      %v653 = vpack.c.b16 %v621, %v621
      %v654 = vpack.c.b16 %v622, %v622
      %v655 = vpack.c.b16 %v623, %v623
      %v656 = vpack.c.b16 %v624, %v624
      %v657 = vpack.c.b16 %v625, %v625
      %v658 = vpack.c.b16 %v626, %v626
      %v659 = vpack.c.b16 %v627, %v627
      %v660 = vpack.c.b16 %v628, %v628
      %v661 = vpack.c.b16 %v629, %v629
      %v662 = vpack.c.b16 %v630, %v630
      %v663 = vpack.c.b16 %v631, %v631
      %v664 = vpack.c.b16 %v632, %v632
      %v665 = vpack.c.b16 %v633, %v633
      %v666 = vpack.c.b16 %v634, %v634
      %v667 = vpack.c.b16 %v635, %v635
      %vm700 = vcmask 125952
      %701 = vst.msk [vmem:[%s236] sm:$0xf] %vm700, %v636
      %702 = vst.msk [vmem:[%s236 + $0x4] sm:$0xf] %vm700, %v637
      %703 = vst.msk [vmem:[%s236 + $0x8] sm:$0xf] %vm700, %v638
      %704 = vst.msk [vmem:[%s236 + $0xc] sm:$0xf] %vm700, %v639
      %705 = vst.msk [vmem:[%s236 + $0x10] sm:$0xf] %vm700, %v640
      %706 = vst.msk [vmem:[%s236 + $0x14] sm:$0xf] %vm700, %v641
      %707 = vst.msk [vmem:[%s236 + $0x18] sm:$0xf] %vm700, %v642
      %708 = vst.msk [vmem:[%s236 + $0x1c] sm:$0xf] %vm700, %v643
      %709 = vst.msk [vmem:[%s236 + $0x20] sm:$0xf] %vm700, %v644
      %710 = vst.msk [vmem:[%s236 + $0x24] sm:$0xf] %vm700, %v645
      %711 = vst.msk [vmem:[%s236 + $0x28] sm:$0xf] %vm700, %v646
      %712 = vst.msk [vmem:[%s236 + $0x2c] sm:$0xf] %vm700, %v647
      %713 = vst.msk [vmem:[%s236 + $0x30] sm:$0xf] %vm700, %v648
      %714 = vst.msk [vmem:[%s236 + $0x34] sm:$0xf] %vm700, %v649
      %715 = vst.msk [vmem:[%s236 + $0x38] sm:$0xf] %vm700, %v650
      %716 = vst.msk [vmem:[%s236 + $0x3c] sm:$0xf] %vm700, %v651
      %717 = vst.msk [vmem:[%s236 + $0x40] sm:$0xf] %vm700, %v652
      %718 = vst.msk [vmem:[%s236 + $0x44] sm:$0xf] %vm700, %v653
      %719 = vst.msk [vmem:[%s236 + $0x48] sm:$0xf] %vm700, %v654
      %720 = vst.msk [vmem:[%s236 + $0x4c] sm:$0xf] %vm700, %v655
      %721 = vst.msk [vmem:[%s236 + $0x50] sm:$0xf] %vm700, %v656
      %722 = vst.msk [vmem:[%s236 + $0x54] sm:$0xf] %vm700, %v657
      %723 = vst.msk [vmem:[%s236 + $0x58] sm:$0xf] %vm700, %v658
      %724 = vst.msk [vmem:[%s236 + $0x5c] sm:$0xf] %vm700, %v659
      %725 = vst.msk [vmem:[%s236 + $0x60] sm:$0xf] %vm700, %v660
      %726 = vst.msk [vmem:[%s236 + $0x64] sm:$0xf] %vm700, %v661
      %727 = vst.msk [vmem:[%s236 + $0x68] sm:$0xf] %vm700, %v662
      %728 = vst.msk [vmem:[%s236 + $0x6c] sm:$0xf] %vm700, %v663
      %729 = vst.msk [vmem:[%s236 + $0x70] sm:$0xf] %vm700, %v664
      %730 = vst.msk [vmem:[%s236 + $0x74] sm:$0xf] %vm700, %v665
      %731 = vst.msk [vmem:[%s236 + $0x78] sm:$0xf] %vm700, %v666
      %732 = vst.msk [vmem:[%s236 + $0x7c] sm:$0xf] %vm700, %v667
      %s733 = smul.u32 32, %s19
      %p734 = scmp.lt.s32.totalorder %s18, 3
      %s735 = scalar_select %p734, %s18, 3
      %p736 = scmp.lt.s32.totalorder %s733, 31
      %s737 = scalar_select %p736, %s733, 31
      %s738 = smul.addr %s735, 32
      %s739 = sadd.s32 %s737, %s738
      %s740 = smul.addr %s739, 4
      %s741 = scalar_lea.vmem %s3, %s740
      // Predicated region
      $region33: #{_lambda_.8} parent=31 // pred_check
        %p742 = pneg %p126
      $region34: #{_lambda_.8} parent=31 // pred_check_branch
        %744 = sbr.rel (%p742) target = $region36
      $region35: #{_lambda_.8} parent=31 // pred_region
        %s745 = smul.u32 32, %s19
      $region36: #{_lambda_.8} parent=31 // pred_fallthru
        _
    $region32: #{_lambda_.8} parent=5 // pred_fallthru
      _
    %p746 = scmp.le.s32.totalorder 2, %s9
    // Predicated region
    $region37: #{_lambda_.8} parent=5 // pred_check
      %p747 = pneg %p746
    $region38: #{_lambda_.8} parent=5 // pred_check_branch
      %749 = sbr.rel (%p747) target = $region40
    $region39: #{_lambda_.8} parent=5 // pred_region
      %s750 = ssub.s32 %s9, 2
      // Predicated region
      $region41: #{_lambda_.8} parent=39 // pred_check
        %p751 = pneg %p132
      $region42: #{_lambda_.8} parent=39 // pred_check_branch
        %753 = sbr.rel (%p751) target = $region44
      $region43: #{_lambda_.8} parent=39 // pred_region
        %s754 = smul.u32 32, %s21
        %p755 = scmp.lt.s32.totalorder %s20, 3
        %s756 = scalar_select %p755, %s20, 3
        %p757 = scmp.lt.s32.totalorder %s754, 31
        %s758 = scalar_select %p757, %s754, 31
        %s759 = smul.addr %s756, 32
        %s760 = sadd.s32 %s758, %s759
        %s761 = smul.addr %s760, 4
        %s762 = scalar_lea.vmem %s3, %s761
      $region44: #{_lambda_.8} parent=39 // pred_fallthru
        _
    $region40: #{_lambda_.8} parent=5 // pred_fallthru
      _
  $region6: #{_lambda_.8} parent=0 // loop_footer
    %s13 = sadd.s32 1, %s9
  $region7: #{_lambda_.8} parent=0 // loop_footer_branch
    %8 = sbr.rel target = $region3
  $region8: #{_lambda_.8} parent=0 // loop_exit
    _

// kernel: _lambda_.9
$region0: #{_lambda_.9}
  #allocation0 [shape = 'u32[]', space=smem, size = 0x4, offset = 0x4, fixed_abs, tag = 'smem constant byte address 0x4 - core index']
  #allocation1 [shape = 'u32[144,128]{1,0:T(1,128)}', space=vmem, size = 0x12000, scoped, tag = 'internal scratch']
  #allocation2 [shape = 'f32[16,32]{1,0:T(8,128)}', space=vmem, size = 0x2000, scoped, tag = 'scratch operand']
  %s0 = inlined_call_operand.vmem [shape: bf16[4,18,18,16], index: 0, kind: input, shape index: {}]
  %s1 = inlined_call_operand.vmem [shape: bf16[3,3,16,32], index: 1, kind: input, shape index: {}]
  %s2 = inlined_call_operand.vmem [shape: f32[1,32], index: 2, kind: input, shape index: {}]
  %s3 = inlined_call_operand.vmem [shape: bf16[4,16,16,32], index: 3, kind: output, shape index: {}]
  %s4 = sld [smem:[#allocation0]]
  $region53: #{_lambda_.9} parent=0
    _
  %s6 = ssub.s32 1, %s4
  %s7 = scalar_select 0, %s6, %s4
  loop: start=0, step=1, limit=194
  $region2: #{_lambda_.9} parent=0 // loop_pre_header
    _
  $region3: #{_lambda_.9} parent=0 // loop_header
    %s9 = sphi 0, %s13
    %p10 = scmp.ge.s32.totalorder %s9, 194
    %s16 = sphi 0, %s42
    %s17 = sphi 0, %s38
    %s18 = sphi 0, %s34
    %s19 = sphi 0, %s30
    %s20 = sphi 0, %s16
    %s21 = sphi 0, %s17
    %s22 = sphi 0, %s18
    %s23 = sphi 0, %s19
    %s24 = sphi 0, %s20
    %s25 = sphi 0, %s21
    %s26 = sphi 0, %s22
    %s27 = sphi 0, %s23
    %s49 = sphi 0, %s51
    %s52 = sphi 0, %s49
    %s53 = sphi 0, %s52
    %s69 = sphi 0, %s53
    %s77 = sphi 0, %s79
    %s80 = sphi 0, %s77
    %s81 = sphi 0, %s80
    %s97 = sphi 0, %s81
    %s103 = sphi 0, %s105
    %s106 = sphi 0, %s103
    %s107 = sphi 0, %s106
    %s123 = sphi 0, %s107
    %s133 = sphi 0, %s135
    %s136 = sphi 0, %s133
    %s137 = sphi 0, %s136
    %s153 = sphi 0, %s137
  $region4: #{_lambda_.9} parent=0 // loop_header_branch
    %12 = sbr.rel (%p10) target = $region8
  $region5: #{_lambda_.9} parent=0 // loop_body
    %s14 = ssub.s32 %s9, 1
    %s15 = ssub.s32 %s9, 2
    %s28 = sadd.s32 1, %s19
    %p29 = scmp.ge.s32.totalorder %s28, 3
    %s30 = scalar_select %p29, 0, %s28
    %s31 = sadd.s32 1, %s18
    %s32 = scalar_select %p29, %s31, %s18
    %p33 = scmp.ge.s32.totalorder %s32, 1
    %s34 = scalar_select %p33, 0, %s32
    %s35 = sadd.s32 1, %s17
    %s36 = scalar_select %p33, %s35, %s17
    %p37 = scmp.ge.s32.totalorder %s36, 16
    %s38 = scalar_select %p37, 0, %s36
    %s39 = sadd.s32 1, %s16
    %s40 = scalar_select %p37, %s39, %s16
    %p41 = scmp.ge.s32.totalorder %s40, 4
    %s42 = scalar_select %p41, 0, %s40
    %s43 = sadd.s32 %s17, %s19
    %s44 = sadd.s32 %s38, %s30
    %s45 = ssub.s32 %s16, %s42
    %s46 = ssub.s32 %s43, %s44
    %s47 = sor.u32 %s45, %s46
    %p48 = scmp.eq.s32.totalorder %s47, 0
    %s50 = sadd.s32 %s49, 1
    %s51 = scalar_select %p48, %s49, %s50
    %p54 = pneg %p48
    %p55 = scmp.eq.s32.totalorder %s9, 191
    %p56 = por %p54, %p55
    %p57 = scmp.ne.s32.totalorder %s49, %s52
    %p58 = scmp.eq.s32.totalorder %s9, 0
    %p59 = por %p57, %p58
    %p60 = scmp.ne.s32.totalorder %s49, %s52
    %p61 = scmp.eq.s32.totalorder %s14, 191
    %p62 = por %p60, %p61
    %p63 = scmp.ne.s32.totalorder %s52, %s53
    %p64 = scmp.eq.s32.totalorder %s14, 0
    %p65 = por %p63, %p64
    %p66 = scmp.ne.s32.totalorder %s52, %s53
    %p67 = scmp.eq.s32.totalorder %s15, 191
    %p68 = por %p66, %p67
    %p70 = scmp.ne.s32.totalorder %s53, %s69
    %p71 = scmp.eq.s32.totalorder %s15, 0
    %p72 = por %p70, %p71
    %s73 = ssub.s32 %s19, %s30
    %s74 = ssub.s32 %s18, %s34
    %s75 = sor.u32 %s73, %s74
    %p76 = scmp.eq.s32.totalorder %s75, 0
    %s78 = sadd.s32 %s77, 1
    %s79 = scalar_select %p76, %s77, %s78
    %p82 = pneg %p76
    %p83 = scmp.eq.s32.totalorder %s9, 191
    %p84 = por %p82, %p83
    %p85 = scmp.ne.s32.totalorder %s77, %s80
    %p86 = scmp.eq.s32.totalorder %s9, 0
    %p87 = por %p85, %p86
    %p88 = scmp.ne.s32.totalorder %s77, %s80
    %p89 = scmp.eq.s32.totalorder %s14, 191
    %p90 = por %p88, %p89
    %p91 = scmp.ne.s32.totalorder %s80, %s81
    %p92 = scmp.eq.s32.totalorder %s14, 0
    %p93 = por %p91, %p92
    %p94 = scmp.ne.s32.totalorder %s80, %s81
    %p95 = scmp.eq.s32.totalorder %s15, 191
    %p96 = por %p94, %p95
    %p98 = scmp.ne.s32.totalorder %s81, %s97
    %p99 = scmp.eq.s32.totalorder %s15, 0
    %p100 = por %p98, %p99
    %s101 = ssub.s32 %s18, %s34
    %p102 = scmp.eq.s32.totalorder %s101, 0
    %s104 = sadd.s32 %s103, 1
    %s105 = scalar_select %p102, %s103, %s104
    %p108 = pneg %p102
    %p109 = scmp.eq.s32.totalorder %s9, 191
    %p110 = por %p108, %p109
    %p111 = scmp.ne.s32.totalorder %s103, %s106
    %p112 = scmp.eq.s32.totalorder %s9, 0
    %p113 = por %p111, %p112
    %p114 = scmp.ne.s32.totalorder %s103, %s106
    %p115 = scmp.eq.s32.totalorder %s14, 191
    %p116 = por %p114, %p115
    %p117 = scmp.ne.s32.totalorder %s106, %s107
    %p118 = scmp.eq.s32.totalorder %s14, 0
    %p119 = por %p117, %p118
    %p120 = scmp.ne.s32.totalorder %s106, %s107
    %p121 = scmp.eq.s32.totalorder %s15, 191
    %p122 = por %p120, %p121
    %p124 = scmp.ne.s32.totalorder %s107, %s123
    %p125 = scmp.eq.s32.totalorder %s15, 0
    %p126 = por %p124, %p125
    %s127 = ssub.s32 %s16, %s42
    %s128 = ssub.s32 %s17, %s38
    %s129 = sor.u32 %s127, %s128
    %s130 = ssub.s32 %s18, %s34
    %s131 = sor.u32 %s129, %s130
    %p132 = scmp.eq.s32.totalorder %s131, 0
    %s134 = sadd.s32 %s133, 1
    %s135 = scalar_select %p132, %s133, %s134
    %p138 = pneg %p132
    %p139 = scmp.eq.s32.totalorder %s9, 191
    %p140 = por %p138, %p139
    %p141 = scmp.ne.s32.totalorder %s133, %s136
    %p142 = scmp.eq.s32.totalorder %s9, 0
    %p143 = por %p141, %p142
    %p144 = scmp.ne.s32.totalorder %s133, %s136
    %p145 = scmp.eq.s32.totalorder %s14, 191
    %p146 = por %p144, %p145
    %p147 = scmp.ne.s32.totalorder %s136, %s137
    %p148 = scmp.eq.s32.totalorder %s14, 0
    %p149 = por %p147, %p148
    %p150 = scmp.ne.s32.totalorder %s136, %s137
    %p151 = scmp.eq.s32.totalorder %s15, 191
    %p152 = por %p150, %p151
    %p154 = scmp.ne.s32.totalorder %s137, %s153
    %p155 = scmp.eq.s32.totalorder %s15, 0
    %p156 = por %p154, %p155
    %p157 = scmp.le.s32.totalorder 1, %s9
    %p158 = scmp.lt.s32.totalorder %s9, 193
    %p159 = pnand %p157, %p158
    %p160 = pneg %p159
    // Predicated region
    $region9: #{_lambda_.9} parent=5 // pred_check
      _
    $region10: #{_lambda_.9} parent=5 // pred_check_branch
      %162 = sbr.rel (%p159) target = $region12
    $region11: #{_lambda_.9} parent=5 // pred_region
      %s163 = ssub.s32 %s9, 1
      // Predicated region
      $region13: #{_lambda_.9} parent=11 // pred_check
        %p164 = pneg %p119
      $region14: #{_lambda_.9} parent=11 // pred_check_branch
        %166 = sbr.rel (%p164) target = $region16
      $region15: #{_lambda_.9} parent=11 // pred_region
        %p167 = scmp.lt.s32.totalorder %s22, 0
        %s168 = scalar_select %p167, %s22, 0
        %s169 = scalar_lea.vmem %s2, %s168
      $region16: #{_lambda_.9} parent=11 // pred_fallthru
        _
    $region12: #{_lambda_.9} parent=5 // pred_fallthru
      _
    %p170 = scmp.lt.s32.totalorder %s9, 192
    // Predicated region
    $region17: #{_lambda_.9} parent=5 // pred_check
      %p171 = pneg %p170
    $region18: #{_lambda_.9} parent=5 // pred_check_branch
      %173 = sbr.rel (%p171) target = $region20
    $region19: #{_lambda_.9} parent=5 // pred_region
      // Predicated region
      $region21: #{_lambda_.9} parent=19 // pred_check
        %p174 = pneg %p59
      $region22: #{_lambda_.9} parent=19 // pred_check_branch
        %176 = sbr.rel (%p174) target = $region24
      $region23: #{_lambda_.9} parent=19 // pred_region
        %s177 = sadd.s32 %s17, %s19
        %p178 = scmp.lt.s32.totalorder %s16, 3
        %s179 = scalar_select %p178, %s16, 3
        %p180 = scmp.lt.s32.totalorder %s177, 17
        %s181 = scalar_select %p180, %s177, 17
        %s182 = smul.addr %s181, 3
        %s183 = smul.addr %s179, 54
        %s184 = sadd.s32 %s182, %s183
        %s185 = smul.addr %s184, 4
        %s186 = scalar_lea.vmem %s0, %s185
        %s187 = sadd.s32 %s17, %s19
      $region24: #{_lambda_.9} parent=19 // pred_fallthru
        _
      // Predicated region
      $region25: #{_lambda_.9} parent=19 // pred_check
        %p188 = pneg %p87
      $region26: #{_lambda_.9} parent=19 // pred_check_branch
        %190 = sbr.rel (%p188) target = $region28
      $region27: #{_lambda_.9} parent=19 // pred_region
        %p191 = scmp.lt.s32.totalorder %s19, 2
        %s192 = scalar_select %p191, %s19, 2
        %p193 = scmp.lt.s32.totalorder %s18, 0
        %s194 = scalar_select %p193, %s18, 0
        %s195 = smul.addr %s192, 6
        %s196 = sadd.s32 %s194, %s195
        %s197 = smul.addr %s196, 4
        %s198 = scalar_lea.vmem %s1, %s197
      $region28: #{_lambda_.9} parent=19 // pred_fallthru
        _
    $region20: #{_lambda_.9} parent=5 // pred_fallthru
      _
    %p199 = scmp.le.s32.totalorder 1, %s9
    %p200 = scmp.lt.s32.totalorder %s9, 193
    %p201 = pnand %p199, %p200
    %p202 = pneg %p201
    // Predicated region
    $region29: #{_lambda_.9} parent=5 // pred_check
      _
    $region30: #{_lambda_.9} parent=5 // pred_check_branch
      %204 = sbr.rel (%p201) target = $region32
    $region31: #{_lambda_.9} parent=5 // pred_region
      %s205 = ssub.s32 %s9, 1
      %s206 = sadd.s32 %s21, %s23
      %p207 = scmp.lt.s32.totalorder %s20, 3
      %s208 = scalar_select %p207, %s20, 3
      %p209 = scmp.lt.s32.totalorder %s206, 17
      %s210 = scalar_select %p209, %s206, 17
      %s211 = smul.addr %s210, 3
      %s212 = smul.addr %s208, 54
      %s213 = sadd.s32 %s211, %s212
      %s214 = smul.addr %s213, 4
      %s215 = scalar_lea.vmem %s0, %s214
      %p216 = pneg %p65
      %p217 = pneg %p62
      %p218 = scmp.lt.s32.totalorder %s23, 2
      %s219 = scalar_select %p218, %s23, 2
      %p220 = scmp.lt.s32.totalorder %s22, 0
      %s221 = scalar_select %p220, %s22, 0
      %s222 = smul.addr %s219, 6
      %s223 = sadd.s32 %s221, %s222
      %s224 = smul.addr %s223, 4
      %s225 = scalar_lea.vmem %s1, %s224
      %p226 = pneg %p93
      %p227 = pneg %p90
      %p228 = scmp.lt.s32.totalorder %s22, 0
      %s229 = scalar_select %p228, %s22, 0
      %s230 = scalar_lea.vmem %s2, %s229
      %p231 = pneg %p119
      %p232 = pneg %p116
      %p233 = pneg %p149
      %p234 = pneg %p146
      %p235 = scmp.lt.s32.totalorder %s20, 3
      %s236 = scalar_select %p235, %s20, 3
      %p237 = scmp.lt.s32.totalorder %s21, 15
      %s238 = scalar_select %p237, %s21, 15
      %p239 = scmp.lt.s32.totalorder %s22, 0
      %s240 = scalar_select %p239, %s22, 0
      %s241 = smul.addr %s238, 2
      %s242 = sadd.s32 %s240, %s241
      %s243 = smul.addr %s236, 32
      %s244 = sadd.s32 %s242, %s243
      %s245 = smul.addr %s244, 4
      %s246 = scalar_lea.vmem %s3, %s245
      %s247 = sadd.s32 %s21, %s23
      %p248 = scmp.lt.s32.totalorder %s20, 3
      %s249 = scalar_select %p248, %s20, 3
      %p250 = scmp.lt.s32.totalorder %s247, 17
      %s251 = scalar_select %p250, %s247, 17
      %s252 = smul.addr %s251, 3
      %s253 = smul.addr %s249, 54
      %s254 = sadd.s32 %s252, %s253
      %s255 = smul.addr %s254, 4
      %s256 = scalar_lea.vmem %s0, %s255
      %s257 = sadd.s32 %s21, %s23
      %p258 = scmp.lt.s32.totalorder %s23, 2
      %s259 = scalar_select %p258, %s23, 2
      %p260 = scmp.lt.s32.totalorder %s22, 0
      %s261 = scalar_select %p260, %s22, 0
      %s262 = smul.addr %s259, 6
      %s263 = sadd.s32 %s261, %s262
      %s264 = smul.addr %s263, 4
      %s265 = scalar_lea.vmem %s1, %s264
      %p266 = scmp.lt.s32.totalorder %s22, 0
      %s267 = scalar_select %p266, %s22, 0
      %s268 = scalar_lea.vmem %s2, %s267
      %p269 = scmp.lt.s32.totalorder %s20, 3
      %s270 = scalar_select %p269, %s20, 3
      %p271 = scmp.lt.s32.totalorder %s21, 15
      %s272 = scalar_select %p271, %s21, 15
      %p273 = scmp.lt.s32.totalorder %s22, 0
      %s274 = scalar_select %p273, %s22, 0
      %s275 = smul.addr %s272, 2
      %s276 = sadd.s32 %s274, %s275
      %s277 = smul.addr %s270, 32
      %s278 = sadd.s32 %s276, %s277
      %s279 = smul.addr %s278, 4
      %s280 = scalar_lea.vmem %s3, %s279
      %p282 = scmp.eq.s32.totalorder %s23, 0
      // Predicated region
      $region33: #{_lambda_.9} parent=31 // pred_check
        %p283 = pneg %p282
      $region34: #{_lambda_.9} parent=31 // pred_check_branch
        %285 = sbr.rel (%p283) target = $region36
      $region35: #{_lambda_.9} parent=31 // pred_region
        %vm286 = vcmask 261120
        %287 = vst.msk [vmem:[#allocation2] sm:$0xff] %vm286, 0.0
        %288 = vst.msk [vmem:[#allocation2 + $0x8] sm:$0xff] %vm286, 0.0
      $region36: #{_lambda_.9} parent=31 // pred_fallthru
        _
      %v289 = vld [vmem:[#allocation2] sm:$0xff]
      %v290 = vld [vmem:[#allocation2 + $0x8] sm:$0xff]
      %v291 = vld [vmem:[%s256] sm:$0xf]
      %v292 = vld [vmem:[%s256 + $0x4] sm:$0xf]
      %v293 = vld [vmem:[%s265] sm:$0xf]
      %v294 = vld [vmem:[%s265 + $0x4] sm:$0xf]
      %v297 = vunpack.c.l.b16 %v291
      %v298 = vunpack.c.l.b16 %v292
      %v299 = vpack.c.b16 %v298, %v297
      %v302 = vunpack.c.l.b16 %v293
      %v303 = vunpack.c.l.b16 %v294
      %v304 = vpack.c.b16 %v303, %v302
      %vm306 = vcmask 130048
      %v308 = vsel %vm306, %v299, 0
      %310 = vmatprep.subr.bf16.mxu0 0
      %311 = vmatpush1.bf16.msra.mxu0 0
      %312 = vmatprep.subr.bf16.mxu0 0
      %313 = vmatpush1.bf16.msra.mxu0 0
      %314 = vmatprep.subr.bf16.mxu0 0
      %315 = vmatpush1.bf16.msra.mxu0 0
      %316 = vmatprep.subr.bf16.mxu0 0
      %317 = vmatpush1.bf16.msra.mxu0 0
      %318 = vmatprep.subr.bf16.mxu0 0
      %319 = vmatpush1.bf16.msra.mxu0 0
      %320 = vmatprep.subr.bf16.mxu0 0
      %321 = vmatpush1.bf16.msra.mxu0 0
      %322 = vmatprep.subr.bf16.mxu0 0
      %323 = vmatpush1.bf16.msra.mxu0 0
      %324 = vmatprep.subr.bf16.mxu0 0
      %325 = vmatpush1.bf16.msra.mxu0 %v304
      %326 = vmatprep.subr.bf16.mxu0 0
      %327 = vmatpush2.bf16.msra.mxu0 0
      %328 = vmatprep.subr.bf16.mxu0 0
      %329 = vmatpush2.bf16.msra.mxu0 0
      %330 = vmatprep.subr.bf16.mxu0 0
      %331 = vmatpush2.bf16.msra.mxu0 0
      %332 = vmatprep.subr.bf16.mxu0 0
      %333 = vmatpush2.bf16.msra.mxu0 0
      %334 = vmatprep.subr.bf16.mxu0 0
      %335 = vmatpush2.bf16.msra.mxu0 0
      %336 = vmatprep.subr.bf16.mxu0 0
      %337 = vmatpush2.bf16.msra.mxu0 0
      %338 = vmatprep.subr.bf16.mxu0 0
      %339 = vmatpush2.bf16.msra.mxu0 0
      %340 = vmatprep.subr.bf16.mxu0 0
      %341 = vmatpush2.bf16.msra.mxu0 0
      %342 = vmatprep.mubr.bf16.mxu0 0
      %343 = vmatmul.mubr.bf16.gmra.mxu0 %v308
      %v344 = vpop.f32.mrf.mxu0
      %v345 = vadd.f32 0.0, %v344
      %v346 = vpop.f32.mrf.mxu0
      %v347 = vpop.f32.mrf.mxu0
      %v348 = vadd.f32 0.0, %v347
      %v349 = vpop.f32.mrf.mxu0
      %350 = vdwg.mxu0
      %v351 = vadd.f32 %v289, %v345
      %v352 = vadd.f32 %v290, %v348
      %v353 = vld [vmem:[%s256] sm:$0xf]
      %v354 = vld [vmem:[%s256 + $0x4] sm:$0xf]
      %v355 = vld [vmem:[%s256 + $0x8] sm:$0x1]
      %s356 = scalar_lea.vmem %s265, 8
      %v357 = vld [vmem:[%s356] sm:$0xf]
      %v358 = vld [vmem:[%s356 + $0x4] sm:$0xf]
      %v362 = vunpack.c.l.b16 %v353
      %v363 = vunpack.c.l.b16 %v354
      %v364 = vunpack.c.l.b16 %v355
      %v365 = vpack.c.b16 %v363, %v362
      %v366 = vpack.c.b16 %v364, %v364
      %vm367 = vsmask.f32 7424
      %v369 = vshrl.u32 %v365, 16
      %v371 = vshll.u32 %v365, 16
      %v373 = vrot.slane %v371, 1
      %v374 = vor.u32 %v369, %v373
      %v376 = vshll.u32 %v366, 16
      %v378 = vrot.slane %v376, 1
      %v379 = vsel %vm367, %v374, %v378
      %v382 = vunpack.c.l.b16 %v357
      %v383 = vunpack.c.l.b16 %v358
      %v384 = vpack.c.b16 %v383, %v382
      %v387 = vsel %vm306, %v379, 0
      %389 = vmatprep.subr.bf16.mxu0 0
      %390 = vmatpush1.bf16.msra.mxu0 0
      %391 = vmatprep.subr.bf16.mxu0 0
      %392 = vmatpush1.bf16.msra.mxu0 0
      %393 = vmatprep.subr.bf16.mxu0 0
      %394 = vmatpush1.bf16.msra.mxu0 0
      %395 = vmatprep.subr.bf16.mxu0 0
      %396 = vmatpush1.bf16.msra.mxu0 0
      %397 = vmatprep.subr.bf16.mxu0 0
      %398 = vmatpush1.bf16.msra.mxu0 0
      %399 = vmatprep.subr.bf16.mxu0 0
      %400 = vmatpush1.bf16.msra.mxu0 0
      %401 = vmatprep.subr.bf16.mxu0 0
      %402 = vmatpush1.bf16.msra.mxu0 0
      %403 = vmatprep.subr.bf16.mxu0 0
      %404 = vmatpush1.bf16.msra.mxu0 %v384
      %405 = vmatprep.subr.bf16.mxu0 0
      %406 = vmatpush2.bf16.msra.mxu0 0
      %407 = vmatprep.subr.bf16.mxu0 0
      %408 = vmatpush2.bf16.msra.mxu0 0
      %409 = vmatprep.subr.bf16.mxu0 0
      %410 = vmatpush2.bf16.msra.mxu0 0
      %411 = vmatprep.subr.bf16.mxu0 0
      %412 = vmatpush2.bf16.msra.mxu0 0
      %413 = vmatprep.subr.bf16.mxu0 0
      %414 = vmatpush2.bf16.msra.mxu0 0
      %415 = vmatprep.subr.bf16.mxu0 0
      %416 = vmatpush2.bf16.msra.mxu0 0
      %417 = vmatprep.subr.bf16.mxu0 0
      %418 = vmatpush2.bf16.msra.mxu0 0
      %419 = vmatprep.subr.bf16.mxu0 0
      %420 = vmatpush2.bf16.msra.mxu0 0
      %421 = vmatprep.mubr.bf16.mxu0 0
      %422 = vmatmul.mubr.bf16.gmra.mxu0 %v387
      %v423 = vpop.f32.mrf.mxu0
      %v424 = vadd.f32 0.0, %v423
      %v425 = vpop.f32.mrf.mxu0
      %v426 = vpop.f32.mrf.mxu0
      %v427 = vadd.f32 0.0, %v426
      %v428 = vpop.f32.mrf.mxu0
      %429 = vdwg.mxu0
      %v430 = vadd.f32 %v351, %v424
      %v431 = vadd.f32 %v352, %v427
      %v432 = vld [vmem:[%s256] sm:$0xe]
      %s433 = scalar_lea.vmem %s265, 16
      %v434 = vld [vmem:[%s433] sm:$0xf]
      %v435 = vld [vmem:[%s433 + $0x4] sm:$0xf]
      %v437 = vunpack.c.l.b16 %v432
      %v438 = vpack.c.b16 %v363, %v437
      %vm439 = vcmask 1046528
      %v440 = vrot.slane %v438, 1
      %v441 = vrot.slane %v366, 1
      %v442 = vsel %vm439, %v440, %v441
      %v445 = vunpack.c.l.b16 %v434
      %v446 = vunpack.c.l.b16 %v435
      %v447 = vpack.c.b16 %v446, %v445
      %v450 = vsel %vm306, %v442, 0
      %452 = vmatprep.subr.bf16.mxu0 0
      %453 = vmatpush1.bf16.msra.mxu0 0
      %454 = vmatprep.subr.bf16.mxu0 0
      %455 = vmatpush1.bf16.msra.mxu0 0
      %456 = vmatprep.subr.bf16.mxu0 0
      %457 = vmatpush1.bf16.msra.mxu0 0
      %458 = vmatprep.subr.bf16.mxu0 0
      %459 = vmatpush1.bf16.msra.mxu0 0
      %460 = vmatprep.subr.bf16.mxu0 0
      %461 = vmatpush1.bf16.msra.mxu0 0
      %462 = vmatprep.subr.bf16.mxu0 0
      %463 = vmatpush1.bf16.msra.mxu0 0
      %464 = vmatprep.subr.bf16.mxu0 0
      %465 = vmatpush1.bf16.msra.mxu0 0
      %466 = vmatprep.subr.bf16.mxu0 0
      %467 = vmatpush1.bf16.msra.mxu0 %v447
      %468 = vmatprep.subr.bf16.mxu0 0
      %469 = vmatpush2.bf16.msra.mxu0 0
      %470 = vmatprep.subr.bf16.mxu0 0
      %471 = vmatpush2.bf16.msra.mxu0 0
      %472 = vmatprep.subr.bf16.mxu0 0
      %473 = vmatpush2.bf16.msra.mxu0 0
      %474 = vmatprep.subr.bf16.mxu0 0
      %475 = vmatpush2.bf16.msra.mxu0 0
      %476 = vmatprep.subr.bf16.mxu0 0
      %477 = vmatpush2.bf16.msra.mxu0 0
      %478 = vmatprep.subr.bf16.mxu0 0
      %479 = vmatpush2.bf16.msra.mxu0 0
      %480 = vmatprep.subr.bf16.mxu0 0
      %481 = vmatpush2.bf16.msra.mxu0 0
      %482 = vmatprep.subr.bf16.mxu0 0
      %483 = vmatpush2.bf16.msra.mxu0 0
      %484 = vmatprep.mubr.bf16.mxu0 0
      %485 = vmatmul.mubr.bf16.gmra.mxu0 %v450
      %v486 = vpop.f32.mrf.mxu0
      %v487 = vadd.f32 0.0, %v486
      %v488 = vpop.f32.mrf.mxu0
      %v489 = vpop.f32.mrf.mxu0
      %v490 = vadd.f32 0.0, %v489
      %v491 = vpop.f32.mrf.mxu0
      %492 = vdwg.mxu0
      %v493 = vadd.f32 %v430, %v487
      %v494 = vadd.f32 %v431, %v490
      %vm495 = vcmask 261120
      %496 = vst.msk [vmem:[#allocation2] sm:$0xff] %vm495, %v493
      %497 = vst.msk [vmem:[#allocation2 + $0x8] sm:$0xff] %vm495, %v494
      %p498 = scmp.eq.s32.totalorder %s23, 2
      // Predicated region
      $region37: #{_lambda_.9} parent=31 // pred_check
        %p499 = pneg %p498
      $region38: #{_lambda_.9} parent=31 // pred_check_branch
        %501 = sbr.rel (%p499) target = $region40
      $region39: #{_lambda_.9} parent=31 // pred_region
        %v502 = vld [vmem:[#allocation2] sm:$0xff]
        %v503 = vld [vmem:[#allocation2 + $0x8] sm:$0xff]
        %v504 = vld [vmem:[%s268] sm:$0x1]
        %v506 = vlaneseq
        %v507 = vshrl.u32 %v506, 7
        %v508 = vsub.s32 0, %v507
        %v509 = vrot.slane %v504, %v508
        %v511 = vadd.f32 %v502, %v509
        %v512 = vadd.f32 %v503, %v509
        %v513 = vpack.c.bf16 %v512, %v511
        %v515 = vunpack.c.l.b16 %v513
        %v516 = vunpack.c.h.b16 %v513
        %v517 = vpack.c.b16 %v515, %v515
        %v518 = vpack.c.b16 %v516, %v516
        %vm521 = vcmask 257024
        %522 = vst.msk [vmem:[%s280] sm:$0xf] %vm521, %v517
        %523 = vst.msk [vmem:[%s280 + $0x4] sm:$0xf] %vm521, %v518
      $region40: #{_lambda_.9} parent=31 // pred_fallthru
        _
      %p524 = scmp.lt.s32.totalorder %s20, 3
      %s525 = scalar_select %p524, %s20, 3
      %p526 = scmp.lt.s32.totalorder %s21, 15
      %s527 = scalar_select %p526, %s21, 15
      %p528 = scmp.lt.s32.totalorder %s22, 0
      %s529 = scalar_select %p528, %s22, 0
      %s530 = smul.addr %s527, 2
      %s531 = sadd.s32 %s529, %s530
      %s532 = smul.addr %s525, 32
      %s533 = sadd.s32 %s531, %s532
      %s534 = smul.addr %s533, 4
      %s535 = scalar_lea.vmem %s3, %s534
      // Predicated region
      $region41: #{_lambda_.9} parent=31 // pred_check
        %p536 = pneg %p146
      $region42: #{_lambda_.9} parent=31 // pred_check_branch
        %538 = sbr.rel (%p536) target = $region44
      $region43: #{_lambda_.9} parent=31 // pred_region
        _
      $region44: #{_lambda_.9} parent=31 // pred_fallthru
        _
    $region32: #{_lambda_.9} parent=5 // pred_fallthru
      _
    %p539 = scmp.le.s32.totalorder 2, %s9
    // Predicated region
    $region45: #{_lambda_.9} parent=5 // pred_check
      %p540 = pneg %p539
    $region46: #{_lambda_.9} parent=5 // pred_check_branch
      %542 = sbr.rel (%p540) target = $region48
    $region47: #{_lambda_.9} parent=5 // pred_region
      %s543 = ssub.s32 %s9, 2
      // Predicated region
      $region49: #{_lambda_.9} parent=47 // pred_check
        %p544 = pneg %p152
      $region50: #{_lambda_.9} parent=47 // pred_check_branch
        %546 = sbr.rel (%p544) target = $region52
      $region51: #{_lambda_.9} parent=47 // pred_region
        %p547 = scmp.lt.s32.totalorder %s24, 3
        %s548 = scalar_select %p547, %s24, 3
        %p549 = scmp.lt.s32.totalorder %s25, 15
        %s550 = scalar_select %p549, %s25, 15
        %p551 = scmp.lt.s32.totalorder %s26, 0
        %s552 = scalar_select %p551, %s26, 0
        %s553 = smul.addr %s550, 2
        %s554 = sadd.s32 %s552, %s553
        %s555 = smul.addr %s548, 32
        %s556 = sadd.s32 %s554, %s555
        %s557 = smul.addr %s556, 4
        %s558 = scalar_lea.vmem %s3, %s557
      $region52: #{_lambda_.9} parent=47 // pred_fallthru
        _
    $region48: #{_lambda_.9} parent=5 // pred_fallthru
      _
  $region6: #{_lambda_.9} parent=0 // loop_footer
    %s13 = sadd.s32 1, %s9
  $region7: #{_lambda_.9} parent=0 // loop_footer_branch
    %8 = sbr.rel target = $region3
  $region8: #{_lambda_.9} parent=0 // loop_exit
    _

// kernel: _lambda_.10
$region0: #{_lambda_.10}
  #allocation0 [shape = 'u32[]', space=smem, size = 0x4, offset = 0x4, fixed_abs, tag = 'smem constant byte address 0x4 - core index']
  #allocation1 [shape = 'u32[144,128]{1,0:T(1,128)}', space=vmem, size = 0x12000, scoped, tag = 'internal scratch']
  #allocation2 [shape = 'f32[256,32]{1,0:T(8,128)}', space=vmem, size = 0x20000, scoped, tag = 'scratch operand']
  %s0 = inlined_call_operand.vmem [shape: bf16[2,4,256,32], index: 0, kind: input, shape index: {}]
  %s1 = inlined_call_operand.vmem [shape: bf16[3,32,32], index: 1, kind: input, shape index: {}]
  %s2 = inlined_call_operand.vmem [shape: f32[1,32], index: 2, kind: input, shape index: {}]
  %s3 = inlined_call_operand.vmem [shape: f32[2,2,256,32], index: 3, kind: output, shape index: {}]
  %s4 = sld [smem:[#allocation0]]
  $region53: #{_lambda_.10} parent=0
    _
  %s6 = ssub.s32 1, %s4
  %s7 = scalar_select 0, %s6, %s4
  loop: start=0, step=1, limit=14
  $region2: #{_lambda_.10} parent=0 // loop_pre_header
    _
  $region3: #{_lambda_.10} parent=0 // loop_header
    %s9 = sphi 0, %s13
    %p10 = scmp.ge.s32.totalorder %s9, 14
    %s16 = sphi 0, %s42
    %s17 = sphi 0, %s38
    %s18 = sphi 0, %s34
    %s19 = sphi 0, %s30
    %s20 = sphi 0, %s16
    %s21 = sphi 0, %s17
    %s22 = sphi 0, %s18
    %s23 = sphi 0, %s19
    %s24 = sphi 0, %s20
    %s25 = sphi 0, %s21
    %s26 = sphi 0, %s22
    %s27 = sphi 0, %s23
    %s51 = sphi 0, %s53
    %s54 = sphi 0, %s51
    %s55 = sphi 0, %s54
    %s71 = sphi 0, %s55
    %s77 = sphi 0, %s79
    %s80 = sphi 0, %s77
    %s81 = sphi 0, %s80
    %s97 = sphi 0, %s81
    %s101 = sphi 0, %s101
    %s103 = sphi 0, %s101
    %s104 = sphi 0, %s103
    %s118 = sphi 0, %s104
    %s128 = sphi 0, %s130
    %s131 = sphi 0, %s128
    %s132 = sphi 0, %s131
    %s148 = sphi 0, %s132
  $region4: #{_lambda_.10} parent=0 // loop_header_branch
    %12 = sbr.rel (%p10) target = $region8
  $region5: #{_lambda_.10} parent=0 // loop_body
    %s14 = ssub.s32 %s9, 1
    %s15 = ssub.s32 %s9, 2
    %s28 = sadd.s32 1, %s19
    %p29 = scmp.ge.s32.totalorder %s28, 3
    %s30 = scalar_select %p29, 0, %s28
    %s31 = sadd.s32 1, %s18
    %s32 = scalar_select %p29, %s31, %s18
    %p33 = scmp.ge.s32.totalorder %s32, 1
    %s34 = scalar_select %p33, 0, %s32
    %s35 = sadd.s32 1, %s17
    %s36 = scalar_select %p33, %s35, %s17
    %p37 = scmp.ge.s32.totalorder %s36, 2
    %s38 = scalar_select %p37, 0, %s36
    %s39 = sadd.s32 1, %s16
    %s40 = scalar_select %p37, %s39, %s16
    %p41 = scmp.ge.s32.totalorder %s40, 2
    %s42 = scalar_select %p41, 0, %s40
    %s43 = sadd.s32 %s17, %s19
    %s44 = sadd.s32 %s38, %s30
    %s45 = ssub.s32 %s16, %s42
    %s46 = ssub.s32 %s43, %s44
    %s47 = sor.u32 %s45, %s46
    %s48 = ssub.s32 %s18, %s34
    %s49 = sor.u32 %s47, %s48
    %p50 = scmp.eq.s32.totalorder %s49, 0
    %s52 = sadd.s32 %s51, 1
    %s53 = scalar_select %p50, %s51, %s52
    %p56 = pneg %p50
    %p57 = scmp.eq.s32.totalorder %s9, 11
    %p58 = por %p56, %p57
    %p59 = scmp.ne.s32.totalorder %s51, %s54
    %p60 = scmp.eq.s32.totalorder %s9, 0
    %p61 = por %p59, %p60
    %p62 = scmp.ne.s32.totalorder %s51, %s54
    %p63 = scmp.eq.s32.totalorder %s14, 11
    %p64 = por %p62, %p63
    %p65 = scmp.ne.s32.totalorder %s54, %s55
    %p66 = scmp.eq.s32.totalorder %s14, 0
    %p67 = por %p65, %p66
    %p68 = scmp.ne.s32.totalorder %s54, %s55
    %p69 = scmp.eq.s32.totalorder %s15, 11
    %p70 = por %p68, %p69
    %p72 = scmp.ne.s32.totalorder %s55, %s71
    %p73 = scmp.eq.s32.totalorder %s15, 0
    %p74 = por %p72, %p73
    %s75 = ssub.s32 %s19, %s30
    %p76 = scmp.eq.s32.totalorder %s75, 0
    %s78 = sadd.s32 %s77, 1
    %s79 = scalar_select %p76, %s77, %s78
    %p82 = pneg %p76
    %p83 = scmp.eq.s32.totalorder %s9, 11
    %p84 = por %p82, %p83
    %p85 = scmp.ne.s32.totalorder %s77, %s80
    %p86 = scmp.eq.s32.totalorder %s9, 0
    %p87 = por %p85, %p86
    %p88 = scmp.ne.s32.totalorder %s77, %s80
    %p89 = scmp.eq.s32.totalorder %s14, 11
    %p90 = por %p88, %p89
    %p91 = scmp.ne.s32.totalorder %s80, %s81
    %p92 = scmp.eq.s32.totalorder %s14, 0
    %p93 = por %p91, %p92
    %p94 = scmp.ne.s32.totalorder %s80, %s81
    %p95 = scmp.eq.s32.totalorder %s15, 11
    %p96 = por %p94, %p95
    %p98 = scmp.ne.s32.totalorder %s81, %s97
    %p99 = scmp.eq.s32.totalorder %s15, 0
    %p100 = por %p98, %p99
    %s102 = sadd.s32 %s101, 1
    %p105 = scmp.eq.s32.totalorder %s9, 11
    %p106 = scmp.ne.s32.totalorder %s101, %s103
    %p107 = scmp.eq.s32.totalorder %s9, 0
    %p108 = por %p106, %p107
    %p109 = scmp.ne.s32.totalorder %s101, %s103
    %p110 = scmp.eq.s32.totalorder %s14, 11
    %p111 = por %p109, %p110
    %p112 = scmp.ne.s32.totalorder %s103, %s104
    %p113 = scmp.eq.s32.totalorder %s14, 0
    %p114 = por %p112, %p113
    %p115 = scmp.ne.s32.totalorder %s103, %s104
    %p116 = scmp.eq.s32.totalorder %s15, 11
    %p117 = por %p115, %p116
    %p119 = scmp.ne.s32.totalorder %s104, %s118
    %p120 = scmp.eq.s32.totalorder %s15, 0
    %p121 = por %p119, %p120
    %s122 = ssub.s32 %s16, %s42
    %s123 = ssub.s32 %s17, %s38
    %s124 = sor.u32 %s122, %s123
    %s125 = ssub.s32 %s18, %s34
    %s126 = sor.u32 %s124, %s125
    %p127 = scmp.eq.s32.totalorder %s126, 0
    %s129 = sadd.s32 %s128, 1
    %s130 = scalar_select %p127, %s128, %s129
    %p133 = pneg %p127
    %p134 = scmp.eq.s32.totalorder %s9, 11
    %p135 = por %p133, %p134
    %p136 = scmp.ne.s32.totalorder %s128, %s131
    %p137 = scmp.eq.s32.totalorder %s9, 0
    %p138 = por %p136, %p137
    %p139 = scmp.ne.s32.totalorder %s128, %s131
    %p140 = scmp.eq.s32.totalorder %s14, 11
    %p141 = por %p139, %p140
    %p142 = scmp.ne.s32.totalorder %s131, %s132
    %p143 = scmp.eq.s32.totalorder %s14, 0
    %p144 = por %p142, %p143
    %p145 = scmp.ne.s32.totalorder %s131, %s132
    %p146 = scmp.eq.s32.totalorder %s15, 11
    %p147 = por %p145, %p146
    %p149 = scmp.ne.s32.totalorder %s132, %s148
    %p150 = scmp.eq.s32.totalorder %s15, 0
    %p151 = por %p149, %p150
    %p152 = scmp.le.s32.totalorder 1, %s9
    %p153 = scmp.lt.s32.totalorder %s9, 13
    %p154 = pnand %p152, %p153
    %p155 = pneg %p154
    // Predicated region
    $region9: #{_lambda_.10} parent=5 // pred_check
      _
    $region10: #{_lambda_.10} parent=5 // pred_check_branch
      %157 = sbr.rel (%p154) target = $region12
    $region11: #{_lambda_.10} parent=5 // pred_region
      %s158 = ssub.s32 %s9, 1
      // Predicated region
      $region13: #{_lambda_.10} parent=11 // pred_check
        %p159 = pneg %p114
      $region14: #{_lambda_.10} parent=11 // pred_check_branch
        %161 = sbr.rel (%p159) target = $region16
      $region15: #{_lambda_.10} parent=11 // pred_region
        _
      $region16: #{_lambda_.10} parent=11 // pred_fallthru
        _
    $region12: #{_lambda_.10} parent=5 // pred_fallthru
      _
    %p162 = scmp.lt.s32.totalorder %s9, 12
    // Predicated region
    $region17: #{_lambda_.10} parent=5 // pred_check
      %p163 = pneg %p162
    $region18: #{_lambda_.10} parent=5 // pred_check_branch
      %165 = sbr.rel (%p163) target = $region20
    $region19: #{_lambda_.10} parent=5 // pred_region
      // Predicated region
      $region21: #{_lambda_.10} parent=19 // pred_check
        %p166 = pneg %p61
      $region22: #{_lambda_.10} parent=19 // pred_check_branch
        %168 = sbr.rel (%p166) target = $region24
      $region23: #{_lambda_.10} parent=19 // pred_region
        %s169 = sadd.s32 %s17, %s19
        %s170 = smul.u32 32, %s18
        %p171 = scmp.lt.s32.totalorder %s16, 1
        %s172 = scalar_select %p171, %s16, 1
        %p173 = scmp.lt.s32.totalorder %s169, 3
        %s174 = scalar_select %p173, %s169, 3
        %p175 = scmp.lt.s32.totalorder %s170, 31
        %s176 = scalar_select %p175, %s170, 31
        %s177 = smul.addr %s174, 32
        %s178 = sadd.s32 %s176, %s177
        %s179 = smul.addr %s172, 128
        %s180 = sadd.s32 %s178, %s179
        %s181 = smul.addr %s180, 4
        %s182 = scalar_lea.vmem %s0, %s181
        %s183 = sadd.s32 %s17, %s19
        %s184 = smul.u32 32, %s18
      $region24: #{_lambda_.10} parent=19 // pred_fallthru
        _
      // Predicated region
      $region25: #{_lambda_.10} parent=19 // pred_check
        %p185 = pneg %p87
      $region26: #{_lambda_.10} parent=19 // pred_check_branch
        %187 = sbr.rel (%p185) target = $region28
      $region27: #{_lambda_.10} parent=19 // pred_region
        %p188 = scmp.lt.s32.totalorder %s19, 2
        %s189 = scalar_select %p188, %s19, 2
        %s190 = smul.addr %s189, 4
        %s191 = smul.addr %s190, 4
        %s192 = scalar_lea.vmem %s1, %s191
      $region28: #{_lambda_.10} parent=19 // pred_fallthru
        _
    $region20: #{_lambda_.10} parent=5 // pred_fallthru
      _
    %p193 = scmp.le.s32.totalorder 1, %s9
    %p194 = scmp.lt.s32.totalorder %s9, 13
    %p195 = pnand %p193, %p194
    %p196 = pneg %p195
    // Predicated region
    $region29: #{_lambda_.10} parent=5 // pred_check
      _
    $region30: #{_lambda_.10} parent=5 // pred_check_branch
      %198 = sbr.rel (%p195) target = $region32
    $region31: #{_lambda_.10} parent=5 // pred_region
      %s199 = ssub.s32 %s9, 1
      %s200 = sadd.s32 %s21, %s23
      %s201 = smul.u32 32, %s22
      %p202 = scmp.lt.s32.totalorder %s20, 1
      %s203 = scalar_select %p202, %s20, 1
      %p204 = scmp.lt.s32.totalorder %s200, 3
      %s205 = scalar_select %p204, %s200, 3
      %p206 = scmp.lt.s32.totalorder %s201, 31
      %s207 = scalar_select %p206, %s201, 31
      %s208 = smul.addr %s205, 32
      %s209 = sadd.s32 %s207, %s208
      %s210 = smul.addr %s203, 128
      %s211 = sadd.s32 %s209, %s210
      %s212 = smul.addr %s211, 4
      %s213 = scalar_lea.vmem %s0, %s212
      %p214 = pneg %p67
      %p215 = pneg %p64
      %p216 = scmp.lt.s32.totalorder %s23, 2
      %s217 = scalar_select %p216, %s23, 2
      %s218 = smul.addr %s217, 4
      %s219 = smul.addr %s218, 4
      %s220 = scalar_lea.vmem %s1, %s219
      %p221 = pneg %p93
      %p222 = pneg %p90
      %p223 = pneg %p114
      %p224 = pneg %p111
      %p225 = pneg %p144
      %p226 = pneg %p141
      %s227 = smul.u32 32, %s22
      %p228 = scmp.lt.s32.totalorder %s20, 1
      %s229 = scalar_select %p228, %s20, 1
      %p230 = scmp.lt.s32.totalorder %s21, 1
      %s231 = scalar_select %p230, %s21, 1
      %p232 = scmp.lt.s32.totalorder %s227, 31
      %s233 = scalar_select %p232, %s227, 31
      %s234 = smul.addr %s231, 32
      %s235 = sadd.s32 %s233, %s234
      %s236 = smul.addr %s229, 64
      %s237 = sadd.s32 %s235, %s236
      %s238 = smul.addr %s237, 8
      %s239 = scalar_lea.vmem %s3, %s238
      %s240 = sadd.s32 %s21, %s23
      %s241 = smul.u32 32, %s22
      %p242 = scmp.lt.s32.totalorder %s20, 1
      %s243 = scalar_select %p242, %s20, 1
      %p244 = scmp.lt.s32.totalorder %s240, 3
      %s245 = scalar_select %p244, %s240, 3
      %p246 = scmp.lt.s32.totalorder %s241, 31
      %s247 = scalar_select %p246, %s241, 31
      %s248 = smul.addr %s245, 32
      %s249 = sadd.s32 %s247, %s248
      %s250 = smul.addr %s243, 128
      %s251 = sadd.s32 %s249, %s250
      %s252 = smul.addr %s251, 4
      %s253 = scalar_lea.vmem %s0, %s252
      %s254 = sadd.s32 %s21, %s23
      %s255 = smul.u32 32, %s22
      %p256 = scmp.lt.s32.totalorder %s23, 2
      %s257 = scalar_select %p256, %s23, 2
      %s258 = smul.addr %s257, 4
      %s259 = smul.addr %s258, 4
      %s260 = scalar_lea.vmem %s1, %s259
      %s261 = smul.u32 32, %s22
      %p262 = scmp.lt.s32.totalorder %s20, 1
      %s263 = scalar_select %p262, %s20, 1
      %p264 = scmp.lt.s32.totalorder %s21, 1
      %s265 = scalar_select %p264, %s21, 1
      %p266 = scmp.lt.s32.totalorder %s261, 31
      %s267 = scalar_select %p266, %s261, 31
      %s268 = smul.addr %s265, 32
      %s269 = sadd.s32 %s267, %s268
      %s270 = smul.addr %s263, 64
      %s271 = sadd.s32 %s269, %s270
      %s272 = smul.addr %s271, 8
      %s273 = scalar_lea.vmem %s3, %s272
      %s274 = smul.u32 32, %s22
      %p276 = scmp.eq.s32.totalorder %s23, 0
      // Predicated region
      $region33: #{_lambda_.10} parent=31 // pred_check
        %p277 = pneg %p276
      $region34: #{_lambda_.10} parent=31 // pred_check_branch
        %279 = sbr.rel (%p277) target = $region36
      $region35: #{_lambda_.10} parent=31 // pred_region
        %vm280 = vcmask 261120
        %281 = vst.msk [vmem:[#allocation2] sm:$0xff] %vm280, 0.0
        %282 = vst.msk [vmem:[#allocation2 + $0x8] sm:$0xff] %vm280, 0.0
        %283 = vst.msk [vmem:[#allocation2 + $0x10] sm:$0xff] %vm280, 0.0
        %284 = vst.msk [vmem:[#allocation2 + $0x18] sm:$0xff] %vm280, 0.0
        %285 = vst.msk [vmem:[#allocation2 + $0x20] sm:$0xff] %vm280, 0.0
        %286 = vst.msk [vmem:[#allocation2 + $0x28] sm:$0xff] %vm280, 0.0
        %287 = vst.msk [vmem:[#allocation2 + $0x30] sm:$0xff] %vm280, 0.0
        %288 = vst.msk [vmem:[#allocation2 + $0x38] sm:$0xff] %vm280, 0.0
        %289 = vst.msk [vmem:[#allocation2 + $0x40] sm:$0xff] %vm280, 0.0
        %290 = vst.msk [vmem:[#allocation2 + $0x48] sm:$0xff] %vm280, 0.0
        %291 = vst.msk [vmem:[#allocation2 + $0x50] sm:$0xff] %vm280, 0.0
        %292 = vst.msk [vmem:[#allocation2 + $0x58] sm:$0xff] %vm280, 0.0
        %293 = vst.msk [vmem:[#allocation2 + $0x60] sm:$0xff] %vm280, 0.0
        %294 = vst.msk [vmem:[#allocation2 + $0x68] sm:$0xff] %vm280, 0.0
        %295 = vst.msk [vmem:[#allocation2 + $0x70] sm:$0xff] %vm280, 0.0
        %296 = vst.msk [vmem:[#allocation2 + $0x78] sm:$0xff] %vm280, 0.0
        %297 = vst.msk [vmem:[#allocation2 + $0x80] sm:$0xff] %vm280, 0.0
        %298 = vst.msk [vmem:[#allocation2 + $0x88] sm:$0xff] %vm280, 0.0
        %299 = vst.msk [vmem:[#allocation2 + $0x90] sm:$0xff] %vm280, 0.0
        %300 = vst.msk [vmem:[#allocation2 + $0x98] sm:$0xff] %vm280, 0.0
        %301 = vst.msk [vmem:[#allocation2 + $0xa0] sm:$0xff] %vm280, 0.0
        %302 = vst.msk [vmem:[#allocation2 + $0xa8] sm:$0xff] %vm280, 0.0
        %303 = vst.msk [vmem:[#allocation2 + $0xb0] sm:$0xff] %vm280, 0.0
        %304 = vst.msk [vmem:[#allocation2 + $0xb8] sm:$0xff] %vm280, 0.0
        %305 = vst.msk [vmem:[#allocation2 + $0xc0] sm:$0xff] %vm280, 0.0
        %306 = vst.msk [vmem:[#allocation2 + $0xc8] sm:$0xff] %vm280, 0.0
        %307 = vst.msk [vmem:[#allocation2 + $0xd0] sm:$0xff] %vm280, 0.0
        %308 = vst.msk [vmem:[#allocation2 + $0xd8] sm:$0xff] %vm280, 0.0
        %309 = vst.msk [vmem:[#allocation2 + $0xe0] sm:$0xff] %vm280, 0.0
        %310 = vst.msk [vmem:[#allocation2 + $0xe8] sm:$0xff] %vm280, 0.0
        %311 = vst.msk [vmem:[#allocation2 + $0xf0] sm:$0xff] %vm280, 0.0
        %312 = vst.msk [vmem:[#allocation2 + $0xf8] sm:$0xff] %vm280, 0.0
      $region36: #{_lambda_.10} parent=31 // pred_fallthru
        _
      %v313 = vld [vmem:[#allocation2] sm:$0xff]
      %v314 = vld [vmem:[#allocation2 + $0x8] sm:$0xff]
      %v315 = vld [vmem:[#allocation2 + $0x10] sm:$0xff]
      %v316 = vld [vmem:[#allocation2 + $0x18] sm:$0xff]
      %v317 = vld [vmem:[#allocation2 + $0x20] sm:$0xff]
      %v318 = vld [vmem:[#allocation2 + $0x28] sm:$0xff]
      %v319 = vld [vmem:[#allocation2 + $0x30] sm:$0xff]
      %v320 = vld [vmem:[#allocation2 + $0x38] sm:$0xff]
      %v321 = vld [vmem:[#allocation2 + $0x40] sm:$0xff]
      %v322 = vld [vmem:[#allocation2 + $0x48] sm:$0xff]
      %v323 = vld [vmem:[#allocation2 + $0x50] sm:$0xff]
      %v324 = vld [vmem:[#allocation2 + $0x58] sm:$0xff]
      %v325 = vld [vmem:[#allocation2 + $0x60] sm:$0xff]
      %v326 = vld [vmem:[#allocation2 + $0x68] sm:$0xff]
      %v327 = vld [vmem:[#allocation2 + $0x70] sm:$0xff]
      %v328 = vld [vmem:[#allocation2 + $0x78] sm:$0xff]
      %v329 = vld [vmem:[#allocation2 + $0x80] sm:$0xff]
      %v330 = vld [vmem:[#allocation2 + $0x88] sm:$0xff]
      %v331 = vld [vmem:[#allocation2 + $0x90] sm:$0xff]
      %v332 = vld [vmem:[#allocation2 + $0x98] sm:$0xff]
      %v333 = vld [vmem:[#allocation2 + $0xa0] sm:$0xff]
      %v334 = vld [vmem:[#allocation2 + $0xa8] sm:$0xff]
      %v335 = vld [vmem:[#allocation2 + $0xb0] sm:$0xff]
      %v336 = vld [vmem:[#allocation2 + $0xb8] sm:$0xff]
      %v337 = vld [vmem:[#allocation2 + $0xc0] sm:$0xff]
      %v338 = vld [vmem:[#allocation2 + $0xc8] sm:$0xff]
      %v339 = vld [vmem:[#allocation2 + $0xd0] sm:$0xff]
      %v340 = vld [vmem:[#allocation2 + $0xd8] sm:$0xff]
      %v341 = vld [vmem:[#allocation2 + $0xe0] sm:$0xff]
      %v342 = vld [vmem:[#allocation2 + $0xe8] sm:$0xff]
      %v343 = vld [vmem:[#allocation2 + $0xf0] sm:$0xff]
      %v344 = vld [vmem:[#allocation2 + $0xf8] sm:$0xff]
      %v345 = vld [vmem:[%s253] sm:$0xf]
      %v346 = vld [vmem:[%s253 + $0x4] sm:$0xf]
      %v347 = vld [vmem:[%s253 + $0x8] sm:$0xf]
      %v348 = vld [vmem:[%s253 + $0xc] sm:$0xf]
      %v349 = vld [vmem:[%s253 + $0x10] sm:$0xf]
      %v350 = vld [vmem:[%s253 + $0x14] sm:$0xf]
      %v351 = vld [vmem:[%s253 + $0x18] sm:$0xf]
      %v352 = vld [vmem:[%s253 + $0x1c] sm:$0xf]
      %v353 = vld [vmem:[%s253 + $0x20] sm:$0xf]
      %v354 = vld [vmem:[%s253 + $0x24] sm:$0xf]
      %v355 = vld [vmem:[%s253 + $0x28] sm:$0xf]
      %v356 = vld [vmem:[%s253 + $0x2c] sm:$0xf]
      %v357 = vld [vmem:[%s253 + $0x30] sm:$0xf]
      %v358 = vld [vmem:[%s253 + $0x34] sm:$0xf]
      %v359 = vld [vmem:[%s253 + $0x38] sm:$0xf]
      %v360 = vld [vmem:[%s253 + $0x3c] sm:$0xf]
      %v361 = vld [vmem:[%s253 + $0x40] sm:$0xf]
      %v362 = vld [vmem:[%s253 + $0x44] sm:$0xf]
      %v363 = vld [vmem:[%s253 + $0x48] sm:$0xf]
      %v364 = vld [vmem:[%s253 + $0x4c] sm:$0xf]
      %v365 = vld [vmem:[%s253 + $0x50] sm:$0xf]
      %v366 = vld [vmem:[%s253 + $0x54] sm:$0xf]
      %v367 = vld [vmem:[%s253 + $0x58] sm:$0xf]
      %v368 = vld [vmem:[%s253 + $0x5c] sm:$0xf]
      %v369 = vld [vmem:[%s253 + $0x60] sm:$0xf]
      %v370 = vld [vmem:[%s253 + $0x64] sm:$0xf]
      %v371 = vld [vmem:[%s253 + $0x68] sm:$0xf]
      %v372 = vld [vmem:[%s253 + $0x6c] sm:$0xf]
      %v373 = vld [vmem:[%s253 + $0x70] sm:$0xf]
      %v374 = vld [vmem:[%s253 + $0x74] sm:$0xf]
      %v375 = vld [vmem:[%s253 + $0x78] sm:$0xf]
      %v376 = vld [vmem:[%s253 + $0x7c] sm:$0xf]
      %v377 = vld [vmem:[%s260] sm:$0xf]
      %v378 = vld [vmem:[%s260 + $0x4] sm:$0xf]
      %v379 = vld [vmem:[%s260 + $0x8] sm:$0xf]
      %v380 = vld [vmem:[%s260 + $0xc] sm:$0xf]
      %v413 = vunpack.c.l.b16 %v345
      %v414 = vunpack.c.l.b16 %v346
      %v415 = vunpack.c.l.b16 %v347
      %v416 = vunpack.c.l.b16 %v348
      %v417 = vunpack.c.l.b16 %v349
      %v418 = vunpack.c.l.b16 %v350
      %v419 = vunpack.c.l.b16 %v351
      %v420 = vunpack.c.l.b16 %v352
      %v421 = vunpack.c.l.b16 %v353
      %v422 = vunpack.c.l.b16 %v354
      %v423 = vunpack.c.l.b16 %v355
      %v424 = vunpack.c.l.b16 %v356
      %v425 = vunpack.c.l.b16 %v357
      %v426 = vunpack.c.l.b16 %v358
      %v427 = vunpack.c.l.b16 %v359
      %v428 = vunpack.c.l.b16 %v360
      %v429 = vunpack.c.l.b16 %v361
      %v430 = vunpack.c.l.b16 %v362
      %v431 = vunpack.c.l.b16 %v363
      %v432 = vunpack.c.l.b16 %v364
      %v433 = vunpack.c.l.b16 %v365
      %v434 = vunpack.c.l.b16 %v366
      %v435 = vunpack.c.l.b16 %v367
      %v436 = vunpack.c.l.b16 %v368
      %v437 = vunpack.c.l.b16 %v369
      %v438 = vunpack.c.l.b16 %v370
      %v439 = vunpack.c.l.b16 %v371
      %v440 = vunpack.c.l.b16 %v372
      %v441 = vunpack.c.l.b16 %v373
      %v442 = vunpack.c.l.b16 %v374
      %v443 = vunpack.c.l.b16 %v375
      %v444 = vunpack.c.l.b16 %v376
      %v445 = vpack.c.b16 %v414, %v413
      %v446 = vpack.c.b16 %v416, %v415
      %v447 = vpack.c.b16 %v418, %v417
      %v448 = vpack.c.b16 %v420, %v419
      %v449 = vpack.c.b16 %v422, %v421
      %v450 = vpack.c.b16 %v424, %v423
      %v451 = vpack.c.b16 %v426, %v425
      %v452 = vpack.c.b16 %v428, %v427
      %v453 = vpack.c.b16 %v430, %v429
      %v454 = vpack.c.b16 %v432, %v431
      %v455 = vpack.c.b16 %v434, %v433
      %v456 = vpack.c.b16 %v436, %v435
      %v457 = vpack.c.b16 %v438, %v437
      %v458 = vpack.c.b16 %v440, %v439
      %v459 = vpack.c.b16 %v442, %v441
      %v460 = vpack.c.b16 %v444, %v443
      %v465 = vunpack.c.l.b16 %v377
      %v466 = vunpack.c.l.b16 %v378
      %v467 = vunpack.c.l.b16 %v379
      %v468 = vunpack.c.l.b16 %v380
      %v469 = vpack.c.b16 %v466, %v465
      %v470 = vpack.c.b16 %v468, %v467
      %vm473 = vcmask 261120
      %v475 = vsel %vm473, %v445, 0
      %v478 = vsel %vm473, %v446, 0
      %v481 = vsel %vm473, %v447, 0
      %v484 = vsel %vm473, %v448, 0
      %v487 = vsel %vm473, %v449, 0
      %v490 = vsel %vm473, %v450, 0
      %v493 = vsel %vm473, %v451, 0
      %v496 = vsel %vm473, %v452, 0
      %v499 = vsel %vm473, %v453, 0
      %v502 = vsel %vm473, %v454, 0
      %v505 = vsel %vm473, %v455, 0
      %v508 = vsel %vm473, %v456, 0
      %v511 = vsel %vm473, %v457, 0
      %v514 = vsel %vm473, %v458, 0
      %v517 = vsel %vm473, %v459, 0
      %v520 = vsel %vm473, %v460, 0
      %522 = vmatprep.subr.bf16.mxu0 0
      %523 = vmatpush1.bf16.msra.mxu0 0
      %524 = vmatprep.subr.bf16.mxu0 0
      %525 = vmatpush1.bf16.msra.mxu0 0
      %526 = vmatprep.subr.bf16.mxu0 0
      %527 = vmatpush1.bf16.msra.mxu0 0
      %528 = vmatprep.subr.bf16.mxu0 0
      %529 = vmatpush1.bf16.msra.mxu0 0
      %530 = vmatprep.subr.bf16.mxu0 0
      %531 = vmatpush1.bf16.msra.mxu0 0
      %532 = vmatprep.subr.bf16.mxu0 0
      %533 = vmatpush1.bf16.msra.mxu0 0
      %534 = vmatprep.subr.bf16.mxu0 0
      %535 = vmatpush1.bf16.msra.mxu0 %v470
      %536 = vmatprep.subr.bf16.mxu0 0
      %537 = vmatpush1.bf16.msra.mxu0 %v469
      %538 = vmatprep.subr.bf16.mxu0 0
      %539 = vmatpush2.bf16.msra.mxu0 0
      %540 = vmatprep.subr.bf16.mxu0 0
      %541 = vmatpush2.bf16.msra.mxu0 0
      %542 = vmatprep.subr.bf16.mxu0 0
      %543 = vmatpush2.bf16.msra.mxu0 0
      %544 = vmatprep.subr.bf16.mxu0 0
      %545 = vmatpush2.bf16.msra.mxu0 0
      %546 = vmatprep.subr.bf16.mxu0 0
      %547 = vmatpush2.bf16.msra.mxu0 0
      %548 = vmatprep.subr.bf16.mxu0 0
      %549 = vmatpush2.bf16.msra.mxu0 0
      %550 = vmatprep.subr.bf16.mxu0 0
      %551 = vmatpush2.bf16.msra.mxu0 0
      %552 = vmatprep.subr.bf16.mxu0 0
      %553 = vmatpush2.bf16.msra.mxu0 0
      %554 = vmatprep.mubr.bf16.mxu0 0
      %555 = vmatmul.mubr.bf16.gmra.mxu0 %v475
      %v556 = vpop.f32.mrf.mxu0
      %v557 = vadd.f32 0.0, %v556
      %v558 = vpop.f32.mrf.mxu0
      %v559 = vpop.f32.mrf.mxu0
      %v560 = vadd.f32 0.0, %v559
      %v561 = vpop.f32.mrf.mxu0
      %562 = vmatprep.mubr.bf16.mxu0 0
      %563 = vmatmul.mubr.bf16.gmra.mxu0 %v478
      %v564 = vpop.f32.mrf.mxu0
      %v565 = vadd.f32 0.0, %v564
      %v566 = vpop.f32.mrf.mxu0
      %v567 = vpop.f32.mrf.mxu0
      %v568 = vadd.f32 0.0, %v567
      %v569 = vpop.f32.mrf.mxu0
      %570 = vmatprep.mubr.bf16.mxu0 0
      %571 = vmatmul.mubr.bf16.gmra.mxu0 %v481
      %v572 = vpop.f32.mrf.mxu0
      %v573 = vadd.f32 0.0, %v572
      %v574 = vpop.f32.mrf.mxu0
      %v575 = vpop.f32.mrf.mxu0
      %v576 = vadd.f32 0.0, %v575
      %v577 = vpop.f32.mrf.mxu0
      %578 = vmatprep.mubr.bf16.mxu0 0
      %579 = vmatmul.mubr.bf16.gmra.mxu0 %v484
      %v580 = vpop.f32.mrf.mxu0
      %v581 = vadd.f32 0.0, %v580
      %v582 = vpop.f32.mrf.mxu0
      %v583 = vpop.f32.mrf.mxu0
      %v584 = vadd.f32 0.0, %v583
      %v585 = vpop.f32.mrf.mxu0
      %586 = vmatprep.mubr.bf16.mxu0 0
      %587 = vmatmul.mubr.bf16.gmra.mxu0 %v487
      %v588 = vpop.f32.mrf.mxu0
      %v589 = vadd.f32 0.0, %v588
      %v590 = vpop.f32.mrf.mxu0
      %v591 = vpop.f32.mrf.mxu0
      %v592 = vadd.f32 0.0, %v591
      %v593 = vpop.f32.mrf.mxu0
      %594 = vmatprep.mubr.bf16.mxu0 0
      %595 = vmatmul.mubr.bf16.gmra.mxu0 %v490
      %v596 = vpop.f32.mrf.mxu0
      %v597 = vadd.f32 0.0, %v596
      %v598 = vpop.f32.mrf.mxu0
      %v599 = vpop.f32.mrf.mxu0
      %v600 = vadd.f32 0.0, %v599
      %v601 = vpop.f32.mrf.mxu0
      %602 = vmatprep.mubr.bf16.mxu0 0
      %603 = vmatmul.mubr.bf16.gmra.mxu0 %v493
      %v604 = vpop.f32.mrf.mxu0
      %v605 = vadd.f32 0.0, %v604
      %v606 = vpop.f32.mrf.mxu0
      %v607 = vpop.f32.mrf.mxu0
      %v608 = vadd.f32 0.0, %v607
      %v609 = vpop.f32.mrf.mxu0
      %610 = vmatprep.mubr.bf16.mxu0 0
      %611 = vmatmul.mubr.bf16.gmra.mxu0 %v496
      %v612 = vpop.f32.mrf.mxu0
      %v613 = vadd.f32 0.0, %v612
      %v614 = vpop.f32.mrf.mxu0
      %v615 = vpop.f32.mrf.mxu0
      %v616 = vadd.f32 0.0, %v615
      %v617 = vpop.f32.mrf.mxu0
      %618 = vmatprep.mubr.bf16.mxu0 0
      %619 = vmatmul.mubr.bf16.gmra.mxu0 %v499
      %v620 = vpop.f32.mrf.mxu0
      %v621 = vadd.f32 0.0, %v620
      %v622 = vpop.f32.mrf.mxu0
      %v623 = vpop.f32.mrf.mxu0
      %v624 = vadd.f32 0.0, %v623
      %v625 = vpop.f32.mrf.mxu0
      %626 = vmatprep.mubr.bf16.mxu0 0
      %627 = vmatmul.mubr.bf16.gmra.mxu0 %v502
      %v628 = vpop.f32.mrf.mxu0
      %v629 = vadd.f32 0.0, %v628
      %v630 = vpop.f32.mrf.mxu0
      %v631 = vpop.f32.mrf.mxu0
      %v632 = vadd.f32 0.0, %v631
      %v633 = vpop.f32.mrf.mxu0
      %634 = vmatprep.mubr.bf16.mxu0 0
      %635 = vmatmul.mubr.bf16.gmra.mxu0 %v505
      %v636 = vpop.f32.mrf.mxu0
      %v637 = vadd.f32 0.0, %v636
      %v638 = vpop.f32.mrf.mxu0
      %v639 = vpop.f32.mrf.mxu0
      %v640 = vadd.f32 0.0, %v639
      %v641 = vpop.f32.mrf.mxu0
      %642 = vmatprep.mubr.bf16.mxu0 0
      %643 = vmatmul.mubr.bf16.gmra.mxu0 %v508
      %v644 = vpop.f32.mrf.mxu0
      %v645 = vadd.f32 0.0, %v644
      %v646 = vpop.f32.mrf.mxu0
      %v647 = vpop.f32.mrf.mxu0
      %v648 = vadd.f32 0.0, %v647
      %v649 = vpop.f32.mrf.mxu0
      %650 = vmatprep.mubr.bf16.mxu0 0
      %651 = vmatmul.mubr.bf16.gmra.mxu0 %v511
      %v652 = vpop.f32.mrf.mxu0
      %v653 = vadd.f32 0.0, %v652
      %v654 = vpop.f32.mrf.mxu0
      %v655 = vpop.f32.mrf.mxu0
      %v656 = vadd.f32 0.0, %v655
      %v657 = vpop.f32.mrf.mxu0
      %658 = vmatprep.mubr.bf16.mxu0 0
      %659 = vmatmul.mubr.bf16.gmra.mxu0 %v514
      %v660 = vpop.f32.mrf.mxu0
      %v661 = vadd.f32 0.0, %v660
      %v662 = vpop.f32.mrf.mxu0
      %v663 = vpop.f32.mrf.mxu0
      %v664 = vadd.f32 0.0, %v663
      %v665 = vpop.f32.mrf.mxu0
      %666 = vmatprep.mubr.bf16.mxu0 0
      %667 = vmatmul.mubr.bf16.gmra.mxu0 %v517
      %v668 = vpop.f32.mrf.mxu0
      %v669 = vadd.f32 0.0, %v668
      %v670 = vpop.f32.mrf.mxu0
      %v671 = vpop.f32.mrf.mxu0
      %v672 = vadd.f32 0.0, %v671
      %v673 = vpop.f32.mrf.mxu0
      %674 = vmatprep.mubr.bf16.mxu0 0
      %675 = vmatmul.mubr.bf16.gmra.mxu0 %v520
      %v676 = vpop.f32.mrf.mxu0
      %v677 = vadd.f32 0.0, %v676
      %v678 = vpop.f32.mrf.mxu0
      %v679 = vpop.f32.mrf.mxu0
      %v680 = vadd.f32 0.0, %v679
      %v681 = vpop.f32.mrf.mxu0
      %682 = vdwg.mxu0
      %v683 = vadd.f32 %v313, %v557
      %v684 = vadd.f32 %v314, %v560
      %v685 = vadd.f32 %v315, %v565
      %v686 = vadd.f32 %v316, %v568
      %v687 = vadd.f32 %v317, %v573
      %v688 = vadd.f32 %v318, %v576
      %v689 = vadd.f32 %v319, %v581
      %v690 = vadd.f32 %v320, %v584
      %v691 = vadd.f32 %v321, %v589
      %v692 = vadd.f32 %v322, %v592
      %v693 = vadd.f32 %v323, %v597
      %v694 = vadd.f32 %v324, %v600
      %v695 = vadd.f32 %v325, %v605
      %v696 = vadd.f32 %v326, %v608
      %v697 = vadd.f32 %v327, %v613
      %v698 = vadd.f32 %v328, %v616
      %v699 = vadd.f32 %v329, %v621
      %v700 = vadd.f32 %v330, %v624
      %v701 = vadd.f32 %v331, %v629
      %v702 = vadd.f32 %v332, %v632
      %v703 = vadd.f32 %v333, %v637
      %v704 = vadd.f32 %v334, %v640
      %v705 = vadd.f32 %v335, %v645
      %v706 = vadd.f32 %v336, %v648
      %v707 = vadd.f32 %v337, %v653
      %v708 = vadd.f32 %v338, %v656
      %v709 = vadd.f32 %v339, %v661
      %v710 = vadd.f32 %v340, %v664
      %v711 = vadd.f32 %v341, %v669
      %v712 = vadd.f32 %v342, %v672
      %v713 = vadd.f32 %v343, %v677
      %v714 = vadd.f32 %v344, %v680
      %715 = vst.msk [vmem:[#allocation2] sm:$0xff] %vm473, %v683
      %716 = vst.msk [vmem:[#allocation2 + $0x8] sm:$0xff] %vm473, %v684
      %717 = vst.msk [vmem:[#allocation2 + $0x10] sm:$0xff] %vm473, %v685
      %718 = vst.msk [vmem:[#allocation2 + $0x18] sm:$0xff] %vm473, %v686
      %719 = vst.msk [vmem:[#allocation2 + $0x20] sm:$0xff] %vm473, %v687
      %720 = vst.msk [vmem:[#allocation2 + $0x28] sm:$0xff] %vm473, %v688
      %721 = vst.msk [vmem:[#allocation2 + $0x30] sm:$0xff] %vm473, %v689
      %722 = vst.msk [vmem:[#allocation2 + $0x38] sm:$0xff] %vm473, %v690
      %723 = vst.msk [vmem:[#allocation2 + $0x40] sm:$0xff] %vm473, %v691
      %724 = vst.msk [vmem:[#allocation2 + $0x48] sm:$0xff] %vm473, %v692
      %725 = vst.msk [vmem:[#allocation2 + $0x50] sm:$0xff] %vm473, %v693
      %726 = vst.msk [vmem:[#allocation2 + $0x58] sm:$0xff] %vm473, %v694
      %727 = vst.msk [vmem:[#allocation2 + $0x60] sm:$0xff] %vm473, %v695
      %728 = vst.msk [vmem:[#allocation2 + $0x68] sm:$0xff] %vm473, %v696
      %729 = vst.msk [vmem:[#allocation2 + $0x70] sm:$0xff] %vm473, %v697
      %730 = vst.msk [vmem:[#allocation2 + $0x78] sm:$0xff] %vm473, %v698
      %731 = vst.msk [vmem:[#allocation2 + $0x80] sm:$0xff] %vm473, %v699
      %732 = vst.msk [vmem:[#allocation2 + $0x88] sm:$0xff] %vm473, %v700
      %733 = vst.msk [vmem:[#allocation2 + $0x90] sm:$0xff] %vm473, %v701
      %734 = vst.msk [vmem:[#allocation2 + $0x98] sm:$0xff] %vm473, %v702
      %735 = vst.msk [vmem:[#allocation2 + $0xa0] sm:$0xff] %vm473, %v703
      %736 = vst.msk [vmem:[#allocation2 + $0xa8] sm:$0xff] %vm473, %v704
      %737 = vst.msk [vmem:[#allocation2 + $0xb0] sm:$0xff] %vm473, %v705
      %738 = vst.msk [vmem:[#allocation2 + $0xb8] sm:$0xff] %vm473, %v706
      %739 = vst.msk [vmem:[#allocation2 + $0xc0] sm:$0xff] %vm473, %v707
      %740 = vst.msk [vmem:[#allocation2 + $0xc8] sm:$0xff] %vm473, %v708
      %741 = vst.msk [vmem:[#allocation2 + $0xd0] sm:$0xff] %vm473, %v709
      %742 = vst.msk [vmem:[#allocation2 + $0xd8] sm:$0xff] %vm473, %v710
      %743 = vst.msk [vmem:[#allocation2 + $0xe0] sm:$0xff] %vm473, %v711
      %744 = vst.msk [vmem:[#allocation2 + $0xe8] sm:$0xff] %vm473, %v712
      %745 = vst.msk [vmem:[#allocation2 + $0xf0] sm:$0xff] %vm473, %v713
      %746 = vst.msk [vmem:[#allocation2 + $0xf8] sm:$0xff] %vm473, %v714
      %p747 = scmp.eq.s32.totalorder %s23, 2
      // Predicated region
      $region37: #{_lambda_.10} parent=31 // pred_check
        %p748 = pneg %p747
      $region38: #{_lambda_.10} parent=31 // pred_check_branch
        %750 = sbr.rel (%p748) target = $region40
      $region39: #{_lambda_.10} parent=31 // pred_region
        %v751 = vld [vmem:[#allocation2] sm:$0xff]
        %v752 = vld [vmem:[#allocation2 + $0x8] sm:$0xff]
        %v753 = vld [vmem:[#allocation2 + $0x10] sm:$0xff]
        %v754 = vld [vmem:[#allocation2 + $0x18] sm:$0xff]
        %v755 = vld [vmem:[#allocation2 + $0x20] sm:$0xff]
        %v756 = vld [vmem:[#allocation2 + $0x28] sm:$0xff]
        %v757 = vld [vmem:[#allocation2 + $0x30] sm:$0xff]
        %v758 = vld [vmem:[#allocation2 + $0x38] sm:$0xff]
        %v759 = vld [vmem:[#allocation2 + $0x40] sm:$0xff]
        %v760 = vld [vmem:[#allocation2 + $0x48] sm:$0xff]
        %v761 = vld [vmem:[#allocation2 + $0x50] sm:$0xff]
        %v762 = vld [vmem:[#allocation2 + $0x58] sm:$0xff]
        %v763 = vld [vmem:[#allocation2 + $0x60] sm:$0xff]
        %v764 = vld [vmem:[#allocation2 + $0x68] sm:$0xff]
        %v765 = vld [vmem:[#allocation2 + $0x70] sm:$0xff]
        %v766 = vld [vmem:[#allocation2 + $0x78] sm:$0xff]
        %v767 = vld [vmem:[#allocation2 + $0x80] sm:$0xff]
        %v768 = vld [vmem:[#allocation2 + $0x88] sm:$0xff]
        %v769 = vld [vmem:[#allocation2 + $0x90] sm:$0xff]
        %v770 = vld [vmem:[#allocation2 + $0x98] sm:$0xff]
        %v771 = vld [vmem:[#allocation2 + $0xa0] sm:$0xff]
        %v772 = vld [vmem:[#allocation2 + $0xa8] sm:$0xff]
        %v773 = vld [vmem:[#allocation2 + $0xb0] sm:$0xff]
        %v774 = vld [vmem:[#allocation2 + $0xb8] sm:$0xff]
        %v775 = vld [vmem:[#allocation2 + $0xc0] sm:$0xff]
        %v776 = vld [vmem:[#allocation2 + $0xc8] sm:$0xff]
        %v777 = vld [vmem:[#allocation2 + $0xd0] sm:$0xff]
        %v778 = vld [vmem:[#allocation2 + $0xd8] sm:$0xff]
        %v779 = vld [vmem:[#allocation2 + $0xe0] sm:$0xff]
        %v780 = vld [vmem:[#allocation2 + $0xe8] sm:$0xff]
        %v781 = vld [vmem:[#allocation2 + $0xf0] sm:$0xff]
        %v782 = vld [vmem:[#allocation2 + $0xf8] sm:$0xff]
        %v783 = vld [vmem:[%s2] sm:$0x1]
        %v785 = vlaneseq
        %v786 = vshrl.u32 %v785, 7
        %v787 = vsub.s32 0, %v786
        %v788 = vrot.slane %v783, %v787
        %v790 = vadd.f32 %v751, %v788
        %v791 = vadd.f32 %v752, %v788
        %v792 = vadd.f32 %v753, %v788
        %v793 = vadd.f32 %v754, %v788
        %v794 = vadd.f32 %v755, %v788
        %v795 = vadd.f32 %v756, %v788
        %v796 = vadd.f32 %v757, %v788
        %v797 = vadd.f32 %v758, %v788
        %v798 = vadd.f32 %v759, %v788
        %v799 = vadd.f32 %v760, %v788
        %v800 = vadd.f32 %v761, %v788
        %v801 = vadd.f32 %v762, %v788
        %v802 = vadd.f32 %v763, %v788
        %v803 = vadd.f32 %v764, %v788
        %v804 = vadd.f32 %v765, %v788
        %v805 = vadd.f32 %v766, %v788
        %v806 = vadd.f32 %v767, %v788
        %v807 = vadd.f32 %v768, %v788
        %v808 = vadd.f32 %v769, %v788
        %v809 = vadd.f32 %v770, %v788
        %v810 = vadd.f32 %v771, %v788
        %v811 = vadd.f32 %v772, %v788
        %v812 = vadd.f32 %v773, %v788
        %v813 = vadd.f32 %v774, %v788
        %v814 = vadd.f32 %v775, %v788
        %v815 = vadd.f32 %v776, %v788
        %v816 = vadd.f32 %v777, %v788
        %v817 = vadd.f32 %v778, %v788
        %v818 = vadd.f32 %v779, %v788
        %v819 = vadd.f32 %v780, %v788
        %v820 = vadd.f32 %v781, %v788
        %v821 = vadd.f32 %v782, %v788
        %822 = vst.msk [vmem:[%s273] sm:$0xff] %vm473, %v790
        %823 = vst.msk [vmem:[%s273 + $0x8] sm:$0xff] %vm473, %v791
        %824 = vst.msk [vmem:[%s273 + $0x10] sm:$0xff] %vm473, %v792
        %825 = vst.msk [vmem:[%s273 + $0x18] sm:$0xff] %vm473, %v793
        %826 = vst.msk [vmem:[%s273 + $0x20] sm:$0xff] %vm473, %v794
        %827 = vst.msk [vmem:[%s273 + $0x28] sm:$0xff] %vm473, %v795
        %828 = vst.msk [vmem:[%s273 + $0x30] sm:$0xff] %vm473, %v796
        %829 = vst.msk [vmem:[%s273 + $0x38] sm:$0xff] %vm473, %v797
        %830 = vst.msk [vmem:[%s273 + $0x40] sm:$0xff] %vm473, %v798
        %831 = vst.msk [vmem:[%s273 + $0x48] sm:$0xff] %vm473, %v799
        %832 = vst.msk [vmem:[%s273 + $0x50] sm:$0xff] %vm473, %v800
        %833 = vst.msk [vmem:[%s273 + $0x58] sm:$0xff] %vm473, %v801
        %834 = vst.msk [vmem:[%s273 + $0x60] sm:$0xff] %vm473, %v802
        %835 = vst.msk [vmem:[%s273 + $0x68] sm:$0xff] %vm473, %v803
        %836 = vst.msk [vmem:[%s273 + $0x70] sm:$0xff] %vm473, %v804
        %837 = vst.msk [vmem:[%s273 + $0x78] sm:$0xff] %vm473, %v805
        %838 = vst.msk [vmem:[%s273 + $0x80] sm:$0xff] %vm473, %v806
        %839 = vst.msk [vmem:[%s273 + $0x88] sm:$0xff] %vm473, %v807
        %840 = vst.msk [vmem:[%s273 + $0x90] sm:$0xff] %vm473, %v808
        %841 = vst.msk [vmem:[%s273 + $0x98] sm:$0xff] %vm473, %v809
        %842 = vst.msk [vmem:[%s273 + $0xa0] sm:$0xff] %vm473, %v810
        %843 = vst.msk [vmem:[%s273 + $0xa8] sm:$0xff] %vm473, %v811
        %844 = vst.msk [vmem:[%s273 + $0xb0] sm:$0xff] %vm473, %v812
        %845 = vst.msk [vmem:[%s273 + $0xb8] sm:$0xff] %vm473, %v813
        %846 = vst.msk [vmem:[%s273 + $0xc0] sm:$0xff] %vm473, %v814
        %847 = vst.msk [vmem:[%s273 + $0xc8] sm:$0xff] %vm473, %v815
        %848 = vst.msk [vmem:[%s273 + $0xd0] sm:$0xff] %vm473, %v816
        %849 = vst.msk [vmem:[%s273 + $0xd8] sm:$0xff] %vm473, %v817
        %850 = vst.msk [vmem:[%s273 + $0xe0] sm:$0xff] %vm473, %v818
        %851 = vst.msk [vmem:[%s273 + $0xe8] sm:$0xff] %vm473, %v819
        %852 = vst.msk [vmem:[%s273 + $0xf0] sm:$0xff] %vm473, %v820
        %853 = vst.msk [vmem:[%s273 + $0xf8] sm:$0xff] %vm473, %v821
      $region40: #{_lambda_.10} parent=31 // pred_fallthru
        _
      %s854 = smul.u32 32, %s22
      %p855 = scmp.lt.s32.totalorder %s20, 1
      %s856 = scalar_select %p855, %s20, 1
      %p857 = scmp.lt.s32.totalorder %s21, 1
      %s858 = scalar_select %p857, %s21, 1
      %p859 = scmp.lt.s32.totalorder %s854, 31
      %s860 = scalar_select %p859, %s854, 31
      %s861 = smul.addr %s858, 32
      %s862 = sadd.s32 %s860, %s861
      %s863 = smul.addr %s856, 64
      %s864 = sadd.s32 %s862, %s863
      %s865 = smul.addr %s864, 8
      %s866 = scalar_lea.vmem %s3, %s865
      // Predicated region
      $region41: #{_lambda_.10} parent=31 // pred_check
        %p867 = pneg %p141
      $region42: #{_lambda_.10} parent=31 // pred_check_branch
        %869 = sbr.rel (%p867) target = $region44
      $region43: #{_lambda_.10} parent=31 // pred_region
        %s870 = smul.u32 32, %s22
      $region44: #{_lambda_.10} parent=31 // pred_fallthru
        _
    $region32: #{_lambda_.10} parent=5 // pred_fallthru
      _
    %p871 = scmp.le.s32.totalorder 2, %s9
    // Predicated region
    $region45: #{_lambda_.10} parent=5 // pred_check
      %p872 = pneg %p871
    $region46: #{_lambda_.10} parent=5 // pred_check_branch
      %874 = sbr.rel (%p872) target = $region48
    $region47: #{_lambda_.10} parent=5 // pred_region
      %s875 = ssub.s32 %s9, 2
      // Predicated region
      $region49: #{_lambda_.10} parent=47 // pred_check
        %p876 = pneg %p147
      $region50: #{_lambda_.10} parent=47 // pred_check_branch
        %878 = sbr.rel (%p876) target = $region52
      $region51: #{_lambda_.10} parent=47 // pred_region
        %s879 = smul.u32 32, %s26
        %p880 = scmp.lt.s32.totalorder %s24, 1
        %s881 = scalar_select %p880, %s24, 1
        %p882 = scmp.lt.s32.totalorder %s25, 1
        %s883 = scalar_select %p882, %s25, 1
        %p884 = scmp.lt.s32.totalorder %s879, 31
        %s885 = scalar_select %p884, %s879, 31
        %s886 = smul.addr %s883, 32
        %s887 = sadd.s32 %s885, %s886
        %s888 = smul.addr %s881, 64
        %s889 = sadd.s32 %s887, %s888
        %s890 = smul.addr %s889, 8
        %s891 = scalar_lea.vmem %s3, %s890
      $region52: #{_lambda_.10} parent=47 // pred_fallthru
        _
    $region48: #{_lambda_.10} parent=5 // pred_fallthru
      _
  $region6: #{_lambda_.10} parent=0 // loop_footer
    %s13 = sadd.s32 1, %s9
  $region7: #{_lambda_.10} parent=0 // loop_footer_branch
    %8 = sbr.rel target = $region3
  $region8: #{_lambda_.10} parent=0 // loop_exit
    _

// kernel: _lambda_.11
$region0: #{_lambda_.11}
  #allocation0 [shape = 'u32[]', space=smem, size = 0x4, offset = 0x4, fixed_abs, tag = 'smem constant byte address 0x4 - core index']
  #allocation1 [shape = 'u32[144,128]{1,0:T(1,128)}', space=vmem, size = 0x12000, scoped, tag = 'internal scratch']
  #allocation2 [shape = 'f32[256,32]{1,0:T(8,128)}', space=vmem, size = 0x20000, scoped, tag = 'scratch operand']
  %s0 = inlined_call_operand.vmem [shape: bf16[256,128], index: 0, kind: input, shape index: {}]
  %s1 = inlined_call_operand.vmem [shape: bf16[128,32], index: 1, kind: input, shape index: {}]
  %s2 = inlined_call_operand.vmem [shape: f32[1,32], index: 2, kind: input, shape index: {}]
  %s3 = inlined_call_operand.hbm [shape: f32[256,32], index: 3, kind: output, shape index: {}]
  %s4 = sld [smem:[#allocation0]]
  $region30: #{_lambda_.11} parent=0
    _
  %s6 = ssub.s32 1, %s4
  %s7 = scalar_select 0, %s6, %s4
  $region1: #{_lambda_.11} parent=0
    #allocation3 [shape = 'u8[131072]{0}', space=vmem, size = 0x20000, scoped, tag = 'output window, operand 0, single buffered']
    #allocation4 [shape = 's32[1]{0}', space=sflag, size = 0x4, scoped, tag = 'scoped memory for _lambda_.11']
    %8 = vsyncpa [#allocation4], 0
    // Predicated region
    $region2: #{_lambda_.11} parent=1 // pred_check
      _
    $region3: #{_lambda_.11} parent=1 // pred_check_branch
      %10 = sbr.rel (0) target = $region5
    $region4: #{_lambda_.11} parent=1 // pred_region
      _
    $region5: #{_lambda_.11} parent=1 // pred_fallthru
      _
    // Predicated region
    $region6: #{_lambda_.11} parent=1 // pred_check
      _
    $region7: #{_lambda_.11} parent=1 // pred_check_branch
      %12 = sbr.rel (0) target = $region9
    $region8: #{_lambda_.11} parent=1 // pred_region
      _
    $region9: #{_lambda_.11} parent=1 // pred_fallthru
      _
    // Predicated region
    $region10: #{_lambda_.11} parent=1 // pred_check
      _
    $region11: #{_lambda_.11} parent=1 // pred_check_branch
      %14 = sbr.rel (0) target = $region13
    $region12: #{_lambda_.11} parent=1 // pred_region
      _
    $region13: #{_lambda_.11} parent=1 // pred_fallthru
      _
    %p16 = scmp.eq.s32.totalorder 0, 0
    // Predicated region
    $region14: #{_lambda_.11} parent=1 // pred_check
      %p17 = pneg %p16
    $region15: #{_lambda_.11} parent=1 // pred_check_branch
      %19 = sbr.rel (%p17) target = $region17
    $region16: #{_lambda_.11} parent=1 // pred_region
      %vm20 = vcmask 261120
      %21 = vst.msk [vmem:[#allocation2] sm:$0xff] %vm20, 0.0
      %22 = vst.msk [vmem:[#allocation2 + $0x8] sm:$0xff] %vm20, 0.0
      %23 = vst.msk [vmem:[#allocation2 + $0x10] sm:$0xff] %vm20, 0.0
      %24 = vst.msk [vmem:[#allocation2 + $0x18] sm:$0xff] %vm20, 0.0
      %25 = vst.msk [vmem:[#allocation2 + $0x20] sm:$0xff] %vm20, 0.0
      %26 = vst.msk [vmem:[#allocation2 + $0x28] sm:$0xff] %vm20, 0.0
      %27 = vst.msk [vmem:[#allocation2 + $0x30] sm:$0xff] %vm20, 0.0
      %28 = vst.msk [vmem:[#allocation2 + $0x38] sm:$0xff] %vm20, 0.0
      %29 = vst.msk [vmem:[#allocation2 + $0x40] sm:$0xff] %vm20, 0.0
      %30 = vst.msk [vmem:[#allocation2 + $0x48] sm:$0xff] %vm20, 0.0
      %31 = vst.msk [vmem:[#allocation2 + $0x50] sm:$0xff] %vm20, 0.0
      %32 = vst.msk [vmem:[#allocation2 + $0x58] sm:$0xff] %vm20, 0.0
      %33 = vst.msk [vmem:[#allocation2 + $0x60] sm:$0xff] %vm20, 0.0
      %34 = vst.msk [vmem:[#allocation2 + $0x68] sm:$0xff] %vm20, 0.0
      %35 = vst.msk [vmem:[#allocation2 + $0x70] sm:$0xff] %vm20, 0.0
      %36 = vst.msk [vmem:[#allocation2 + $0x78] sm:$0xff] %vm20, 0.0
      %37 = vst.msk [vmem:[#allocation2 + $0x80] sm:$0xff] %vm20, 0.0
      %38 = vst.msk [vmem:[#allocation2 + $0x88] sm:$0xff] %vm20, 0.0
      %39 = vst.msk [vmem:[#allocation2 + $0x90] sm:$0xff] %vm20, 0.0
      %40 = vst.msk [vmem:[#allocation2 + $0x98] sm:$0xff] %vm20, 0.0
      %41 = vst.msk [vmem:[#allocation2 + $0xa0] sm:$0xff] %vm20, 0.0
      %42 = vst.msk [vmem:[#allocation2 + $0xa8] sm:$0xff] %vm20, 0.0
      %43 = vst.msk [vmem:[#allocation2 + $0xb0] sm:$0xff] %vm20, 0.0
      %44 = vst.msk [vmem:[#allocation2 + $0xb8] sm:$0xff] %vm20, 0.0
      %45 = vst.msk [vmem:[#allocation2 + $0xc0] sm:$0xff] %vm20, 0.0
      %46 = vst.msk [vmem:[#allocation2 + $0xc8] sm:$0xff] %vm20, 0.0
      %47 = vst.msk [vmem:[#allocation2 + $0xd0] sm:$0xff] %vm20, 0.0
      %48 = vst.msk [vmem:[#allocation2 + $0xd8] sm:$0xff] %vm20, 0.0
      %49 = vst.msk [vmem:[#allocation2 + $0xe0] sm:$0xff] %vm20, 0.0
      %50 = vst.msk [vmem:[#allocation2 + $0xe8] sm:$0xff] %vm20, 0.0
      %51 = vst.msk [vmem:[#allocation2 + $0xf0] sm:$0xff] %vm20, 0.0
      %52 = vst.msk [vmem:[#allocation2 + $0xf8] sm:$0xff] %vm20, 0.0
    $region17: #{_lambda_.11} parent=1 // pred_fallthru
      _
    %v53 = vld [vmem:[#allocation2] sm:$0xff]
    %v54 = vld [vmem:[#allocation2 + $0x8] sm:$0xff]
    %v55 = vld [vmem:[#allocation2 + $0x10] sm:$0xff]
    %v56 = vld [vmem:[#allocation2 + $0x18] sm:$0xff]
    %v57 = vld [vmem:[#allocation2 + $0x20] sm:$0xff]
    %v58 = vld [vmem:[#allocation2 + $0x28] sm:$0xff]
    %v59 = vld [vmem:[#allocation2 + $0x30] sm:$0xff]
    %v60 = vld [vmem:[#allocation2 + $0x38] sm:$0xff]
    %v61 = vld [vmem:[#allocation2 + $0x40] sm:$0xff]
    %v62 = vld [vmem:[#allocation2 + $0x48] sm:$0xff]
    %v63 = vld [vmem:[#allocation2 + $0x50] sm:$0xff]
    %v64 = vld [vmem:[#allocation2 + $0x58] sm:$0xff]
    %v65 = vld [vmem:[#allocation2 + $0x60] sm:$0xff]
    %v66 = vld [vmem:[#allocation2 + $0x68] sm:$0xff]
    %v67 = vld [vmem:[#allocation2 + $0x70] sm:$0xff]
    %v68 = vld [vmem:[#allocation2 + $0x78] sm:$0xff]
    %v69 = vld [vmem:[#allocation2 + $0x80] sm:$0xff]
    %v70 = vld [vmem:[#allocation2 + $0x88] sm:$0xff]
    %v71 = vld [vmem:[#allocation2 + $0x90] sm:$0xff]
    %v72 = vld [vmem:[#allocation2 + $0x98] sm:$0xff]
    %v73 = vld [vmem:[#allocation2 + $0xa0] sm:$0xff]
    %v74 = vld [vmem:[#allocation2 + $0xa8] sm:$0xff]
    %v75 = vld [vmem:[#allocation2 + $0xb0] sm:$0xff]
    %v76 = vld [vmem:[#allocation2 + $0xb8] sm:$0xff]
    %v77 = vld [vmem:[#allocation2 + $0xc0] sm:$0xff]
    %v78 = vld [vmem:[#allocation2 + $0xc8] sm:$0xff]
    %v79 = vld [vmem:[#allocation2 + $0xd0] sm:$0xff]
    %v80 = vld [vmem:[#allocation2 + $0xd8] sm:$0xff]
    %v81 = vld [vmem:[#allocation2 + $0xe0] sm:$0xff]
    %v82 = vld [vmem:[#allocation2 + $0xe8] sm:$0xff]
    %v83 = vld [vmem:[#allocation2 + $0xf0] sm:$0xff]
    %v84 = vld [vmem:[#allocation2 + $0xf8] sm:$0xff]
    %v85 = vld [vmem:[%s0] sm:$0xf]
    %v86 = vld [vmem:[%s0 + $0x4] sm:$0xf]
    %v87 = vld [vmem:[%s0 + $0x8] sm:$0xf]
    %v88 = vld [vmem:[%s0 + $0xc] sm:$0xf]
    %v89 = vld [vmem:[%s0 + $0x10] sm:$0xf]
    %v90 = vld [vmem:[%s0 + $0x14] sm:$0xf]
    %v91 = vld [vmem:[%s0 + $0x18] sm:$0xf]
    %v92 = vld [vmem:[%s0 + $0x1c] sm:$0xf]
    %v93 = vld [vmem:[%s0 + $0x20] sm:$0xf]
    %v94 = vld [vmem:[%s0 + $0x24] sm:$0xf]
    %v95 = vld [vmem:[%s0 + $0x28] sm:$0xf]
    %v96 = vld [vmem:[%s0 + $0x2c] sm:$0xf]
    %v97 = vld [vmem:[%s0 + $0x30] sm:$0xf]
    %v98 = vld [vmem:[%s0 + $0x34] sm:$0xf]
    %v99 = vld [vmem:[%s0 + $0x38] sm:$0xf]
    %v100 = vld [vmem:[%s0 + $0x3c] sm:$0xf]
    %v101 = vld [vmem:[%s0 + $0x40] sm:$0xf]
    %v102 = vld [vmem:[%s0 + $0x44] sm:$0xf]
    %v103 = vld [vmem:[%s0 + $0x48] sm:$0xf]
    %v104 = vld [vmem:[%s0 + $0x4c] sm:$0xf]
    %v105 = vld [vmem:[%s0 + $0x50] sm:$0xf]
    %v106 = vld [vmem:[%s0 + $0x54] sm:$0xf]
    %v107 = vld [vmem:[%s0 + $0x58] sm:$0xf]
    %v108 = vld [vmem:[%s0 + $0x5c] sm:$0xf]
    %v109 = vld [vmem:[%s0 + $0x60] sm:$0xf]
    %v110 = vld [vmem:[%s0 + $0x64] sm:$0xf]
    %v111 = vld [vmem:[%s0 + $0x68] sm:$0xf]
    %v112 = vld [vmem:[%s0 + $0x6c] sm:$0xf]
    %v113 = vld [vmem:[%s0 + $0x70] sm:$0xf]
    %v114 = vld [vmem:[%s0 + $0x74] sm:$0xf]
    %v115 = vld [vmem:[%s0 + $0x78] sm:$0xf]
    %v116 = vld [vmem:[%s0 + $0x7c] sm:$0xf]
    %v117 = vld [vmem:[%s1] sm:$0xf]
    %v118 = vld [vmem:[%s1 + $0x4] sm:$0xf]
    %v119 = vld [vmem:[%s1 + $0x8] sm:$0xf]
    %v120 = vld [vmem:[%s1 + $0xc] sm:$0xf]
    %v121 = vld [vmem:[%s1 + $0x10] sm:$0xf]
    %v122 = vld [vmem:[%s1 + $0x14] sm:$0xf]
    %v123 = vld [vmem:[%s1 + $0x18] sm:$0xf]
    %v124 = vld [vmem:[%s1 + $0x1c] sm:$0xf]
    %v125 = vld [vmem:[%s1 + $0x20] sm:$0xf]
    %v126 = vld [vmem:[%s1 + $0x24] sm:$0xf]
    %v127 = vld [vmem:[%s1 + $0x28] sm:$0xf]
    %v128 = vld [vmem:[%s1 + $0x2c] sm:$0xf]
    %v129 = vld [vmem:[%s1 + $0x30] sm:$0xf]
    %v130 = vld [vmem:[%s1 + $0x34] sm:$0xf]
    %v131 = vld [vmem:[%s1 + $0x38] sm:$0xf]
    %v132 = vld [vmem:[%s1 + $0x3c] sm:$0xf]
    %v165 = vunpack.c.l.b16 %v85
    %v166 = vunpack.c.l.b16 %v86
    %v167 = vunpack.c.l.b16 %v87
    %v168 = vunpack.c.l.b16 %v88
    %v169 = vunpack.c.l.b16 %v89
    %v170 = vunpack.c.l.b16 %v90
    %v171 = vunpack.c.l.b16 %v91
    %v172 = vunpack.c.l.b16 %v92
    %v173 = vunpack.c.l.b16 %v93
    %v174 = vunpack.c.l.b16 %v94
    %v175 = vunpack.c.l.b16 %v95
    %v176 = vunpack.c.l.b16 %v96
    %v177 = vunpack.c.l.b16 %v97
    %v178 = vunpack.c.l.b16 %v98
    %v179 = vunpack.c.l.b16 %v99
    %v180 = vunpack.c.l.b16 %v100
    %v181 = vunpack.c.l.b16 %v101
    %v182 = vunpack.c.l.b16 %v102
    %v183 = vunpack.c.l.b16 %v103
    %v184 = vunpack.c.l.b16 %v104
    %v185 = vunpack.c.l.b16 %v105
    %v186 = vunpack.c.l.b16 %v106
    %v187 = vunpack.c.l.b16 %v107
    %v188 = vunpack.c.l.b16 %v108
    %v189 = vunpack.c.l.b16 %v109
    %v190 = vunpack.c.l.b16 %v110
    %v191 = vunpack.c.l.b16 %v111
    %v192 = vunpack.c.l.b16 %v112
    %v193 = vunpack.c.l.b16 %v113
    %v194 = vunpack.c.l.b16 %v114
    %v195 = vunpack.c.l.b16 %v115
    %v196 = vunpack.c.l.b16 %v116
    %v197 = vpack.c.b16 %v166, %v165
    %v198 = vpack.c.b16 %v168, %v167
    %v199 = vpack.c.b16 %v170, %v169
    %v200 = vpack.c.b16 %v172, %v171
    %v201 = vpack.c.b16 %v174, %v173
    %v202 = vpack.c.b16 %v176, %v175
    %v203 = vpack.c.b16 %v178, %v177
    %v204 = vpack.c.b16 %v180, %v179
    %v205 = vpack.c.b16 %v182, %v181
    %v206 = vpack.c.b16 %v184, %v183
    %v207 = vpack.c.b16 %v186, %v185
    %v208 = vpack.c.b16 %v188, %v187
    %v209 = vpack.c.b16 %v190, %v189
    %v210 = vpack.c.b16 %v192, %v191
    %v211 = vpack.c.b16 %v194, %v193
    %v212 = vpack.c.b16 %v196, %v195
    %v245 = vunpack.c.l.b16 %v117
    %v246 = vunpack.c.l.b16 %v118
    %v247 = vunpack.c.l.b16 %v119
    %v248 = vunpack.c.l.b16 %v120
    %v249 = vunpack.c.l.b16 %v121
    %v250 = vunpack.c.l.b16 %v122
    %v251 = vunpack.c.l.b16 %v123
    %v252 = vunpack.c.l.b16 %v124
    %v253 = vunpack.c.l.b16 %v125
    %v254 = vunpack.c.l.b16 %v126
    %v255 = vunpack.c.l.b16 %v127
    %v256 = vunpack.c.l.b16 %v128
    %v257 = vunpack.c.l.b16 %v129
    %v258 = vunpack.c.l.b16 %v130
    %v259 = vunpack.c.l.b16 %v131
    %v260 = vunpack.c.l.b16 %v132
    %v261 = vpack.c.b16 %v246, %v245
    %v262 = vpack.c.b16 %v248, %v247
    %v263 = vpack.c.b16 %v250, %v249
    %v264 = vpack.c.b16 %v252, %v251
    %v265 = vpack.c.b16 %v254, %v253
    %v266 = vpack.c.b16 %v256, %v255
    %v267 = vpack.c.b16 %v258, %v257
    %v268 = vpack.c.b16 %v260, %v259
    %277 = vmatprep.subr.bf16.mxu0 0
    %278 = vmatpush1.bf16.msra.mxu0 %v268
    %279 = vmatprep.subr.bf16.mxu0 0
    %280 = vmatpush1.bf16.msra.mxu0 %v267
    %281 = vmatprep.subr.bf16.mxu0 0
    %282 = vmatpush1.bf16.msra.mxu0 %v266
    %283 = vmatprep.subr.bf16.mxu0 0
    %284 = vmatpush1.bf16.msra.mxu0 %v265
    %285 = vmatprep.subr.bf16.mxu0 0
    %286 = vmatpush1.bf16.msra.mxu0 %v264
    %287 = vmatprep.subr.bf16.mxu0 0
    %288 = vmatpush1.bf16.msra.mxu0 %v263
    %289 = vmatprep.subr.bf16.mxu0 0
    %290 = vmatpush1.bf16.msra.mxu0 %v262
    %291 = vmatprep.subr.bf16.mxu0 0
    %292 = vmatpush1.bf16.msra.mxu0 %v261
    %293 = vmatprep.subr.bf16.mxu0 0
    %294 = vmatpush2.bf16.msra.mxu0 0
    %295 = vmatprep.subr.bf16.mxu0 0
    %296 = vmatpush2.bf16.msra.mxu0 0
    %297 = vmatprep.subr.bf16.mxu0 0
    %298 = vmatpush2.bf16.msra.mxu0 0
    %299 = vmatprep.subr.bf16.mxu0 0
    %300 = vmatpush2.bf16.msra.mxu0 0
    %301 = vmatprep.subr.bf16.mxu0 0
    %302 = vmatpush2.bf16.msra.mxu0 0
    %303 = vmatprep.subr.bf16.mxu0 0
    %304 = vmatpush2.bf16.msra.mxu0 0
    %305 = vmatprep.subr.bf16.mxu0 0
    %306 = vmatpush2.bf16.msra.mxu0 0
    %307 = vmatprep.subr.bf16.mxu0 0
    %308 = vmatpush2.bf16.msra.mxu0 0
    %309 = vmatprep.mubr.bf16.mxu0 0
    %310 = vmatmul.mubr.bf16.gmra.mxu0 %v197
    %v311 = vpop.f32.mrf.mxu0
    %v312 = vadd.f32 0.0, %v311
    %v313 = vpop.f32.mrf.mxu0
    %v314 = vpop.f32.mrf.mxu0
    %v315 = vadd.f32 0.0, %v314
    %v316 = vpop.f32.mrf.mxu0
    %317 = vmatprep.mubr.bf16.mxu0 0
    %318 = vmatmul.mubr.bf16.gmra.mxu0 %v198
    %v319 = vpop.f32.mrf.mxu0
    %v320 = vadd.f32 0.0, %v319
    %v321 = vpop.f32.mrf.mxu0
    %v322 = vpop.f32.mrf.mxu0
    %v323 = vadd.f32 0.0, %v322
    %v324 = vpop.f32.mrf.mxu0
    %325 = vmatprep.mubr.bf16.mxu0 0
    %326 = vmatmul.mubr.bf16.gmra.mxu0 %v199
    %v327 = vpop.f32.mrf.mxu0
    %v328 = vadd.f32 0.0, %v327
    %v329 = vpop.f32.mrf.mxu0
    %v330 = vpop.f32.mrf.mxu0
    %v331 = vadd.f32 0.0, %v330
    %v332 = vpop.f32.mrf.mxu0
    %333 = vmatprep.mubr.bf16.mxu0 0
    %334 = vmatmul.mubr.bf16.gmra.mxu0 %v200
    %v335 = vpop.f32.mrf.mxu0
    %v336 = vadd.f32 0.0, %v335
    %v337 = vpop.f32.mrf.mxu0
    %v338 = vpop.f32.mrf.mxu0
    %v339 = vadd.f32 0.0, %v338
    %v340 = vpop.f32.mrf.mxu0
    %341 = vmatprep.mubr.bf16.mxu0 0
    %342 = vmatmul.mubr.bf16.gmra.mxu0 %v201
    %v343 = vpop.f32.mrf.mxu0
    %v344 = vadd.f32 0.0, %v343
    %v345 = vpop.f32.mrf.mxu0
    %v346 = vpop.f32.mrf.mxu0
    %v347 = vadd.f32 0.0, %v346
    %v348 = vpop.f32.mrf.mxu0
    %349 = vmatprep.mubr.bf16.mxu0 0
    %350 = vmatmul.mubr.bf16.gmra.mxu0 %v202
    %v351 = vpop.f32.mrf.mxu0
    %v352 = vadd.f32 0.0, %v351
    %v353 = vpop.f32.mrf.mxu0
    %v354 = vpop.f32.mrf.mxu0
    %v355 = vadd.f32 0.0, %v354
    %v356 = vpop.f32.mrf.mxu0
    %357 = vmatprep.mubr.bf16.mxu0 0
    %358 = vmatmul.mubr.bf16.gmra.mxu0 %v203
    %v359 = vpop.f32.mrf.mxu0
    %v360 = vadd.f32 0.0, %v359
    %v361 = vpop.f32.mrf.mxu0
    %v362 = vpop.f32.mrf.mxu0
    %v363 = vadd.f32 0.0, %v362
    %v364 = vpop.f32.mrf.mxu0
    %365 = vmatprep.mubr.bf16.mxu0 0
    %366 = vmatmul.mubr.bf16.gmra.mxu0 %v204
    %v367 = vpop.f32.mrf.mxu0
    %v368 = vadd.f32 0.0, %v367
    %v369 = vpop.f32.mrf.mxu0
    %v370 = vpop.f32.mrf.mxu0
    %v371 = vadd.f32 0.0, %v370
    %v372 = vpop.f32.mrf.mxu0
    %373 = vmatprep.mubr.bf16.mxu0 0
    %374 = vmatmul.mubr.bf16.gmra.mxu0 %v205
    %v375 = vpop.f32.mrf.mxu0
    %v376 = vadd.f32 0.0, %v375
    %v377 = vpop.f32.mrf.mxu0
    %v378 = vpop.f32.mrf.mxu0
    %v379 = vadd.f32 0.0, %v378
    %v380 = vpop.f32.mrf.mxu0
    %381 = vmatprep.mubr.bf16.mxu0 0
    %382 = vmatmul.mubr.bf16.gmra.mxu0 %v206
    %v383 = vpop.f32.mrf.mxu0
    %v384 = vadd.f32 0.0, %v383
    %v385 = vpop.f32.mrf.mxu0
    %v386 = vpop.f32.mrf.mxu0
    %v387 = vadd.f32 0.0, %v386
    %v388 = vpop.f32.mrf.mxu0
    %389 = vmatprep.mubr.bf16.mxu0 0
    %390 = vmatmul.mubr.bf16.gmra.mxu0 %v207
    %v391 = vpop.f32.mrf.mxu0
    %v392 = vadd.f32 0.0, %v391
    %v393 = vpop.f32.mrf.mxu0
    %v394 = vpop.f32.mrf.mxu0
    %v395 = vadd.f32 0.0, %v394
    %v396 = vpop.f32.mrf.mxu0
    %397 = vmatprep.mubr.bf16.mxu0 0
    %398 = vmatmul.mubr.bf16.gmra.mxu0 %v208
    %v399 = vpop.f32.mrf.mxu0
    %v400 = vadd.f32 0.0, %v399
    %v401 = vpop.f32.mrf.mxu0
    %v402 = vpop.f32.mrf.mxu0
    %v403 = vadd.f32 0.0, %v402
    %v404 = vpop.f32.mrf.mxu0
    %405 = vmatprep.mubr.bf16.mxu0 0
    %406 = vmatmul.mubr.bf16.gmra.mxu0 %v209
    %v407 = vpop.f32.mrf.mxu0
    %v408 = vadd.f32 0.0, %v407
    %v409 = vpop.f32.mrf.mxu0
    %v410 = vpop.f32.mrf.mxu0
    %v411 = vadd.f32 0.0, %v410
    %v412 = vpop.f32.mrf.mxu0
    %413 = vmatprep.mubr.bf16.mxu0 0
    %414 = vmatmul.mubr.bf16.gmra.mxu0 %v210
    %v415 = vpop.f32.mrf.mxu0
    %v416 = vadd.f32 0.0, %v415
    %v417 = vpop.f32.mrf.mxu0
    %v418 = vpop.f32.mrf.mxu0
    %v419 = vadd.f32 0.0, %v418
    %v420 = vpop.f32.mrf.mxu0
    %421 = vmatprep.mubr.bf16.mxu0 0
    %422 = vmatmul.mubr.bf16.gmra.mxu0 %v211
    %v423 = vpop.f32.mrf.mxu0
    %v424 = vadd.f32 0.0, %v423
    %v425 = vpop.f32.mrf.mxu0
    %v426 = vpop.f32.mrf.mxu0
    %v427 = vadd.f32 0.0, %v426
    %v428 = vpop.f32.mrf.mxu0
    %429 = vmatprep.mubr.bf16.mxu0 0
    %430 = vmatmul.mubr.bf16.gmra.mxu0 %v212
    %v431 = vpop.f32.mrf.mxu0
    %v432 = vadd.f32 0.0, %v431
    %v433 = vpop.f32.mrf.mxu0
    %v434 = vpop.f32.mrf.mxu0
    %v435 = vadd.f32 0.0, %v434
    %v436 = vpop.f32.mrf.mxu0
    %437 = vdwg.mxu0
    %v438 = vadd.f32 %v53, %v312
    %v439 = vadd.f32 %v54, %v315
    %v440 = vadd.f32 %v55, %v320
    %v441 = vadd.f32 %v56, %v323
    %v442 = vadd.f32 %v57, %v328
    %v443 = vadd.f32 %v58, %v331
    %v444 = vadd.f32 %v59, %v336
    %v445 = vadd.f32 %v60, %v339
    %v446 = vadd.f32 %v61, %v344
    %v447 = vadd.f32 %v62, %v347
    %v448 = vadd.f32 %v63, %v352
    %v449 = vadd.f32 %v64, %v355
    %v450 = vadd.f32 %v65, %v360
    %v451 = vadd.f32 %v66, %v363
    %v452 = vadd.f32 %v67, %v368
    %v453 = vadd.f32 %v68, %v371
    %v454 = vadd.f32 %v69, %v376
    %v455 = vadd.f32 %v70, %v379
    %v456 = vadd.f32 %v71, %v384
    %v457 = vadd.f32 %v72, %v387
    %v458 = vadd.f32 %v73, %v392
    %v459 = vadd.f32 %v74, %v395
    %v460 = vadd.f32 %v75, %v400
    %v461 = vadd.f32 %v76, %v403
    %v462 = vadd.f32 %v77, %v408
    %v463 = vadd.f32 %v78, %v411
    %v464 = vadd.f32 %v79, %v416
    %v465 = vadd.f32 %v80, %v419
    %v466 = vadd.f32 %v81, %v424
    %v467 = vadd.f32 %v82, %v427
    %v468 = vadd.f32 %v83, %v432
    %v469 = vadd.f32 %v84, %v435
    %vm470 = vcmask 261120
    %471 = vst.msk [vmem:[#allocation2] sm:$0xff] %vm470, %v438
    %472 = vst.msk [vmem:[#allocation2 + $0x8] sm:$0xff] %vm470, %v439
    %473 = vst.msk [vmem:[#allocation2 + $0x10] sm:$0xff] %vm470, %v440
    %474 = vst.msk [vmem:[#allocation2 + $0x18] sm:$0xff] %vm470, %v441
    %475 = vst.msk [vmem:[#allocation2 + $0x20] sm:$0xff] %vm470, %v442
    %476 = vst.msk [vmem:[#allocation2 + $0x28] sm:$0xff] %vm470, %v443
    %477 = vst.msk [vmem:[#allocation2 + $0x30] sm:$0xff] %vm470, %v444
    %478 = vst.msk [vmem:[#allocation2 + $0x38] sm:$0xff] %vm470, %v445
    %479 = vst.msk [vmem:[#allocation2 + $0x40] sm:$0xff] %vm470, %v446
    %480 = vst.msk [vmem:[#allocation2 + $0x48] sm:$0xff] %vm470, %v447
    %481 = vst.msk [vmem:[#allocation2 + $0x50] sm:$0xff] %vm470, %v448
    %482 = vst.msk [vmem:[#allocation2 + $0x58] sm:$0xff] %vm470, %v449
    %483 = vst.msk [vmem:[#allocation2 + $0x60] sm:$0xff] %vm470, %v450
    %484 = vst.msk [vmem:[#allocation2 + $0x68] sm:$0xff] %vm470, %v451
    %485 = vst.msk [vmem:[#allocation2 + $0x70] sm:$0xff] %vm470, %v452
    %486 = vst.msk [vmem:[#allocation2 + $0x78] sm:$0xff] %vm470, %v453
    %487 = vst.msk [vmem:[#allocation2 + $0x80] sm:$0xff] %vm470, %v454
    %488 = vst.msk [vmem:[#allocation2 + $0x88] sm:$0xff] %vm470, %v455
    %489 = vst.msk [vmem:[#allocation2 + $0x90] sm:$0xff] %vm470, %v456
    %490 = vst.msk [vmem:[#allocation2 + $0x98] sm:$0xff] %vm470, %v457
    %491 = vst.msk [vmem:[#allocation2 + $0xa0] sm:$0xff] %vm470, %v458
    %492 = vst.msk [vmem:[#allocation2 + $0xa8] sm:$0xff] %vm470, %v459
    %493 = vst.msk [vmem:[#allocation2 + $0xb0] sm:$0xff] %vm470, %v460
    %494 = vst.msk [vmem:[#allocation2 + $0xb8] sm:$0xff] %vm470, %v461
    %495 = vst.msk [vmem:[#allocation2 + $0xc0] sm:$0xff] %vm470, %v462
    %496 = vst.msk [vmem:[#allocation2 + $0xc8] sm:$0xff] %vm470, %v463
    %497 = vst.msk [vmem:[#allocation2 + $0xd0] sm:$0xff] %vm470, %v464
    %498 = vst.msk [vmem:[#allocation2 + $0xd8] sm:$0xff] %vm470, %v465
    %499 = vst.msk [vmem:[#allocation2 + $0xe0] sm:$0xff] %vm470, %v466
    %500 = vst.msk [vmem:[#allocation2 + $0xe8] sm:$0xff] %vm470, %v467
    %501 = vst.msk [vmem:[#allocation2 + $0xf0] sm:$0xff] %vm470, %v468
    %502 = vst.msk [vmem:[#allocation2 + $0xf8] sm:$0xff] %vm470, %v469
    // Predicated region
    $region18: #{_lambda_.11} parent=1 // pred_check
      %p503 = pneg %p16
    $region19: #{_lambda_.11} parent=1 // pred_check_branch
      %505 = sbr.rel (%p503) target = $region21
    $region20: #{_lambda_.11} parent=1 // pred_region
      %v506 = vld [vmem:[#allocation2] sm:$0xff]
      %v507 = vld [vmem:[#allocation2 + $0x8] sm:$0xff]
      %v508 = vld [vmem:[#allocation2 + $0x10] sm:$0xff]
      %v509 = vld [vmem:[#allocation2 + $0x18] sm:$0xff]
      %v510 = vld [vmem:[#allocation2 + $0x20] sm:$0xff]
      %v511 = vld [vmem:[#allocation2 + $0x28] sm:$0xff]
      %v512 = vld [vmem:[#allocation2 + $0x30] sm:$0xff]
      %v513 = vld [vmem:[#allocation2 + $0x38] sm:$0xff]
      %v514 = vld [vmem:[#allocation2 + $0x40] sm:$0xff]
      %v515 = vld [vmem:[#allocation2 + $0x48] sm:$0xff]
      %v516 = vld [vmem:[#allocation2 + $0x50] sm:$0xff]
      %v517 = vld [vmem:[#allocation2 + $0x58] sm:$0xff]
      %v518 = vld [vmem:[#allocation2 + $0x60] sm:$0xff]
      %v519 = vld [vmem:[#allocation2 + $0x68] sm:$0xff]
      %v520 = vld [vmem:[#allocation2 + $0x70] sm:$0xff]
      %v521 = vld [vmem:[#allocation2 + $0x78] sm:$0xff]
      %v522 = vld [vmem:[#allocation2 + $0x80] sm:$0xff]
      %v523 = vld [vmem:[#allocation2 + $0x88] sm:$0xff]
      %v524 = vld [vmem:[#allocation2 + $0x90] sm:$0xff]
      %v525 = vld [vmem:[#allocation2 + $0x98] sm:$0xff]
      %v526 = vld [vmem:[#allocation2 + $0xa0] sm:$0xff]
      %v527 = vld [vmem:[#allocation2 + $0xa8] sm:$0xff]
      %v528 = vld [vmem:[#allocation2 + $0xb0] sm:$0xff]
      %v529 = vld [vmem:[#allocation2 + $0xb8] sm:$0xff]
      %v530 = vld [vmem:[#allocation2 + $0xc0] sm:$0xff]
      %v531 = vld [vmem:[#allocation2 + $0xc8] sm:$0xff]
      %v532 = vld [vmem:[#allocation2 + $0xd0] sm:$0xff]
      %v533 = vld [vmem:[#allocation2 + $0xd8] sm:$0xff]
      %v534 = vld [vmem:[#allocation2 + $0xe0] sm:$0xff]
      %v535 = vld [vmem:[#allocation2 + $0xe8] sm:$0xff]
      %v536 = vld [vmem:[#allocation2 + $0xf0] sm:$0xff]
      %v537 = vld [vmem:[#allocation2 + $0xf8] sm:$0xff]
      %v538 = vld [vmem:[%s2] sm:$0x1]
      %v540 = vlaneseq
      %v541 = vshrl.u32 %v540, 7
      %v542 = vsub.s32 0, %v541
      %v543 = vrot.slane %v538, %v542
      %v545 = vadd.f32 %v506, %v543
      %v546 = vadd.f32 %v507, %v543
      %v547 = vadd.f32 %v508, %v543
      %v548 = vadd.f32 %v509, %v543
      %v549 = vadd.f32 %v510, %v543
      %v550 = vadd.f32 %v511, %v543
      %v551 = vadd.f32 %v512, %v543
      %v552 = vadd.f32 %v513, %v543
      %v553 = vadd.f32 %v514, %v543
      %v554 = vadd.f32 %v515, %v543
      %v555 = vadd.f32 %v516, %v543
      %v556 = vadd.f32 %v517, %v543
      %v557 = vadd.f32 %v518, %v543
      %v558 = vadd.f32 %v519, %v543
      %v559 = vadd.f32 %v520, %v543
      %v560 = vadd.f32 %v521, %v543
      %v561 = vadd.f32 %v522, %v543
      %v562 = vadd.f32 %v523, %v543
      %v563 = vadd.f32 %v524, %v543
      %v564 = vadd.f32 %v525, %v543
      %v565 = vadd.f32 %v526, %v543
      %v566 = vadd.f32 %v527, %v543
      %v567 = vadd.f32 %v528, %v543
      %v568 = vadd.f32 %v529, %v543
      %v569 = vadd.f32 %v530, %v543
      %v570 = vadd.f32 %v531, %v543
      %v571 = vadd.f32 %v532, %v543
      %v572 = vadd.f32 %v533, %v543
      %v573 = vadd.f32 %v534, %v543
      %v574 = vadd.f32 %v535, %v543
      %v575 = vadd.f32 %v536, %v543
      %v576 = vadd.f32 %v537, %v543
      %577 = vst.msk [vmem:[#allocation3] sm:$0xff] %vm470, %v545
      %578 = vst.msk [vmem:[#allocation3 + $0x8] sm:$0xff] %vm470, %v546
      %579 = vst.msk [vmem:[#allocation3 + $0x10] sm:$0xff] %vm470, %v547
      %580 = vst.msk [vmem:[#allocation3 + $0x18] sm:$0xff] %vm470, %v548
      %581 = vst.msk [vmem:[#allocation3 + $0x20] sm:$0xff] %vm470, %v549
      %582 = vst.msk [vmem:[#allocation3 + $0x28] sm:$0xff] %vm470, %v550
      %583 = vst.msk [vmem:[#allocation3 + $0x30] sm:$0xff] %vm470, %v551
      %584 = vst.msk [vmem:[#allocation3 + $0x38] sm:$0xff] %vm470, %v552
      %585 = vst.msk [vmem:[#allocation3 + $0x40] sm:$0xff] %vm470, %v553
      %586 = vst.msk [vmem:[#allocation3 + $0x48] sm:$0xff] %vm470, %v554
      %587 = vst.msk [vmem:[#allocation3 + $0x50] sm:$0xff] %vm470, %v555
      %588 = vst.msk [vmem:[#allocation3 + $0x58] sm:$0xff] %vm470, %v556
      %589 = vst.msk [vmem:[#allocation3 + $0x60] sm:$0xff] %vm470, %v557
      %590 = vst.msk [vmem:[#allocation3 + $0x68] sm:$0xff] %vm470, %v558
      %591 = vst.msk [vmem:[#allocation3 + $0x70] sm:$0xff] %vm470, %v559
      %592 = vst.msk [vmem:[#allocation3 + $0x78] sm:$0xff] %vm470, %v560
      %593 = vst.msk [vmem:[#allocation3 + $0x80] sm:$0xff] %vm470, %v561
      %594 = vst.msk [vmem:[#allocation3 + $0x88] sm:$0xff] %vm470, %v562
      %595 = vst.msk [vmem:[#allocation3 + $0x90] sm:$0xff] %vm470, %v563
      %596 = vst.msk [vmem:[#allocation3 + $0x98] sm:$0xff] %vm470, %v564
      %597 = vst.msk [vmem:[#allocation3 + $0xa0] sm:$0xff] %vm470, %v565
      %598 = vst.msk [vmem:[#allocation3 + $0xa8] sm:$0xff] %vm470, %v566
      %599 = vst.msk [vmem:[#allocation3 + $0xb0] sm:$0xff] %vm470, %v567
      %600 = vst.msk [vmem:[#allocation3 + $0xb8] sm:$0xff] %vm470, %v568
      %601 = vst.msk [vmem:[#allocation3 + $0xc0] sm:$0xff] %vm470, %v569
      %602 = vst.msk [vmem:[#allocation3 + $0xc8] sm:$0xff] %vm470, %v570
      %603 = vst.msk [vmem:[#allocation3 + $0xd0] sm:$0xff] %vm470, %v571
      %604 = vst.msk [vmem:[#allocation3 + $0xd8] sm:$0xff] %vm470, %v572
      %605 = vst.msk [vmem:[#allocation3 + $0xe0] sm:$0xff] %vm470, %v573
      %606 = vst.msk [vmem:[#allocation3 + $0xe8] sm:$0xff] %vm470, %v574
      %607 = vst.msk [vmem:[#allocation3 + $0xf0] sm:$0xff] %vm470, %v575
      %608 = vst.msk [vmem:[#allocation3 + $0xf8] sm:$0xff] %vm470, %v576
    $region21: #{_lambda_.11} parent=1 // pred_fallthru
      _
    // Predicated region
    $region22: #{_lambda_.11} parent=1 // pred_check
      _
    $region23: #{_lambda_.11} parent=1 // pred_check_branch
      %610 = sbr.rel (0) target = $region25
    $region24: #{_lambda_.11} parent=1 // pred_region
      %s612 = ssub.s32 4096, 4096
      %613 = vsyncadd [#allocation4], %s612
      %s614 = sshll.u32 [#allocation3], 4
      %s615 = int_to_ptr.vmem [resolvable:$true] %s614
      %620 = dma.vmem_to_hbm [thread:$0]  %s615, 4096, %s3, [#allocation4], 128, 128, 8
    $region25: #{_lambda_.11} parent=1 // pred_fallthru
      _
    // Predicated region
    $region26: #{_lambda_.11} parent=1 // pred_check
      _
    $region27: #{_lambda_.11} parent=1 // pred_check_branch
      %622 = sbr.rel (0) target = $region29
    $region28: #{_lambda_.11} parent=1 // pred_region
      %623 = dma.done [#allocation4], 4096
    $region29: #{_lambda_.11} parent=1 // pred_fallthru
      _
    %624 = vsyncpa [#allocation4], 1

</llo_original>
